<compile_context>
chip_gen: v5e
topology: v5e:2x2
jax: 0.10.0
libtpu: 0.0.40
codegen_flags: <defaults>
</compile_context>

<pallas_src>
import jax
import jax.numpy as jnp
from jax import lax
from jax.experimental import pallas as pl
from jax.experimental.pallas import tpu as pltpu


# ----------------------------------------------------------------------------
# Generation-aware VMEM budgeting (v5e/v6e: 128 MiB, v7x: 64 MiB per core).
# ----------------------------------------------------------------------------
def _vmem_capacity_bytes():
    try:
        return int(pltpu.get_tpu_info().vmem_capacity_bytes)
    except Exception:
        return 64 * 1024 * 1024                      # conservative (v7x)


_VMEM_CAP = _vmem_capacity_bytes()
_VMEM_LIMIT = max(32 * 1024 * 1024, min(_VMEM_CAP - (16 << 20), 100 * 1024 * 1024))
_TILE_BUDGET = (_VMEM_LIMIT * 3) // 5                # headroom for compiler scratch


# ----------------------------------------------------------------------------
# tiling helpers
# ----------------------------------------------------------------------------
def _pick_rows(total, target):
    """Largest divisor d of `total` with d <= target, preferring 16-sublane
    (bf16 packing) then 8-sublane alignment; d == total is always layout-OK."""
    target = max(1, min(total, target))
    best_any = None
    best8 = None
    for d in range(target, 0, -1):
        if total % d:
            continue
        if best_any is None:
            best_any = d
        if d % 16 == 0 or d == total:
            return d
        if best8 is None and d % 8 == 0:
            best8 = d
    return best8 if best8 is not None else best_any


def _pick_conv_th(H, W, cin, cout, budget):
    """Largest row-tile TH (divisor of H) whose double-buffered slab + output
    + weights + fp32 accumulator fit in `budget`, preferring 16-aligned TH*W."""
    def tile_bytes(th):
        slab = (th + 2) * (W + 2) * cin * 2 * 2      # bf16 slab, double-buffered
        outb = th * W * cout * 2 * 2                 # bf16 out, double-buffered
        wts = 9 * cin * cout * 2 * 2
        acc = th * W * cout * 4                      # fp32 accumulator
        return slab + outb + wts + acc + (1 << 20)

    feasible = [th for th in range(1, H + 1)
                if H % th == 0 and tile_bytes(th) <= budget]
    if not feasible:
        return 1
    a16 = [th for th in feasible if (th * W) % 16 == 0 or th == H]
    if a16:
        return max(a16)
    a8 = [th for th in feasible if (th * W) % 8 == 0]
    if a8:
        return max(a8)
    return max(feasible)


def _round_up(x, m):
    return ((x + m - 1) // m) * m


# ----------------------------------------------------------------------------
# Pallas kernels
# ----------------------------------------------------------------------------
def conv3x3(x_nhwc, w, b, relu):
    """3x3 same-padding conv (+bias, optional fused ReLU).

    x: (N, H, W, Cin) -> (N, H, W, Cout_pad) bf16 with Cout_pad = round_up(Cout,128).
    Per row-tile: 9 accumulating bf16 MXU matmuls (one per tap) read directly
    from the halo slab; fp32 accumulation, bias+ReLU fused in the epilogue."""
    N, H, W, Cin = x_nhwc.shape
    cin_w, cout_true = w.shape[2], w.shape[3]
    Cout = max(128, _round_up(cout_true, 128))       # lane-dense output channels

    # zero-pad weights to (carried Cin, padded Cout); padded channels stay 0.
    w_p = jnp.zeros((3, 3, Cin, Cout), jnp.float32)
    w_p = w_p.at[:, :, :cin_w, :cout_true].set(w.astype(jnp.float32))
    b_p = jnp.zeros((Cout,), jnp.float32).at[:cout_true].set(b.astype(jnp.float32))
    wf = w_p.reshape(9, Cin, Cout).astype(jnp.bfloat16)   # taps ordered (dy, dx)
    bf = b_p.reshape(1, Cout).astype(jnp.float32)

    xp = jnp.pad(x_nhwc.astype(jnp.bfloat16), ((0, 0), (1, 1), (1, 1), (0, 0)))

    TH = _pick_conv_th(H, W, Cin, Cout, _TILE_BUDGET)
    NH = H // TH
    THW = TH * W

    # Halo-tiled input: overlapping (TH+2)-row slabs -> bounded VMEM per step.
    if NH == 1:
        slabs = xp                                            # (N, H+2, W+2, Cin)
    else:
        slabs = jnp.stack([xp[:, h * TH:h * TH + TH + 2] for h in range(NH)],
                          axis=1).reshape(N * NH, TH + 2, W + 2, Cin)

    def kernel(x_ref, w_ref, b_ref, o_ref):
        acc = jnp.zeros((THW, Cout), jnp.float32)
        for dy in range(3):
            for dx in range(3):
                k = dy * 3 + dx
                win = x_ref[0, dy:dy + TH, dx:dx + W, :].reshape(THW, Cin)
                acc = acc + jnp.dot(win, w_ref[k],
                                    preferred_element_type=jnp.float32)
        acc = acc + b_ref[...]
        if relu:
            acc = jnp.maximum(acc, 0.0)
        o_ref[0] = acc.astype(o_ref.dtype)

    out = pl.pallas_call(
        kernel,
        out_shape=jax.ShapeDtypeStruct((N, H * W, Cout), jnp.bfloat16),
        grid=(N, NH),
        in_specs=[
            pl.BlockSpec((1, TH + 2, W + 2, Cin), lambda n, h: (n * NH + h, 0, 0, 0)),
            pl.BlockSpec((9, Cin, Cout), lambda n, h: (0, 0, 0)),
            pl.BlockSpec((1, Cout), lambda n, h: (0, 0)),
        ],
        out_specs=pl.BlockSpec((1, THW, Cout), lambda n, h: (n, h, 0)),
        compiler_params=pltpu.CompilerParams(
            dimension_semantics=("parallel", "parallel"),
            vmem_limit_bytes=_VMEM_LIMIT),
    )(slabs, wf, bf)
    return out.reshape(N, H, W, Cout)


def feature_criterion(a, b, criterion, true_count):
    """criterion='l1'  -> sum(|a-b|) / true_count   (torch.nn.L1Loss over real elems)
       criterion='fro' -> sqrt(sum((a-b)^2))         (torch.norm(..., p='fro'))

    Lane-dense tiled row reduction with a resident (1,1) fp32 accumulator.
    Padded (zero) channels contribute 0 to the sum; the divisor is the true
    element count."""
    total = int(a.size)
    L = a.shape[-1]
    for cand in (512, 256, 128):
        if total % cand == 0:
            L = cand
            break
    R = total // L
    a2 = a.reshape(R, L)
    b2 = b.reshape(R, L)
    TR = _pick_rows(R, max(8, _TILE_BUDGET // (L * 24)))
    NR = R // TR

    def kernel(a_ref, b_ref, o_ref):
        @pl.when(pl.program_id(0) == 0)
        def _():
            o_ref[...] = jnp.zeros_like(o_ref)

        d = a_ref[...].astype(jnp.float32) - b_ref[...].astype(jnp.float32)
        if criterion == 'l1':
            part = jnp.sum(jnp.abs(d))
        else:  # 'fro'
            part = jnp.sum(d * d)
        o_ref[...] = o_ref[...] + part

    partial = pl.pallas_call(
        kernel,
        out_shape=jax.ShapeDtypeStruct((1, 1), jnp.float32),
        grid=(NR,),
        in_specs=[
            pl.BlockSpec((TR, L), lambda i: (i, 0)),
            pl.BlockSpec((TR, L), lambda i: (i, 0)),
        ],
        out_specs=pl.BlockSpec((1, 1), lambda i: (0, 0)),
        compiler_params=pltpu.CompilerParams(
            dimension_semantics=("arbitrary",),
            vmem_limit_bytes=_VMEM_LIMIT),
    )(a2, b2)[0, 0]

    if criterion == 'l1':
        return partial / float(true_count)
    return jnp.sqrt(partial)


def style_criterion(fx, fg, criterion, c_true):
    """Fused style loss: per-sample Gram matrices of fx and fg, their
    difference, and the l1/fro reduction in one kernel (no (N,C,C) HBM
    round-trips).  fx, fg: (N, H, W, Cpad) with channels beyond c_true == 0."""
    N, H, W, C = fx.shape
    HW = H * W
    fx2 = fx.reshape(N, HW, C)
    fg2 = fg.reshape(N, HW, C)
    TK = _pick_rows(HW, min(16384, max(256, _TILE_BUDGET // (C * 16))))
    KT = HW // TK
    inv_chw = 1.0 / float(c_true * H * W)

    def kernel(fx_ref, fg_ref, o_ref, gacc_ref):
        n = pl.program_id(0)
        k = pl.program_id(1)

        @pl.when(jnp.logical_and(n == 0, k == 0))
        def _():
            o_ref[...] = jnp.zeros_like(o_ref)

        @pl.when(k == 0)
        def _():
            gacc_ref[...] = jnp.zeros_like(gacc_ref)

        a = fx_ref[0]                                   # (TK, C) bf16
        b = fg_ref[0]
        # TODO(synk): check MLIR for an XLU transpose from contracting dim 0;
        #             switch to a trans_a matmul form if one shows up (v6e).
        dn = (((0,), (0,)), ((), ()))                   # f^T f (contract HW)
        ga = lax.dot_general(a, a, dn, preferred_element_type=jnp.float32)
        gb = lax.dot_general(b, b, dn, preferred_element_type=jnp.float32)
        gacc_ref[...] += ga - gb

        @pl.when(k == pl.num_programs(1) - 1)
        def _():
            d = gacc_ref[...] * inv_chw                 # Gx - Ggt for sample n
            if criterion == 'l1':
                part = jnp.sum(jnp.abs(d))
            else:  # 'fro'
                part = jnp.sum(d * d)
            o_ref[...] = o_ref[...] + part

    partial = pl.pallas_call(
        kernel,
        out_shape=jax.ShapeDtypeStruct((1, 1), jnp.float32),
        grid=(N, KT),
        in_specs=[
            pl.BlockSpec((1, TK, C), lambda n, k: (n, k, 0)),
            pl.BlockSpec((1, TK, C), lambda n, k: (n, k, 0)),
        ],
        out_specs=pl.BlockSpec((1, 1), lambda n, k: (0, 0)),
        scratch_shapes=[pltpu.VMEM((C, C), jnp.float32)],
        compiler_params=pltpu.CompilerParams(
            dimension_semantics=("arbitrary", "arbitrary"),
            vmem_limit_bytes=_VMEM_LIMIT),
    )(fx2, fg2)[0, 0]

    if criterion == 'l1':
        return partial / float(N * c_true * c_true)
    return jnp.sqrt(partial)


# ----------------------------------------------------------------------------
# Truncated VGG19 feature extractor (synthetic deterministic weights)
# ----------------------------------------------------------------------------
VGG19_LAYERS = [
    ('conv1_1', 'conv', 3, 64), ('relu1_1', 'relu', 0, 0),
    ('conv1_2', 'conv', 64, 64), ('relu1_2', 'relu', 0, 0),
    ('pool1', 'pool', 0, 0),
    ('conv2_1', 'conv', 64, 128), ('relu2_1', 'relu', 0, 0),
    ('conv2_2', 'conv', 128, 128), ('relu2_2', 'relu', 0, 0),
    ('pool2', 'pool', 0, 0),
]

VGG_MEAN = jnp.array([0.485, 0.456, 0.406], jnp.float32)
VGG_STD = jnp.array([0.229, 0.224, 0.225], jnp.float32)


def init_vgg_params(seed=0):
    key = jax.random.PRNGKey(seed)
    params = {}
    for name, kind, cin, cout in VGG19_LAYERS:
        if kind != 'conv':
            continue
        key, sub = jax.random.split(key)
        std = (2.0 / (9.0 * cin)) ** 0.5                # deterministic He init
        params[name] = {
            'w': jax.random.normal(sub, (3, 3, cin, cout), jnp.float32) * std,
            'b': jnp.zeros((cout,), jnp.float32),
        }
    return params


def maxpool2x2(x):
    # TODO(synk): fuse the 2x2 max into the producing conv's epilogue to save
    # one HBM round-trip of the pre-pool feature map.
    N, H, W, C = x.shape
    return x.reshape(N, H // 2, 2, W // 2, 2, C).max(axis=(2, 4))


def vgg_features(x_nchw, params, wanted, use_input_norm=True, range_norm=False):
    x = jnp.transpose(x_nchw, (0, 2, 3, 1)).astype(jnp.float32)   # NCHW -> NHWC
    if range_norm:
        x = (x + 1.0) / 2.0
    if use_input_norm:
        x = (x - VGG_MEAN) / VGG_STD
    if x.shape[-1] < 8:                     # pad 3-channel input (conv1_1) to 8
        x = jnp.pad(x, ((0, 0), (0, 0), (0, 0), (0, 8 - x.shape[-1])))

    feats, feats_c = {}, {}
    c_true = 3
    i = 0
    while i < len(VGG19_LAYERS) and not all(k in feats for k in wanted):
        name, kind, _, cout = VGG19_LAYERS[i]
        if kind == 'conv':
            next_is_relu = (i + 1 < len(VGG19_LAYERS)
                            and VGG19_LAYERS[i + 1][1] == 'relu')
            fuse = next_is_relu and (name not in wanted)
            x = conv3x3(x, params[name]['w'], params[name]['b'], relu=fuse)
            c_true = cout
            if name in wanted:
                feats[name] = x; feats_c[name] = c_true
            if fuse:
                relu_name = VGG19_LAYERS[i + 1][0]
                if relu_name in wanted:
                    feats[relu_name] = x; feats_c[relu_name] = c_true
                i += 1                                   # relu fused in-kernel
        elif kind == 'relu':
            x = jnp.maximum(x, 0)
            if name in wanted:
                feats[name] = x; feats_c[name] = c_true
        else:  # pool
            x = maxpool2x2(x)
            if name in wanted:
                feats[name] = x; feats_c[name] = c_true
        i += 1
    return feats, feats_c


# ----------------------------------------------------------------------------
# PerceptualLoss
# ----------------------------------------------------------------------------
class PerceptualLossPallas:
    def __init__(self, layer_weights, vgg_type='vgg19', use_input_norm=True,
                 range_norm=False, perceptual_weight=1.0, style_weight=0.0,
                 criterion='l1'):
        assert vgg_type == 'vgg19'
        self.layer_weights = dict(layer_weights)
        self.use_input_norm = use_input_norm
        self.range_norm = range_norm
        self.perceptual_weight = perceptual_weight
        self.style_weight = style_weight
        if criterion not in ('l1', 'fro'):
            # TODO(synk): the reference's 'l2' branch calls torch.nn.L2loss
            # (nonexistent in torch); not reproduced.
            raise NotImplementedError(
                f'{criterion} criterion has not been supported.')
        self.criterion_type = criterion
        self.params = init_vgg_params(seed=0)

    def __call__(self, x, gt):
        """x, gt: (n, c, h, w) NCHW, c == 3. Returns (percep_loss, style_loss)."""
        wanted = tuple(self.layer_weights.keys())
        x_feats, c_map = vgg_features(x, self.params, wanted,
                                      self.use_input_norm, self.range_norm)
        gt_feats, _ = vgg_features(lax.stop_gradient(gt), self.params, wanted,
                                   self.use_input_norm, self.range_norm)

        if self.perceptual_weight > 0:
            percep_loss = 0.0
            for k in x_feats:
                n_, h_, w_, _ = x_feats[k].shape
                true_count = n_ * h_ * w_ * c_map[k]
                percep_loss += (feature_criterion(x_feats[k], gt_feats[k],
                                                  self.criterion_type, true_count)
                                * self.layer_weights[k])
            percep_loss = percep_loss * self.perceptual_weight
        else:
            percep_loss = None

        if self.style_weight > 0:
            style_loss = 0.0
            for k in x_feats:
                style_loss += (style_criterion(x_feats[k], gt_feats[k],
                                               self.criterion_type, c_map[k])
                               * self.layer_weights[k])
            style_loss = style_loss * self.style_weight
        else:
            style_loss = None

        return percep_loss, style_loss


# ----------------------------------------------------------------------------
if __name__ == "__main__":
    key = jax.random.PRNGKey(0)
    kx, kg = jax.random.split(key)
    x = jax.random.uniform(kx, (2, 3, 16, 16), jnp.float32)   # NCHW like PyTorch
    gt = jax.random.uniform(kg, (2, 3, 16, 16), jnp.float32)

    loss_mod = PerceptualLossPallas(
        layer_weights={'conv1_2': 1.0, 'conv2_2': 1.0},
        vgg_type='vgg19',
        use_input_norm=True,
        range_norm=False,
        perceptual_weight=1.0,
        style_weight=1.0,          # exercise the fused Gram+criterion kernel too
        criterion='l1',
    )

    percep, style = loss_mod(x, gt)
    jax.block_until_ready((percep, style))
    assert jnp.isfinite(percep) and jnp.isfinite(style)

    # Sanity: identical inputs -> both losses vanish (same kernels, same data).
    p0, s0 = loss_mod(x, x)
    jax.block_until_ready((p0, s0))
    assert abs(float(p0)) < 1e-6 and abs(float(s0)) < 1e-6

    print("KERNEL_OK")
</pallas_src>

<mosaic_0001>
module attributes {stable_mosaic.version = 11 : i64} {
  func.func @kernel(%arg0: i32, %arg1: i32, %arg2: memref<1x18x18x8xbf16, #tpu.memory_space<vmem>>, %arg3: memref<9x8x128xbf16, #tpu.memory_space<vmem>>, %arg4: memref<1x128xf32, #tpu.memory_space<vmem>>, %arg5: memref<1x256x128xbf16, #tpu.memory_space<vmem>>) attributes {dimension_semantics = [#tpu.dimension_semantics<parallel>, #tpu.dimension_semantics<parallel>], iteration_bounds = array<i64: 2, 1>, scalar_prefetch = 0 : i64, scratch_operands = 0 : i64, tpu.core_type = #tpu.core_type<tc>, window_params = [{transform_indices = @transform_0, window_bounds = array<i64: 1, 18, 18, 8>}, {pipeline_mode = #tpu.pipeline_mode<synchronous>, transform_indices = @transform_1, window_bounds = array<i64: 9, 8, 128>}, {pipeline_mode = #tpu.pipeline_mode<synchronous>, transform_indices = @transform_2, window_bounds = array<i64: 1, 128>}, {transform_indices = @transform_3, window_bounds = array<i64: 1, 256, 128>}]} {
    %cst = arith.constant 0.000000e+00 : f32
    %0 = vector.broadcast %cst : f32 to vector<256x128xf32>
    %c0 = arith.constant 0 : index
    %c0_0 = arith.constant 0 : index
    %c0_1 = arith.constant 0 : index
    %c0_2 = arith.constant 0 : index
    %1 = vector.load %arg2[%c0, %c0_0, %c0_1, %c0_2] : memref<1x18x18x8xbf16, #tpu.memory_space<vmem>>, vector<1x16x16x8xbf16>
    %2 = vector.shape_cast %1 : vector<1x16x16x8xbf16> to vector<16x16x8xbf16>
    %3 = vector.shape_cast %2 : vector<16x16x8xbf16> to vector<256x8xbf16>
    %c0_3 = arith.constant 0 : index
    %c0_4 = arith.constant 0 : index
    %c0_5 = arith.constant 0 : index
    %4 = vector.load %arg3[%c0_3, %c0_4, %c0_5] : memref<9x8x128xbf16, #tpu.memory_space<vmem>>, vector<1x8x128xbf16>
    %5 = vector.shape_cast %4 : vector<1x8x128xbf16> to vector<8x128xbf16>
    %cst_6 = arith.constant dense<0.000000e+00> : vector<256x128xf32>
    %6 = tpu.matmul %3, %5, %cst_6 {dimension_numbers = #tpu.dot_dimension_numbers<[1], [0], [0], [1], [0, 0, 1, 1], [], []>} : vector<256x8xbf16>, vector<8x128xbf16>, vector<256x128xf32> -> vector<256x128xf32>
    %7 = arith.addf %0, %6 : vector<256x128xf32>
    %c0_7 = arith.constant 0 : index
    %c0_8 = arith.constant 0 : index
    %c1 = arith.constant 1 : index
    %c0_9 = arith.constant 0 : index
    %8 = vector.load %arg2[%c0_7, %c0_8, %c1, %c0_9] : memref<1x18x18x8xbf16, #tpu.memory_space<vmem>>, vector<1x16x16x8xbf16>
    %9 = vector.shape_cast %8 : vector<1x16x16x8xbf16> to vector<16x16x8xbf16>
    %10 = vector.shape_cast %9 : vector<16x16x8xbf16> to vector<256x8xbf16>
    %c1_10 = arith.constant 1 : index
    %c0_11 = arith.constant 0 : index
    %c0_12 = arith.constant 0 : index
    %11 = vector.load %arg3[%c1_10, %c0_11, %c0_12] : memref<9x8x128xbf16, #tpu.memory_space<vmem>>, vector<1x8x128xbf16>
    %12 = vector.shape_cast %11 : vector<1x8x128xbf16> to vector<8x128xbf16>
    %cst_13 = arith.constant dense<0.000000e+00> : vector<256x128xf32>
    %13 = tpu.matmul %10, %12, %cst_13 {dimension_numbers = #tpu.dot_dimension_numbers<[1], [0], [0], [1], [0, 0, 1, 1], [], []>} : vector<256x8xbf16>, vector<8x128xbf16>, vector<256x128xf32> -> vector<256x128xf32>
    %14 = arith.addf %7, %13 : vector<256x128xf32>
    %c0_14 = arith.constant 0 : index
    %c0_15 = arith.constant 0 : index
    %c2 = arith.constant 2 : index
    %c0_16 = arith.constant 0 : index
    %15 = vector.load %arg2[%c0_14, %c0_15, %c2, %c0_16] : memref<1x18x18x8xbf16, #tpu.memory_space<vmem>>, vector<1x16x16x8xbf16>
    %16 = vector.shape_cast %15 : vector<1x16x16x8xbf16> to vector<16x16x8xbf16>
    %17 = vector.shape_cast %16 : vector<16x16x8xbf16> to vector<256x8xbf16>
    %c2_17 = arith.constant 2 : index
    %c0_18 = arith.constant 0 : index
    %c0_19 = arith.constant 0 : index
    %18 = vector.load %arg3[%c2_17, %c0_18, %c0_19] : memref<9x8x128xbf16, #tpu.memory_space<vmem>>, vector<1x8x128xbf16>
    %19 = vector.shape_cast %18 : vector<1x8x128xbf16> to vector<8x128xbf16>
    %cst_20 = arith.constant dense<0.000000e+00> : vector<256x128xf32>
    %20 = tpu.matmul %17, %19, %cst_20 {dimension_numbers = #tpu.dot_dimension_numbers<[1], [0], [0], [1], [0, 0, 1, 1], [], []>} : vector<256x8xbf16>, vector<8x128xbf16>, vector<256x128xf32> -> vector<256x128xf32>
    %21 = arith.addf %14, %20 : vector<256x128xf32>
    %c0_21 = arith.constant 0 : index
    %c1_22 = arith.constant 1 : index
    %c0_23 = arith.constant 0 : index
    %c0_24 = arith.constant 0 : index
    %22 = vector.load %arg2[%c0_21, %c1_22, %c0_23, %c0_24] : memref<1x18x18x8xbf16, #tpu.memory_space<vmem>>, vector<1x16x16x8xbf16>
    %23 = vector.shape_cast %22 : vector<1x16x16x8xbf16> to vector<16x16x8xbf16>
    %24 = vector.shape_cast %23 : vector<16x16x8xbf16> to vector<256x8xbf16>
    %c3 = arith.constant 3 : index
    %c0_25 = arith.constant 0 : index
    %c0_26 = arith.constant 0 : index
    %25 = vector.load %arg3[%c3, %c0_25, %c0_26] : memref<9x8x128xbf16, #tpu.memory_space<vmem>>, vector<1x8x128xbf16>
    %26 = vector.shape_cast %25 : vector<1x8x128xbf16> to vector<8x128xbf16>
    %cst_27 = arith.constant dense<0.000000e+00> : vector<256x128xf32>
    %27 = tpu.matmul %24, %26, %cst_27 {dimension_numbers = #tpu.dot_dimension_numbers<[1], [0], [0], [1], [0, 0, 1, 1], [], []>} : vector<256x8xbf16>, vector<8x128xbf16>, vector<256x128xf32> -> vector<256x128xf32>
    %28 = arith.addf %21, %27 : vector<256x128xf32>
    %c0_28 = arith.constant 0 : index
    %c1_29 = arith.constant 1 : index
    %c1_30 = arith.constant 1 : index
    %c0_31 = arith.constant 0 : index
    %29 = vector.load %arg2[%c0_28, %c1_29, %c1_30, %c0_31] : memref<1x18x18x8xbf16, #tpu.memory_space<vmem>>, vector<1x16x16x8xbf16>
    %30 = vector.shape_cast %29 : vector<1x16x16x8xbf16> to vector<16x16x8xbf16>
    %31 = vector.shape_cast %30 : vector<16x16x8xbf16> to vector<256x8xbf16>
    %c4 = arith.constant 4 : index
    %c0_32 = arith.constant 0 : index
    %c0_33 = arith.constant 0 : index
    %32 = vector.load %arg3[%c4, %c0_32, %c0_33] : memref<9x8x128xbf16, #tpu.memory_space<vmem>>, vector<1x8x128xbf16>
    %33 = vector.shape_cast %32 : vector<1x8x128xbf16> to vector<8x128xbf16>
    %cst_34 = arith.constant dense<0.000000e+00> : vector<256x128xf32>
    %34 = tpu.matmul %31, %33, %cst_34 {dimension_numbers = #tpu.dot_dimension_numbers<[1], [0], [0], [1], [0, 0, 1, 1], [], []>} : vector<256x8xbf16>, vector<8x128xbf16>, vector<256x128xf32> -> vector<256x128xf32>
    %35 = arith.addf %28, %34 : vector<256x128xf32>
    %c0_35 = arith.constant 0 : index
    %c1_36 = arith.constant 1 : index
    %c2_37 = arith.constant 2 : index
    %c0_38 = arith.constant 0 : index
    %36 = vector.load %arg2[%c0_35, %c1_36, %c2_37, %c0_38] : memref<1x18x18x8xbf16, #tpu.memory_space<vmem>>, vector<1x16x16x8xbf16>
    %37 = vector.shape_cast %36 : vector<1x16x16x8xbf16> to vector<16x16x8xbf16>
    %38 = vector.shape_cast %37 : vector<16x16x8xbf16> to vector<256x8xbf16>
    %c5 = arith.constant 5 : index
    %c0_39 = arith.constant 0 : index
    %c0_40 = arith.constant 0 : index
    %39 = vector.load %arg3[%c5, %c0_39, %c0_40] : memref<9x8x128xbf16, #tpu.memory_space<vmem>>, vector<1x8x128xbf16>
    %40 = vector.shape_cast %39 : vector<1x8x128xbf16> to vector<8x128xbf16>
    %cst_41 = arith.constant dense<0.000000e+00> : vector<256x128xf32>
    %41 = tpu.matmul %38, %40, %cst_41 {dimension_numbers = #tpu.dot_dimension_numbers<[1], [0], [0], [1], [0, 0, 1, 1], [], []>} : vector<256x8xbf16>, vector<8x128xbf16>, vector<256x128xf32> -> vector<256x128xf32>
    %42 = arith.addf %35, %41 : vector<256x128xf32>
    %c0_42 = arith.constant 0 : index
    %c2_43 = arith.constant 2 : index
    %c0_44 = arith.constant 0 : index
    %c0_45 = arith.constant 0 : index
    %43 = vector.load %arg2[%c0_42, %c2_43, %c0_44, %c0_45] : memref<1x18x18x8xbf16, #tpu.memory_space<vmem>>, vector<1x16x16x8xbf16>
    %44 = vector.shape_cast %43 : vector<1x16x16x8xbf16> to vector<16x16x8xbf16>
    %45 = vector.shape_cast %44 : vector<16x16x8xbf16> to vector<256x8xbf16>
    %c6 = arith.constant 6 : index
    %c0_46 = arith.constant 0 : index
    %c0_47 = arith.constant 0 : index
    %46 = vector.load %arg3[%c6, %c0_46, %c0_47] : memref<9x8x128xbf16, #tpu.memory_space<vmem>>, vector<1x8x128xbf16>
    %47 = vector.shape_cast %46 : vector<1x8x128xbf16> to vector<8x128xbf16>
    %cst_48 = arith.constant dense<0.000000e+00> : vector<256x128xf32>
    %48 = tpu.matmul %45, %47, %cst_48 {dimension_numbers = #tpu.dot_dimension_numbers<[1], [0], [0], [1], [0, 0, 1, 1], [], []>} : vector<256x8xbf16>, vector<8x128xbf16>, vector<256x128xf32> -> vector<256x128xf32>
    %49 = arith.addf %42, %48 : vector<256x128xf32>
    %c0_49 = arith.constant 0 : index
    %c2_50 = arith.constant 2 : index
    %c1_51 = arith.constant 1 : index
    %c0_52 = arith.constant 0 : index
    %50 = vector.load %arg2[%c0_49, %c2_50, %c1_51, %c0_52] : memref<1x18x18x8xbf16, #tpu.memory_space<vmem>>, vector<1x16x16x8xbf16>
    %51 = vector.shape_cast %50 : vector<1x16x16x8xbf16> to vector<16x16x8xbf16>
    %52 = vector.shape_cast %51 : vector<16x16x8xbf16> to vector<256x8xbf16>
    %c7 = arith.constant 7 : index
    %c0_53 = arith.constant 0 : index
    %c0_54 = arith.constant 0 : index
    %53 = vector.load %arg3[%c7, %c0_53, %c0_54] : memref<9x8x128xbf16, #tpu.memory_space<vmem>>, vector<1x8x128xbf16>
    %54 = vector.shape_cast %53 : vector<1x8x128xbf16> to vector<8x128xbf16>
    %cst_55 = arith.constant dense<0.000000e+00> : vector<256x128xf32>
    %55 = tpu.matmul %52, %54, %cst_55 {dimension_numbers = #tpu.dot_dimension_numbers<[1], [0], [0], [1], [0, 0, 1, 1], [], []>} : vector<256x8xbf16>, vector<8x128xbf16>, vector<256x128xf32> -> vector<256x128xf32>
    %56 = arith.addf %49, %55 : vector<256x128xf32>
    %c0_56 = arith.constant 0 : index
    %c2_57 = arith.constant 2 : index
    %c2_58 = arith.constant 2 : index
    %c0_59 = arith.constant 0 : index
    %57 = vector.load %arg2[%c0_56, %c2_57, %c2_58, %c0_59] : memref<1x18x18x8xbf16, #tpu.memory_space<vmem>>, vector<1x16x16x8xbf16>
    %58 = vector.shape_cast %57 : vector<1x16x16x8xbf16> to vector<16x16x8xbf16>
    %59 = vector.shape_cast %58 : vector<16x16x8xbf16> to vector<256x8xbf16>
    %c8 = arith.constant 8 : index
    %c0_60 = arith.constant 0 : index
    %c0_61 = arith.constant 0 : index
    %60 = vector.load %arg3[%c8, %c0_60, %c0_61] : memref<9x8x128xbf16, #tpu.memory_space<vmem>>, vector<1x8x128xbf16>
    %61 = vector.shape_cast %60 : vector<1x8x128xbf16> to vector<8x128xbf16>
    %cst_62 = arith.constant dense<0.000000e+00> : vector<256x128xf32>
    %62 = tpu.matmul %59, %61, %cst_62 {dimension_numbers = #tpu.dot_dimension_numbers<[1], [0], [0], [1], [0, 0, 1, 1], [], []>} : vector<256x8xbf16>, vector<8x128xbf16>, vector<256x128xf32> -> vector<256x128xf32>
    %63 = arith.addf %56, %62 : vector<256x128xf32>
    %c0_63 = arith.constant 0 : index
    %c0_64 = arith.constant 0 : index
    %64 = vector.load %arg4[%c0_63, %c0_64] : memref<1x128xf32, #tpu.memory_space<vmem>>, vector<1x128xf32>
    %65 = vector.broadcast %64 : vector<1x128xf32> to vector<256x128xf32>
    %66 = arith.addf %63, %65 : vector<256x128xf32>
    %cst_65 = arith.constant 0.000000e+00 : f32
    %67 = vector.broadcast %cst_65 : f32 to vector<256x128xf32>
    %68 = arith.maximumf %66, %67 : vector<256x128xf32>
    %69 = arith.truncf %68 : vector<256x128xf32> to vector<256x128xbf16>
    %c0_66 = arith.constant 0 : index
    %c0_67 = arith.constant 0 : index
    %c0_68 = arith.constant 0 : index
    %70 = vector.load %arg5[%c0_66, %c0_67, %c0_68] : memref<1x256x128xbf16, #tpu.memory_space<vmem>>, vector<1x256x128xbf16>
    %71 = vector.shape_cast %70 : vector<1x256x128xbf16> to vector<256x128xbf16>
    %72 = vector.shape_cast %69 : vector<256x128xbf16> to vector<1x256x128xbf16>
    tpu.vector_store %arg5[%c0_66, %c0_67, %c0_68], %72 {strides = array<i32>} : memref<1x256x128xbf16, #tpu.memory_space<vmem>>, vector<1x256x128xbf16>,
    return
  }
  func.func @transform_0(%arg0: i32, %arg1: i32) -> (i32, i32, i32, i32) {
    %c1_i32 = arith.constant 1 : i32
    %0 = arith.muli %arg0, %c1_i32 : i32
    %1 = arith.addi %0, %arg1 : i32
    %c0_i32 = arith.constant 0 : i32
    %c0_i32_0 = arith.constant 0 : i32
    %c0_i32_1 = arith.constant 0 : i32
    %c0_i32_2 = arith.constant 0 : i32
    return %1, %c0_i32, %c0_i32_0, %c0_i32_1 : i32, i32, i32, i32
  }
  func.func @transform_1(%arg0: i32, %arg1: i32) -> (i32, i32, i32) {
    %c0_i32 = arith.constant 0 : i32
    %c0_i32_0 = arith.constant 0 : i32
    %c0_i32_1 = arith.constant 0 : i32
    %c0_i32_2 = arith.constant 0 : i32
    return %c0_i32, %c0_i32_0, %c0_i32_1 : i32, i32, i32
  }
  func.func @transform_2(%arg0: i32, %arg1: i32) -> (i32, i32) {
    %c0_i32 = arith.constant 0 : i32
    %c0_i32_0 = arith.constant 0 : i32
    %c0_i32_1 = arith.constant 0 : i32
    return %c0_i32, %c0_i32_0 : i32, i32
  }
  func.func @transform_3(%arg0: i32, %arg1: i32) -> (i32, i32, i32) {
    %c0_i32 = arith.constant 0 : i32
    %c0_i32_0 = arith.constant 0 : i32
    return %arg0, %arg1, %c0_i32 : i32, i32, i32
  }
}

</mosaic_0001>

<llo_original>
// kernel: tpu_custom_call.1
$region0: #{tpu_custom_call.1}
  #allocation0 [shape = 'u32[]', space=smem, size = 0x4, offset = 0x4, fixed_abs, tag = 'smem constant byte address 0x4 - core index']
  #allocation1 [shape = 'u32[72,128]{1,0:T(1,128)}', space=vmem, size = 0x9000, scoped, tag = 'internal scratch']
  %s0 = inlined_call_operand.vmem [shape: bf16[2,18,18,8], index: 0, kind: input, shape index: {}]
  %s1 = inlined_call_operand.vmem [shape: bf16[9,8,128], index: 1, kind: input, shape index: {}]
  %s2 = inlined_call_operand.vmem [shape: f32[1,128], index: 2, kind: input, shape index: {}]
  %s3 = inlined_call_operand.hbm [shape: bf16[2,256,128], index: 3, kind: output, shape index: {}]
  %s4 = sld [smem:[#allocation0]]
  $region45: #{tpu_custom_call.1} parent=0
    _
  %s6 = ssub.s32 1, %s4
  %s7 = scalar_select 0, %s6, %s4
  $region1: #{tpu_custom_call.1} parent=0
    #allocation2 [shape = 'u8[131072]{0}', space=vmem, size = 0x20000, scoped, tag = 'output window, operand 0']
    #allocation3 [shape = 's32[2]{0}', space=sflag, size = 0x8, scoped, tag = 'scoped memory for tpu_custom_call.1']
    %8 = vsyncpa [#allocation3], 0
    %s9 = scalar_lea.sflag [#allocation3], 1
    %10 = vsyncpa %s9, 0
    loop: start=0, step=1, limit=4
    $region2: #{tpu_custom_call.1} parent=1 // loop_pre_header
      _
    $region3: #{tpu_custom_call.1} parent=1 // loop_header
      %s12 = sphi 0, %s16
      %p13 = scmp.ge.s32.totalorder %s12, 4
      %s19 = sphi 0, %s31
      %s20 = sphi 0, %s27
      %s21 = sphi 0, %s19
      %s22 = sphi 0, %s20
      %s23 = sphi 0, %s21
      %s24 = sphi 0, %s22
      %s36 = sphi 0, %s38
      %s39 = sphi 0, %s36
      %s40 = sphi 0, %s39
      %s56 = sphi 0, %s40
      %s60 = sphi 0, %s60
      %s62 = sphi 0, %s60
      %s63 = sphi 0, %s62
      %s77 = sphi 0, %s63
      %s81 = sphi 0, %s81
      %s83 = sphi 0, %s81
      %s84 = sphi 0, %s83
      %s98 = sphi 0, %s84
      %s106 = sphi 0, %s108
      %s109 = sphi 0, %s106
      %s110 = sphi 0, %s109
      %s126 = sphi 0, %s110
    $region4: #{tpu_custom_call.1} parent=1 // loop_header_branch
      %15 = sbr.rel (%p13) target = $region8
    $region5: #{tpu_custom_call.1} parent=1 // loop_body
      %s17 = ssub.s32 %s12, 1
      %s18 = ssub.s32 %s12, 2
      %s25 = sadd.s32 1, %s20
      %p26 = scmp.ge.s32.totalorder %s25, 1
      %s27 = scalar_select %p26, 0, %s25
      %s28 = sadd.s32 1, %s19
      %s29 = scalar_select %p26, %s28, %s19
      %p30 = scmp.ge.s32.totalorder %s29, 2
      %s31 = scalar_select %p30, 0, %s29
      %s32 = sadd.s32 %s19, %s20
      %s33 = sadd.s32 %s31, %s27
      %s34 = ssub.s32 %s32, %s33
      %p35 = scmp.eq.s32.totalorder %s34, 0
      %s37 = sadd.s32 %s36, 1
      %s38 = scalar_select %p35, %s36, %s37
      %p41 = pneg %p35
      %p42 = scmp.eq.s32.totalorder %s12, 1
      %p43 = por %p41, %p42
      %p44 = scmp.ne.s32.totalorder %s36, %s39
      %p45 = scmp.eq.s32.totalorder %s12, 0
      %p46 = por %p44, %p45
      %p47 = scmp.ne.s32.totalorder %s36, %s39
      %p48 = scmp.eq.s32.totalorder %s17, 1
      %p49 = por %p47, %p48
      %p50 = scmp.ne.s32.totalorder %s39, %s40
      %p51 = scmp.eq.s32.totalorder %s17, 0
      %p52 = por %p50, %p51
      %p53 = scmp.ne.s32.totalorder %s39, %s40
      %p54 = scmp.eq.s32.totalorder %s18, 1
      %p55 = por %p53, %p54
      %p57 = scmp.ne.s32.totalorder %s40, %s56
      %p58 = scmp.eq.s32.totalorder %s18, 0
      %p59 = por %p57, %p58
      %s61 = sadd.s32 %s60, 1
      %p64 = scmp.eq.s32.totalorder %s12, 1
      %p65 = scmp.ne.s32.totalorder %s60, %s62
      %p66 = scmp.eq.s32.totalorder %s12, 0
      %p67 = por %p65, %p66
      %p68 = scmp.ne.s32.totalorder %s60, %s62
      %p69 = scmp.eq.s32.totalorder %s17, 1
      %p70 = por %p68, %p69
      %p71 = scmp.ne.s32.totalorder %s62, %s63
      %p72 = scmp.eq.s32.totalorder %s17, 0
      %p73 = por %p71, %p72
      %p74 = scmp.ne.s32.totalorder %s62, %s63
      %p75 = scmp.eq.s32.totalorder %s18, 1
      %p76 = por %p74, %p75
      %p78 = scmp.ne.s32.totalorder %s63, %s77
      %p79 = scmp.eq.s32.totalorder %s18, 0
      %p80 = por %p78, %p79
      %s82 = sadd.s32 %s81, 1
      %p85 = scmp.eq.s32.totalorder %s12, 1
      %p86 = scmp.ne.s32.totalorder %s81, %s83
      %p87 = scmp.eq.s32.totalorder %s12, 0
      %p88 = por %p86, %p87
      %p89 = scmp.ne.s32.totalorder %s81, %s83
      %p90 = scmp.eq.s32.totalorder %s17, 1
      %p91 = por %p89, %p90
      %p92 = scmp.ne.s32.totalorder %s83, %s84
      %p93 = scmp.eq.s32.totalorder %s17, 0
      %p94 = por %p92, %p93
      %p95 = scmp.ne.s32.totalorder %s83, %s84
      %p96 = scmp.eq.s32.totalorder %s18, 1
      %p97 = por %p95, %p96
      %p99 = scmp.ne.s32.totalorder %s84, %s98
      %p100 = scmp.eq.s32.totalorder %s18, 0
      %p101 = por %p99, %p100
      %s102 = ssub.s32 %s19, %s31
      %s103 = ssub.s32 %s20, %s27
      %s104 = sor.u32 %s102, %s103
      %p105 = scmp.eq.s32.totalorder %s104, 0
      %s107 = sadd.s32 %s106, 1
      %s108 = scalar_select %p105, %s106, %s107
      %p111 = pneg %p105
      %p112 = scmp.eq.s32.totalorder %s12, 1
      %p113 = por %p111, %p112
      %p114 = scmp.ne.s32.totalorder %s106, %s109
      %p115 = scmp.eq.s32.totalorder %s12, 0
      %p116 = por %p114, %p115
      %p117 = scmp.ne.s32.totalorder %s106, %s109
      %p118 = scmp.eq.s32.totalorder %s17, 1
      %p119 = por %p117, %p118
      %p120 = scmp.ne.s32.totalorder %s109, %s110
      %p121 = scmp.eq.s32.totalorder %s17, 0
      %p122 = por %p120, %p121
      %p123 = scmp.ne.s32.totalorder %s109, %s110
      %p124 = scmp.eq.s32.totalorder %s18, 1
      %p125 = por %p123, %p124
      %p127 = scmp.ne.s32.totalorder %s110, %s126
      %p128 = scmp.eq.s32.totalorder %s18, 0
      %p129 = por %p127, %p128
      %p130 = scmp.le.s32.totalorder 1, %s12
      %p131 = scmp.lt.s32.totalorder %s12, 3
      %p132 = pnand %p130, %p131
      %p133 = pneg %p132
      // Predicated region
      $region9: #{tpu_custom_call.1} parent=5 // pred_check
        _
      $region10: #{tpu_custom_call.1} parent=5 // pred_check_branch
        %135 = sbr.rel (%p132) target = $region12
      $region11: #{tpu_custom_call.1} parent=5 // pred_region
        %s136 = ssub.s32 %s12, 1
        // Predicated region
        $region13: #{tpu_custom_call.1} parent=11 // pred_check
          %p137 = pneg %p73
        $region14: #{tpu_custom_call.1} parent=11 // pred_check_branch
          %139 = sbr.rel (%p137) target = $region16
        $region15: #{tpu_custom_call.1} parent=11 // pred_region
          _
        $region16: #{tpu_custom_call.1} parent=11 // pred_fallthru
          _
        // Predicated region
        $region17: #{tpu_custom_call.1} parent=11 // pred_check
          %p140 = pneg %p94
        $region18: #{tpu_custom_call.1} parent=11 // pred_check_branch
          %142 = sbr.rel (%p140) target = $region20
        $region19: #{tpu_custom_call.1} parent=11 // pred_region
          _
        $region20: #{tpu_custom_call.1} parent=11 // pred_fallthru
          _
      $region12: #{tpu_custom_call.1} parent=5 // pred_fallthru
        _
      %p143 = scmp.lt.s32.totalorder %s12, 2
      // Predicated region
      $region21: #{tpu_custom_call.1} parent=5 // pred_check
        %p144 = pneg %p143
      $region22: #{tpu_custom_call.1} parent=5 // pred_check_branch
        %146 = sbr.rel (%p144) target = $region24
      $region23: #{tpu_custom_call.1} parent=5 // pred_region
        // Predicated region
        $region25: #{tpu_custom_call.1} parent=23 // pred_check
          %p147 = pneg %p46
        $region26: #{tpu_custom_call.1} parent=23 // pred_check_branch
          %149 = sbr.rel (%p147) target = $region28
        $region27: #{tpu_custom_call.1} parent=23 // pred_region
          %s150 = sadd.s32 %s19, %s20
          %p151 = scmp.lt.s32.totalorder %s150, 1
          %s152 = scalar_select %p151, %s150, 1
          %s153 = smul.addr %s152, 54
          %s154 = smul.addr %s153, 4
          %s155 = scalar_lea.vmem %s0, %s154
          %s156 = sadd.s32 %s19, %s20
        $region28: #{tpu_custom_call.1} parent=23 // pred_fallthru
          _
      $region24: #{tpu_custom_call.1} parent=5 // pred_fallthru
        _
      %p157 = scmp.le.s32.totalorder 1, %s12
      %p158 = scmp.lt.s32.totalorder %s12, 3
      %p159 = pnand %p157, %p158
      %p160 = pneg %p159
      // Predicated region
      $region29: #{tpu_custom_call.1} parent=5 // pred_check
        _
      $region30: #{tpu_custom_call.1} parent=5 // pred_check_branch
        %162 = sbr.rel (%p159) target = $region32
      $region31: #{tpu_custom_call.1} parent=5 // pred_region
        %s163 = ssub.s32 %s12, 1
        %s164 = sadd.s32 %s21, %s22
        %p165 = scmp.lt.s32.totalorder %s164, 1
        %s166 = scalar_select %p165, %s164, 1
        %s167 = smul.addr %s166, 54
        %s168 = smul.addr %s167, 4
        %s169 = scalar_lea.vmem %s0, %s168
        %p170 = pneg %p52
        %p171 = pneg %p49
        %p172 = pneg %p73
        %p173 = pneg %p70
        %p174 = pneg %p94
        %p175 = pneg %p91
        %p176 = pneg %p122
        %p177 = pneg %p119
        %s178 = sand.u32 %s109, 1
        %s179 = scalar_lea.sflag [#allocation3], %s178
        %s180 = sand.u32 %s109, 1
        %s181 = smul.addr %s180, 128
        %s182 = scalar_lea.vmem [#allocation2], %s181
        %s183 = sadd.s32 %s21, %s22
        %p184 = scmp.lt.s32.totalorder %s183, 1
        %s185 = scalar_select %p184, %s183, 1
        %s186 = smul.addr %s185, 54
        %s187 = smul.addr %s186, 4
        %s188 = scalar_lea.vmem %s0, %s187
        %s189 = sadd.s32 %s21, %s22
        %s190 = smul.u32 32, %s22
        %v192 = vld [vmem:[%s188] sm:$0xf]
        %v193 = vld [vmem:[%s188 + $0x4] sm:$0xf]
        %v194 = vld [vmem:[%s188 + $0xc] sm:$0xf]
        %v195 = vld [vmem:[%s188 + $0x10] sm:$0xf]
        %v196 = vld [vmem:[%s188 + $0x18] sm:$0xf]
        %v197 = vld [vmem:[%s188 + $0x1c] sm:$0xf]
        %v198 = vld [vmem:[%s188 + $0x24] sm:$0xf]
        %v199 = vld [vmem:[%s188 + $0x28] sm:$0xf]
        %v200 = vld [vmem:[%s188 + $0x30] sm:$0xf]
        %v201 = vld [vmem:[%s188 + $0x34] sm:$0xf]
        %v202 = vld [vmem:[%s188 + $0x3c] sm:$0xf]
        %v203 = vld [vmem:[%s188 + $0x40] sm:$0xf]
        %v204 = vld [vmem:[%s188 + $0x48] sm:$0xf]
        %v205 = vld [vmem:[%s188 + $0x4c] sm:$0xf]
        %v206 = vld [vmem:[%s188 + $0x54] sm:$0xf]
        %v207 = vld [vmem:[%s188 + $0x58] sm:$0xf]
        %v208 = vld [vmem:[%s188 + $0x60] sm:$0xf]
        %v209 = vld [vmem:[%s188 + $0x64] sm:$0xf]
        %v210 = vld [vmem:[%s188 + $0x6c] sm:$0xf]
        %v211 = vld [vmem:[%s188 + $0x70] sm:$0xf]
        %v212 = vld [vmem:[%s188 + $0x78] sm:$0xf]
        %v213 = vld [vmem:[%s188 + $0x7c] sm:$0xf]
        %v214 = vld [vmem:[%s188 + $0x84] sm:$0xf]
        %v215 = vld [vmem:[%s188 + $0x88] sm:$0xf]
        %v216 = vld [vmem:[%s188 + $0x90] sm:$0xf]
        %v217 = vld [vmem:[%s188 + $0x94] sm:$0xf]
        %v218 = vld [vmem:[%s188 + $0x9c] sm:$0xf]
        %v219 = vld [vmem:[%s188 + $0xa0] sm:$0xf]
        %v220 = vld [vmem:[%s188 + $0xa8] sm:$0xf]
        %v221 = vld [vmem:[%s188 + $0xac] sm:$0xf]
        %v222 = vld [vmem:[%s188 + $0xb4] sm:$0xf]
        %v223 = vld [vmem:[%s188 + $0xb8] sm:$0xf]
        %v224 = vld [vmem:[%s1] sm:$0xf]
        %v225 = vld [vmem:[%s188 + $0x8] sm:$0x1]
        %v226 = vld [vmem:[%s188 + $0x14] sm:$0x1]
        %v227 = vld [vmem:[%s188 + $0x20] sm:$0x1]
        %v228 = vld [vmem:[%s188 + $0x2c] sm:$0x1]
        %v229 = vld [vmem:[%s188 + $0x38] sm:$0x1]
        %v230 = vld [vmem:[%s188 + $0x44] sm:$0x1]
        %v231 = vld [vmem:[%s188 + $0x50] sm:$0x1]
        %v232 = vld [vmem:[%s188 + $0x5c] sm:$0x1]
        %v233 = vld [vmem:[%s188 + $0x68] sm:$0x1]
        %v234 = vld [vmem:[%s188 + $0x74] sm:$0x1]
        %v235 = vld [vmem:[%s188 + $0x80] sm:$0x1]
        %v236 = vld [vmem:[%s188 + $0x8c] sm:$0x1]
        %v237 = vld [vmem:[%s188 + $0x98] sm:$0x1]
        %v238 = vld [vmem:[%s188 + $0xa4] sm:$0x1]
        %v239 = vld [vmem:[%s188 + $0xb0] sm:$0x1]
        %v240 = vld [vmem:[%s188 + $0xbc] sm:$0x1]
        %vm241 = vsmask.f32 3328
        %vm242 = vsmask.f32 7440
        %vm243 = vmor %vm241, %vm242
        %v245 = vshrl.u32 %v192, 16
        %v247 = vrot.slane %v245, 4
        %v248 = vshll.u32 %v192, 16
        %v250 = vrot.slane %v248, 5
        %v251 = vor.u32 %v247, %v250
        %v252 = vrot.slane %v251, 4
        %v254 = vshll.u32 %v193, 16
        %v256 = vrot.slane %v254, 5
        %v257 = vsel %vm243, %v252, %v256
        %v258 = vshrl.u32 %v193, 16
        %v260 = vrot.slane %v258, 4
        %v261 = vor.u32 %v260, %v256
        %v262 = vrot.slane %v261, 4
        %v264 = vshll.u32 %v225, 16
        %v266 = vrot.slane %v264, 5
        %v267 = vsel %vm243, %v262, %v266
        %v269 = vshrl.u32 %v194, 16
        %v271 = vrot.slane %v269, 4
        %v272 = vshll.u32 %v194, 16
        %v274 = vrot.slane %v272, 5
        %v275 = vor.u32 %v271, %v274
        %v276 = vrot.slane %v275, 4
        %v278 = vshll.u32 %v195, 16
        %v280 = vrot.slane %v278, 5
        %v281 = vsel %vm243, %v276, %v280
        %v282 = vshrl.u32 %v195, 16
        %v284 = vrot.slane %v282, 4
        %v285 = vor.u32 %v284, %v280
        %v286 = vrot.slane %v285, 4
        %v288 = vshll.u32 %v226, 16
        %v290 = vrot.slane %v288, 5
        %v291 = vsel %vm243, %v286, %v290
        %v293 = vshrl.u32 %v196, 16
        %v295 = vrot.slane %v293, 4
        %v296 = vshll.u32 %v196, 16
        %v298 = vrot.slane %v296, 5
        %v299 = vor.u32 %v295, %v298
        %v300 = vrot.slane %v299, 4
        %v302 = vshll.u32 %v197, 16
        %v304 = vrot.slane %v302, 5
        %v305 = vsel %vm243, %v300, %v304
        %v306 = vshrl.u32 %v197, 16
        %v308 = vrot.slane %v306, 4
        %v309 = vor.u32 %v308, %v304
        %v310 = vrot.slane %v309, 4
        %v312 = vshll.u32 %v227, 16
        %v314 = vrot.slane %v312, 5
        %v315 = vsel %vm243, %v310, %v314
        %v317 = vshrl.u32 %v198, 16
        %v319 = vrot.slane %v317, 4
        %v320 = vshll.u32 %v198, 16
        %v322 = vrot.slane %v320, 5
        %v323 = vor.u32 %v319, %v322
        %v324 = vrot.slane %v323, 4
        %v326 = vshll.u32 %v199, 16
        %v328 = vrot.slane %v326, 5
        %v329 = vsel %vm243, %v324, %v328
        %v330 = vshrl.u32 %v199, 16
        %v332 = vrot.slane %v330, 4
        %v333 = vor.u32 %v332, %v328
        %v334 = vrot.slane %v333, 4
        %v336 = vshll.u32 %v228, 16
        %v338 = vrot.slane %v336, 5
        %v339 = vsel %vm243, %v334, %v338
        %v341 = vshrl.u32 %v200, 16
        %v343 = vrot.slane %v341, 4
        %v344 = vshll.u32 %v200, 16
        %v346 = vrot.slane %v344, 5
        %v347 = vor.u32 %v343, %v346
        %v348 = vrot.slane %v347, 4
        %v350 = vshll.u32 %v201, 16
        %v352 = vrot.slane %v350, 5
        %v353 = vsel %vm243, %v348, %v352
        %v354 = vshrl.u32 %v201, 16
        %v356 = vrot.slane %v354, 4
        %v357 = vor.u32 %v356, %v352
        %v358 = vrot.slane %v357, 4
        %v360 = vshll.u32 %v229, 16
        %v362 = vrot.slane %v360, 5
        %v363 = vsel %vm243, %v358, %v362
        %v365 = vshrl.u32 %v202, 16
        %v367 = vrot.slane %v365, 4
        %v368 = vshll.u32 %v202, 16
        %v370 = vrot.slane %v368, 5
        %v371 = vor.u32 %v367, %v370
        %v372 = vrot.slane %v371, 4
        %v374 = vshll.u32 %v203, 16
        %v376 = vrot.slane %v374, 5
        %v377 = vsel %vm243, %v372, %v376
        %v378 = vshrl.u32 %v203, 16
        %v380 = vrot.slane %v378, 4
        %v381 = vor.u32 %v380, %v376
        %v382 = vrot.slane %v381, 4
        %v384 = vshll.u32 %v230, 16
        %v386 = vrot.slane %v384, 5
        %v387 = vsel %vm243, %v382, %v386
        %v389 = vshrl.u32 %v204, 16
        %v391 = vrot.slane %v389, 4
        %v392 = vshll.u32 %v204, 16
        %v394 = vrot.slane %v392, 5
        %v395 = vor.u32 %v391, %v394
        %v396 = vrot.slane %v395, 4
        %v398 = vshll.u32 %v205, 16
        %v400 = vrot.slane %v398, 5
        %v401 = vsel %vm243, %v396, %v400
        %v402 = vshrl.u32 %v205, 16
        %v404 = vrot.slane %v402, 4
        %v405 = vor.u32 %v404, %v400
        %v406 = vrot.slane %v405, 4
        %v408 = vshll.u32 %v231, 16
        %v410 = vrot.slane %v408, 5
        %v411 = vsel %vm243, %v406, %v410
        %v413 = vshrl.u32 %v206, 16
        %v415 = vrot.slane %v413, 4
        %v416 = vshll.u32 %v206, 16
        %v418 = vrot.slane %v416, 5
        %v419 = vor.u32 %v415, %v418
        %v420 = vrot.slane %v419, 4
        %v422 = vshll.u32 %v207, 16
        %v424 = vrot.slane %v422, 5
        %v425 = vsel %vm243, %v420, %v424
        %v426 = vshrl.u32 %v207, 16
        %v428 = vrot.slane %v426, 4
        %v429 = vor.u32 %v428, %v424
        %v430 = vrot.slane %v429, 4
        %v432 = vshll.u32 %v232, 16
        %v434 = vrot.slane %v432, 5
        %v435 = vsel %vm243, %v430, %v434
        %v437 = vshrl.u32 %v208, 16
        %v439 = vrot.slane %v437, 4
        %v440 = vshll.u32 %v208, 16
        %v442 = vrot.slane %v440, 5
        %v443 = vor.u32 %v439, %v442
        %v444 = vrot.slane %v443, 4
        %v446 = vshll.u32 %v209, 16
        %v448 = vrot.slane %v446, 5
        %v449 = vsel %vm243, %v444, %v448
        %v450 = vshrl.u32 %v209, 16
        %v452 = vrot.slane %v450, 4
        %v453 = vor.u32 %v452, %v448
        %v454 = vrot.slane %v453, 4
        %v456 = vshll.u32 %v233, 16
        %v458 = vrot.slane %v456, 5
        %v459 = vsel %vm243, %v454, %v458
        %v461 = vshrl.u32 %v210, 16
        %v463 = vrot.slane %v461, 4
        %v464 = vshll.u32 %v210, 16
        %v466 = vrot.slane %v464, 5
        %v467 = vor.u32 %v463, %v466
        %v468 = vrot.slane %v467, 4
        %v470 = vshll.u32 %v211, 16
        %v472 = vrot.slane %v470, 5
        %v473 = vsel %vm243, %v468, %v472
        %v474 = vshrl.u32 %v211, 16
        %v476 = vrot.slane %v474, 4
        %v477 = vor.u32 %v476, %v472
        %v478 = vrot.slane %v477, 4
        %v480 = vshll.u32 %v234, 16
        %v482 = vrot.slane %v480, 5
        %v483 = vsel %vm243, %v478, %v482
        %v485 = vshrl.u32 %v212, 16
        %v487 = vrot.slane %v485, 4
        %v488 = vshll.u32 %v212, 16
        %v490 = vrot.slane %v488, 5
        %v491 = vor.u32 %v487, %v490
        %v492 = vrot.slane %v491, 4
        %v494 = vshll.u32 %v213, 16
        %v496 = vrot.slane %v494, 5
        %v497 = vsel %vm243, %v492, %v496
        %v498 = vshrl.u32 %v213, 16
        %v500 = vrot.slane %v498, 4
        %v501 = vor.u32 %v500, %v496
        %v502 = vrot.slane %v501, 4
        %v504 = vshll.u32 %v235, 16
        %v506 = vrot.slane %v504, 5
        %v507 = vsel %vm243, %v502, %v506
        %v509 = vshrl.u32 %v214, 16
        %v511 = vrot.slane %v509, 4
        %v512 = vshll.u32 %v214, 16
        %v514 = vrot.slane %v512, 5
        %v515 = vor.u32 %v511, %v514
        %v516 = vrot.slane %v515, 4
        %v518 = vshll.u32 %v215, 16
        %v520 = vrot.slane %v518, 5
        %v521 = vsel %vm243, %v516, %v520
        %v522 = vshrl.u32 %v215, 16
        %v524 = vrot.slane %v522, 4
        %v525 = vor.u32 %v524, %v520
        %v526 = vrot.slane %v525, 4
        %v528 = vshll.u32 %v236, 16
        %v530 = vrot.slane %v528, 5
        %v531 = vsel %vm243, %v526, %v530
        %v533 = vshrl.u32 %v216, 16
        %v535 = vrot.slane %v533, 4
        %v536 = vshll.u32 %v216, 16
        %v538 = vrot.slane %v536, 5
        %v539 = vor.u32 %v535, %v538
        %v540 = vrot.slane %v539, 4
        %v542 = vshll.u32 %v217, 16
        %v544 = vrot.slane %v542, 5
        %v545 = vsel %vm243, %v540, %v544
        %v546 = vshrl.u32 %v217, 16
        %v548 = vrot.slane %v546, 4
        %v549 = vor.u32 %v548, %v544
        %v550 = vrot.slane %v549, 4
        %v552 = vshll.u32 %v237, 16
        %v554 = vrot.slane %v552, 5
        %v555 = vsel %vm243, %v550, %v554
        %v557 = vshrl.u32 %v218, 16
        %v559 = vrot.slane %v557, 4
        %v560 = vshll.u32 %v218, 16
        %v562 = vrot.slane %v560, 5
        %v563 = vor.u32 %v559, %v562
        %v564 = vrot.slane %v563, 4
        %v566 = vshll.u32 %v219, 16
        %v568 = vrot.slane %v566, 5
        %v569 = vsel %vm243, %v564, %v568
        %v570 = vshrl.u32 %v219, 16
        %v572 = vrot.slane %v570, 4
        %v573 = vor.u32 %v572, %v568
        %v574 = vrot.slane %v573, 4
        %v576 = vshll.u32 %v238, 16
        %v578 = vrot.slane %v576, 5
        %v579 = vsel %vm243, %v574, %v578
        %v581 = vshrl.u32 %v220, 16
        %v583 = vrot.slane %v581, 4
        %v584 = vshll.u32 %v220, 16
        %v586 = vrot.slane %v584, 5
        %v587 = vor.u32 %v583, %v586
        %v588 = vrot.slane %v587, 4
        %v590 = vshll.u32 %v221, 16
        %v592 = vrot.slane %v590, 5
        %v593 = vsel %vm243, %v588, %v592
        %v594 = vshrl.u32 %v221, 16
        %v596 = vrot.slane %v594, 4
        %v597 = vor.u32 %v596, %v592
        %v598 = vrot.slane %v597, 4
        %v600 = vshll.u32 %v239, 16
        %v602 = vrot.slane %v600, 5
        %v603 = vsel %vm243, %v598, %v602
        %v605 = vshrl.u32 %v222, 16
        %v607 = vrot.slane %v605, 4
        %v608 = vshll.u32 %v222, 16
        %v610 = vrot.slane %v608, 5
        %v611 = vor.u32 %v607, %v610
        %v612 = vrot.slane %v611, 4
        %v614 = vshll.u32 %v223, 16
        %v616 = vrot.slane %v614, 5
        %v617 = vsel %vm243, %v612, %v616
        %v618 = vshrl.u32 %v223, 16
        %v620 = vrot.slane %v618, 4
        %v621 = vor.u32 %v620, %v616
        %v622 = vrot.slane %v621, 4
        %v624 = vshll.u32 %v240, 16
        %v626 = vrot.slane %v624, 5
        %v627 = vsel %vm243, %v622, %v626
        %s628 = scalar_lea.vmem %s1, 4
        %v629 = vld [vmem:[%s628] sm:$0xf]
        %v630 = vunpack.c.l.b16 %v257
        %v631 = vunpack.c.l.b16 %v267
        %v632 = vunpack.c.l.b16 %v281
        %v633 = vunpack.c.l.b16 %v291
        %v634 = vunpack.c.l.b16 %v305
        %v635 = vunpack.c.l.b16 %v315
        %v636 = vunpack.c.l.b16 %v329
        %v637 = vunpack.c.l.b16 %v339
        %v638 = vunpack.c.l.b16 %v353
        %v639 = vunpack.c.l.b16 %v363
        %v640 = vunpack.c.l.b16 %v377
        %v641 = vunpack.c.l.b16 %v387
        %v642 = vunpack.c.l.b16 %v401
        %v643 = vunpack.c.l.b16 %v411
        %v644 = vunpack.c.l.b16 %v425
        %v645 = vunpack.c.l.b16 %v435
        %v646 = vunpack.c.l.b16 %v449
        %v647 = vunpack.c.l.b16 %v459
        %v648 = vunpack.c.l.b16 %v473
        %v649 = vunpack.c.l.b16 %v483
        %v650 = vunpack.c.l.b16 %v497
        %v651 = vunpack.c.l.b16 %v507
        %v652 = vunpack.c.l.b16 %v521
        %v653 = vunpack.c.l.b16 %v531
        %v654 = vunpack.c.l.b16 %v545
        %v655 = vunpack.c.l.b16 %v555
        %v656 = vunpack.c.l.b16 %v569
        %v657 = vunpack.c.l.b16 %v579
        %v658 = vunpack.c.l.b16 %v593
        %v659 = vunpack.c.l.b16 %v603
        %v660 = vunpack.c.l.b16 %v617
        %v661 = vunpack.c.l.b16 %v627
        %v662 = vpack.c.b16 %v631, %v630
        %v663 = vpack.c.b16 %v633, %v632
        %v664 = vpack.c.b16 %v635, %v634
        %v665 = vpack.c.b16 %v637, %v636
        %v666 = vpack.c.b16 %v639, %v638
        %v667 = vpack.c.b16 %v641, %v640
        %v668 = vpack.c.b16 %v643, %v642
        %v669 = vpack.c.b16 %v645, %v644
        %v670 = vpack.c.b16 %v647, %v646
        %v671 = vpack.c.b16 %v649, %v648
        %v672 = vpack.c.b16 %v651, %v650
        %v673 = vpack.c.b16 %v653, %v652
        %v674 = vpack.c.b16 %v655, %v654
        %v675 = vpack.c.b16 %v657, %v656
        %v676 = vpack.c.b16 %v659, %v658
        %v677 = vpack.c.b16 %v661, %v660
        %vm678 = vcmask 64512
        %v680 = vsel %vm678, %v662, 0
        %v683 = vsel %vm678, %v663, 0
        %v686 = vsel %vm678, %v664, 0
        %v689 = vsel %vm678, %v665, 0
        %v692 = vsel %vm678, %v666, 0
        %v695 = vsel %vm678, %v667, 0
        %v698 = vsel %vm678, %v668, 0
        %v701 = vsel %vm678, %v669, 0
        %v704 = vsel %vm678, %v670, 0
        %v707 = vsel %vm678, %v671, 0
        %v710 = vsel %vm678, %v672, 0
        %v713 = vsel %vm678, %v673, 0
        %v716 = vsel %vm678, %v674, 0
        %v719 = vsel %vm678, %v675, 0
        %v722 = vsel %vm678, %v676, 0
        %v725 = vsel %vm678, %v677, 0
        %vm727 = vcmask 1043456
        %v729 = vsel %vm727, %v629, 0
        %731 = vmatpush.bf16.msra.mxu0 0
        %732 = vmatpush.bf16.msra.mxu0 0
        %733 = vmatpush.bf16.msra.mxu0 0
        %734 = vmatpush.bf16.msra.mxu0 0
        %735 = vmatpush.bf16.msra.mxu0 0
        %736 = vmatpush.bf16.msra.mxu0 0
        %737 = vmatpush.bf16.msra.mxu0 0
        %738 = vmatpush.bf16.msra.mxu0 %v729
        %739 = vmatmul.bf16.gmra.mxu0 %v680
        %v740 = vpop.f32.mrf.mxu0
        %v741 = vadd.f32 0.0, %v740
        %v742 = vpop.f32.mrf.mxu0
        %v743 = vadd.f32 0.0, %v742
        %744 = vmatmul.bf16.gmra.mxu0 %v683
        %v745 = vpop.f32.mrf.mxu0
        %v746 = vadd.f32 0.0, %v745
        %v747 = vpop.f32.mrf.mxu0
        %v748 = vadd.f32 0.0, %v747
        %749 = vmatmul.bf16.gmra.mxu0 %v686
        %v750 = vpop.f32.mrf.mxu0
        %v751 = vadd.f32 0.0, %v750
        %v752 = vpop.f32.mrf.mxu0
        %v753 = vadd.f32 0.0, %v752
        %754 = vmatmul.bf16.gmra.mxu0 %v689
        %v755 = vpop.f32.mrf.mxu0
        %v756 = vadd.f32 0.0, %v755
        %v757 = vpop.f32.mrf.mxu0
        %v758 = vadd.f32 0.0, %v757
        %759 = vmatmul.bf16.gmra.mxu0 %v692
        %v760 = vpop.f32.mrf.mxu0
        %v761 = vadd.f32 0.0, %v760
        %v762 = vpop.f32.mrf.mxu0
        %v763 = vadd.f32 0.0, %v762
        %764 = vmatmul.bf16.gmra.mxu0 %v695
        %v765 = vpop.f32.mrf.mxu0
        %v766 = vadd.f32 0.0, %v765
        %v767 = vpop.f32.mrf.mxu0
        %v768 = vadd.f32 0.0, %v767
        %769 = vmatmul.bf16.gmra.mxu0 %v698
        %v770 = vpop.f32.mrf.mxu0
        %v771 = vadd.f32 0.0, %v770
        %v772 = vpop.f32.mrf.mxu0
        %v773 = vadd.f32 0.0, %v772
        %774 = vmatmul.bf16.gmra.mxu0 %v701
        %v775 = vpop.f32.mrf.mxu0
        %v776 = vadd.f32 0.0, %v775
        %v777 = vpop.f32.mrf.mxu0
        %v778 = vadd.f32 0.0, %v777
        %779 = vmatmul.bf16.gmra.mxu0 %v704
        %v780 = vpop.f32.mrf.mxu0
        %v781 = vadd.f32 0.0, %v780
        %v782 = vpop.f32.mrf.mxu0
        %v783 = vadd.f32 0.0, %v782
        %784 = vmatmul.bf16.gmra.mxu0 %v707
        %v785 = vpop.f32.mrf.mxu0
        %v786 = vadd.f32 0.0, %v785
        %v787 = vpop.f32.mrf.mxu0
        %v788 = vadd.f32 0.0, %v787
        %789 = vmatmul.bf16.gmra.mxu0 %v710
        %v790 = vpop.f32.mrf.mxu0
        %v791 = vadd.f32 0.0, %v790
        %v792 = vpop.f32.mrf.mxu0
        %v793 = vadd.f32 0.0, %v792
        %794 = vmatmul.bf16.gmra.mxu0 %v713
        %v795 = vpop.f32.mrf.mxu0
        %v796 = vadd.f32 0.0, %v795
        %v797 = vpop.f32.mrf.mxu0
        %v798 = vadd.f32 0.0, %v797
        %799 = vmatmul.bf16.gmra.mxu0 %v716
        %v800 = vpop.f32.mrf.mxu0
        %v801 = vadd.f32 0.0, %v800
        %v802 = vpop.f32.mrf.mxu0
        %v803 = vadd.f32 0.0, %v802
        %804 = vmatmul.bf16.gmra.mxu0 %v719
        %v805 = vpop.f32.mrf.mxu0
        %v806 = vadd.f32 0.0, %v805
        %v807 = vpop.f32.mrf.mxu0
        %v808 = vadd.f32 0.0, %v807
        %809 = vmatmul.bf16.gmra.mxu0 %v722
        %v810 = vpop.f32.mrf.mxu0
        %v811 = vadd.f32 0.0, %v810
        %v812 = vpop.f32.mrf.mxu0
        %v813 = vadd.f32 0.0, %v812
        %814 = vmatmul.bf16.gmra.mxu0 %v725
        %v815 = vpop.f32.mrf.mxu0
        %v816 = vadd.f32 0.0, %v815
        %v817 = vpop.f32.mrf.mxu0
        %v818 = vadd.f32 0.0, %v817
        %819 = vdwg.mxu0
        %v852 = vunpack.c.l.b16 %v192
        %v853 = vunpack.c.l.b16 %v193
        %v854 = vunpack.c.l.b16 %v194
        %v855 = vunpack.c.l.b16 %v195
        %v856 = vunpack.c.l.b16 %v196
        %v857 = vunpack.c.l.b16 %v197
        %v858 = vunpack.c.l.b16 %v198
        %v859 = vunpack.c.l.b16 %v199
        %v860 = vunpack.c.l.b16 %v200
        %v861 = vunpack.c.l.b16 %v201
        %v862 = vunpack.c.l.b16 %v202
        %v863 = vunpack.c.l.b16 %v203
        %v864 = vunpack.c.l.b16 %v204
        %v865 = vunpack.c.l.b16 %v205
        %v866 = vunpack.c.l.b16 %v206
        %v867 = vunpack.c.l.b16 %v207
        %v868 = vunpack.c.l.b16 %v208
        %v869 = vunpack.c.l.b16 %v209
        %v870 = vunpack.c.l.b16 %v210
        %v871 = vunpack.c.l.b16 %v211
        %v872 = vunpack.c.l.b16 %v212
        %v873 = vunpack.c.l.b16 %v213
        %v874 = vunpack.c.l.b16 %v214
        %v875 = vunpack.c.l.b16 %v215
        %v876 = vunpack.c.l.b16 %v216
        %v877 = vunpack.c.l.b16 %v217
        %v878 = vunpack.c.l.b16 %v218
        %v879 = vunpack.c.l.b16 %v219
        %v880 = vunpack.c.l.b16 %v220
        %v881 = vunpack.c.l.b16 %v221
        %v882 = vunpack.c.l.b16 %v222
        %v883 = vunpack.c.l.b16 %v223
        %v884 = vpack.c.b16 %v853, %v852
        %v885 = vpack.c.b16 %v855, %v854
        %v886 = vpack.c.b16 %v857, %v856
        %v887 = vpack.c.b16 %v859, %v858
        %v888 = vpack.c.b16 %v861, %v860
        %v889 = vpack.c.b16 %v863, %v862
        %v890 = vpack.c.b16 %v865, %v864
        %v891 = vpack.c.b16 %v867, %v866
        %v892 = vpack.c.b16 %v869, %v868
        %v893 = vpack.c.b16 %v871, %v870
        %v894 = vpack.c.b16 %v873, %v872
        %v895 = vpack.c.b16 %v875, %v874
        %v896 = vpack.c.b16 %v877, %v876
        %v897 = vpack.c.b16 %v879, %v878
        %v898 = vpack.c.b16 %v881, %v880
        %v899 = vpack.c.b16 %v883, %v882
        %v901 = vsel %vm678, %v884, 0
        %v904 = vsel %vm678, %v885, 0
        %v907 = vsel %vm678, %v886, 0
        %v910 = vsel %vm678, %v887, 0
        %v913 = vsel %vm678, %v888, 0
        %v916 = vsel %vm678, %v889, 0
        %v919 = vsel %vm678, %v890, 0
        %v922 = vsel %vm678, %v891, 0
        %v925 = vsel %vm678, %v892, 0
        %v928 = vsel %vm678, %v893, 0
        %v931 = vsel %vm678, %v894, 0
        %v934 = vsel %vm678, %v895, 0
        %v937 = vsel %vm678, %v896, 0
        %v940 = vsel %vm678, %v897, 0
        %v943 = vsel %vm678, %v898, 0
        %v946 = vsel %vm678, %v899, 0
        %v949 = vsel %vm727, %v224, 0
        %951 = vmatpush.bf16.msra.mxu0 0
        %952 = vmatpush.bf16.msra.mxu0 0
        %953 = vmatpush.bf16.msra.mxu0 0
        %954 = vmatpush.bf16.msra.mxu0 0
        %955 = vmatpush.bf16.msra.mxu0 0
        %956 = vmatpush.bf16.msra.mxu0 0
        %957 = vmatpush.bf16.msra.mxu0 0
        %958 = vmatpush.bf16.msra.mxu0 %v949
        %959 = vmatmul.bf16.gmra.mxu0 %v901
        %v960 = vpop.f32.mrf.mxu0
        %v961 = vadd.f32 %v741, %v960
        %v962 = vpop.f32.mrf.mxu0
        %v963 = vadd.f32 %v743, %v962
        %964 = vmatmul.bf16.gmra.mxu0 %v904
        %v965 = vpop.f32.mrf.mxu0
        %v966 = vadd.f32 %v746, %v965
        %v967 = vpop.f32.mrf.mxu0
        %v968 = vadd.f32 %v748, %v967
        %969 = vmatmul.bf16.gmra.mxu0 %v907
        %v970 = vpop.f32.mrf.mxu0
        %v971 = vadd.f32 %v751, %v970
        %v972 = vpop.f32.mrf.mxu0
        %v973 = vadd.f32 %v753, %v972
        %974 = vmatmul.bf16.gmra.mxu0 %v910
        %v975 = vpop.f32.mrf.mxu0
        %v976 = vadd.f32 %v756, %v975
        %v977 = vpop.f32.mrf.mxu0
        %v978 = vadd.f32 %v758, %v977
        %979 = vmatmul.bf16.gmra.mxu0 %v913
        %v980 = vpop.f32.mrf.mxu0
        %v981 = vadd.f32 %v761, %v980
        %v982 = vpop.f32.mrf.mxu0
        %v983 = vadd.f32 %v763, %v982
        %984 = vmatmul.bf16.gmra.mxu0 %v916
        %v985 = vpop.f32.mrf.mxu0
        %v986 = vadd.f32 %v766, %v985
        %v987 = vpop.f32.mrf.mxu0
        %v988 = vadd.f32 %v768, %v987
        %989 = vmatmul.bf16.gmra.mxu0 %v919
        %v990 = vpop.f32.mrf.mxu0
        %v991 = vadd.f32 %v771, %v990
        %v992 = vpop.f32.mrf.mxu0
        %v993 = vadd.f32 %v773, %v992
        %994 = vmatmul.bf16.gmra.mxu0 %v922
        %v995 = vpop.f32.mrf.mxu0
        %v996 = vadd.f32 %v776, %v995
        %v997 = vpop.f32.mrf.mxu0
        %v998 = vadd.f32 %v778, %v997
        %999 = vmatmul.bf16.gmra.mxu0 %v925
        %v1000 = vpop.f32.mrf.mxu0
        %v1001 = vadd.f32 %v781, %v1000
        %v1002 = vpop.f32.mrf.mxu0
        %v1003 = vadd.f32 %v783, %v1002
        %1004 = vmatmul.bf16.gmra.mxu0 %v928
        %v1005 = vpop.f32.mrf.mxu0
        %v1006 = vadd.f32 %v786, %v1005
        %v1007 = vpop.f32.mrf.mxu0
        %v1008 = vadd.f32 %v788, %v1007
        %1009 = vmatmul.bf16.gmra.mxu0 %v931
        %v1010 = vpop.f32.mrf.mxu0
        %v1011 = vadd.f32 %v791, %v1010
        %v1012 = vpop.f32.mrf.mxu0
        %v1013 = vadd.f32 %v793, %v1012
        %1014 = vmatmul.bf16.gmra.mxu0 %v934
        %v1015 = vpop.f32.mrf.mxu0
        %v1016 = vadd.f32 %v796, %v1015
        %v1017 = vpop.f32.mrf.mxu0
        %v1018 = vadd.f32 %v798, %v1017
        %1019 = vmatmul.bf16.gmra.mxu0 %v937
        %v1020 = vpop.f32.mrf.mxu0
        %v1021 = vadd.f32 %v801, %v1020
        %v1022 = vpop.f32.mrf.mxu0
        %v1023 = vadd.f32 %v803, %v1022
        %1024 = vmatmul.bf16.gmra.mxu0 %v940
        %v1025 = vpop.f32.mrf.mxu0
        %v1026 = vadd.f32 %v806, %v1025
        %v1027 = vpop.f32.mrf.mxu0
        %v1028 = vadd.f32 %v808, %v1027
        %1029 = vmatmul.bf16.gmra.mxu0 %v943
        %v1030 = vpop.f32.mrf.mxu0
        %v1031 = vadd.f32 %v811, %v1030
        %v1032 = vpop.f32.mrf.mxu0
        %v1033 = vadd.f32 %v813, %v1032
        %1034 = vmatmul.bf16.gmra.mxu0 %v946
        %v1035 = vpop.f32.mrf.mxu0
        %v1036 = vadd.f32 %v816, %v1035
        %v1037 = vpop.f32.mrf.mxu0
        %v1038 = vadd.f32 %v818, %v1037
        %1039 = vdwg.mxu0
        %v1040 = vld [vmem:[%s188] sm:$0xe]
        %v1041 = vld [vmem:[%s188 + $0xc] sm:$0xe]
        %v1042 = vld [vmem:[%s188 + $0x18] sm:$0xe]
        %v1043 = vld [vmem:[%s188 + $0x24] sm:$0xe]
        %v1044 = vld [vmem:[%s188 + $0x30] sm:$0xe]
        %v1045 = vld [vmem:[%s188 + $0x3c] sm:$0xe]
        %v1046 = vld [vmem:[%s188 + $0x48] sm:$0xe]
        %v1047 = vld [vmem:[%s188 + $0x54] sm:$0xe]
        %v1048 = vld [vmem:[%s188 + $0x60] sm:$0xe]
        %v1049 = vld [vmem:[%s188 + $0x6c] sm:$0xe]
        %v1050 = vld [vmem:[%s188 + $0x78] sm:$0xe]
        %v1051 = vld [vmem:[%s188 + $0x84] sm:$0xe]
        %v1052 = vld [vmem:[%s188 + $0x90] sm:$0xe]
        %v1053 = vld [vmem:[%s188 + $0x9c] sm:$0xe]
        %v1054 = vld [vmem:[%s188 + $0xa8] sm:$0xe]
        %v1055 = vld [vmem:[%s188 + $0xb4] sm:$0xe]
        %vm1088 = vcmask 1042432
        %vm1089 = vcmask 1046532
        %vm1090 = vmor %vm1088, %vm1089
        %v1091 = vrot.slane %v1040, 5
        %v1092 = vrot.slane %v1091, 4
        %v1093 = vrot.slane %v193, 5
        %v1094 = vsel %vm1090, %v1092, %v1093
        %v1095 = vrot.slane %v1093, 4
        %v1096 = vrot.slane %v225, 5
        %v1097 = vsel %vm1090, %v1095, %v1096
        %v1098 = vrot.slane %v1041, 5
        %v1099 = vrot.slane %v1098, 4
        %v1100 = vrot.slane %v195, 5
        %v1101 = vsel %vm1090, %v1099, %v1100
        %v1102 = vrot.slane %v1100, 4
        %v1103 = vrot.slane %v226, 5
        %v1104 = vsel %vm1090, %v1102, %v1103
        %v1105 = vrot.slane %v1042, 5
        %v1106 = vrot.slane %v1105, 4
        %v1107 = vrot.slane %v197, 5
        %v1108 = vsel %vm1090, %v1106, %v1107
        %v1109 = vrot.slane %v1107, 4
        %v1110 = vrot.slane %v227, 5
        %v1111 = vsel %vm1090, %v1109, %v1110
        %v1112 = vrot.slane %v1043, 5
        %v1113 = vrot.slane %v1112, 4
        %v1114 = vrot.slane %v199, 5
        %v1115 = vsel %vm1090, %v1113, %v1114
        %v1116 = vrot.slane %v1114, 4
        %v1117 = vrot.slane %v228, 5
        %v1118 = vsel %vm1090, %v1116, %v1117
        %v1119 = vrot.slane %v1044, 5
        %v1120 = vrot.slane %v1119, 4
        %v1121 = vrot.slane %v201, 5
        %v1122 = vsel %vm1090, %v1120, %v1121
        %v1123 = vrot.slane %v1121, 4
        %v1124 = vrot.slane %v229, 5
        %v1125 = vsel %vm1090, %v1123, %v1124
        %v1126 = vrot.slane %v1045, 5
        %v1127 = vrot.slane %v1126, 4
        %v1128 = vrot.slane %v203, 5
        %v1129 = vsel %vm1090, %v1127, %v1128
        %v1130 = vrot.slane %v1128, 4
        %v1131 = vrot.slane %v230, 5
        %v1132 = vsel %vm1090, %v1130, %v1131
        %v1133 = vrot.slane %v1046, 5
        %v1134 = vrot.slane %v1133, 4
        %v1135 = vrot.slane %v205, 5
        %v1136 = vsel %vm1090, %v1134, %v1135
        %v1137 = vrot.slane %v1135, 4
        %v1138 = vrot.slane %v231, 5
        %v1139 = vsel %vm1090, %v1137, %v1138
        %v1140 = vrot.slane %v1047, 5
        %v1141 = vrot.slane %v1140, 4
        %v1142 = vrot.slane %v207, 5
        %v1143 = vsel %vm1090, %v1141, %v1142
        %v1144 = vrot.slane %v1142, 4
        %v1145 = vrot.slane %v232, 5
        %v1146 = vsel %vm1090, %v1144, %v1145
        %v1147 = vrot.slane %v1048, 5
        %v1148 = vrot.slane %v1147, 4
        %v1149 = vrot.slane %v209, 5
        %v1150 = vsel %vm1090, %v1148, %v1149
        %v1151 = vrot.slane %v1149, 4
        %v1152 = vrot.slane %v233, 5
        %v1153 = vsel %vm1090, %v1151, %v1152
        %v1154 = vrot.slane %v1049, 5
        %v1155 = vrot.slane %v1154, 4
        %v1156 = vrot.slane %v211, 5
        %v1157 = vsel %vm1090, %v1155, %v1156
        %v1158 = vrot.slane %v1156, 4
        %v1159 = vrot.slane %v234, 5
        %v1160 = vsel %vm1090, %v1158, %v1159
        %v1161 = vrot.slane %v1050, 5
        %v1162 = vrot.slane %v1161, 4
        %v1163 = vrot.slane %v213, 5
        %v1164 = vsel %vm1090, %v1162, %v1163
        %v1165 = vrot.slane %v1163, 4
        %v1166 = vrot.slane %v235, 5
        %v1167 = vsel %vm1090, %v1165, %v1166
        %v1168 = vrot.slane %v1051, 5
        %v1169 = vrot.slane %v1168, 4
        %v1170 = vrot.slane %v215, 5
        %v1171 = vsel %vm1090, %v1169, %v1170
        %v1172 = vrot.slane %v1170, 4
        %v1173 = vrot.slane %v236, 5
        %v1174 = vsel %vm1090, %v1172, %v1173
        %v1175 = vrot.slane %v1052, 5
        %v1176 = vrot.slane %v1175, 4
        %v1177 = vrot.slane %v217, 5
        %v1178 = vsel %vm1090, %v1176, %v1177
        %v1179 = vrot.slane %v1177, 4
        %v1180 = vrot.slane %v237, 5
        %v1181 = vsel %vm1090, %v1179, %v1180
        %v1182 = vrot.slane %v1053, 5
        %v1183 = vrot.slane %v1182, 4
        %v1184 = vrot.slane %v219, 5
        %v1185 = vsel %vm1090, %v1183, %v1184
        %v1186 = vrot.slane %v1184, 4
        %v1187 = vrot.slane %v238, 5
        %v1188 = vsel %vm1090, %v1186, %v1187
        %v1189 = vrot.slane %v1054, 5
        %v1190 = vrot.slane %v1189, 4
        %v1191 = vrot.slane %v221, 5
        %v1192 = vsel %vm1090, %v1190, %v1191
        %v1193 = vrot.slane %v1191, 4
        %v1194 = vrot.slane %v239, 5
        %v1195 = vsel %vm1090, %v1193, %v1194
        %v1196 = vrot.slane %v1055, 5
        %v1197 = vrot.slane %v1196, 4
        %v1198 = vrot.slane %v223, 5
        %v1199 = vsel %vm1090, %v1197, %v1198
        %v1200 = vrot.slane %v1198, 4
        %v1201 = vrot.slane %v240, 5
        %v1202 = vsel %vm1090, %v1200, %v1201
        %s1203 = scalar_lea.vmem %s1, 8
        %v1204 = vld [vmem:[%s1203] sm:$0xf]
        %v1205 = vunpack.c.l.b16 %v1094
        %v1206 = vunpack.c.l.b16 %v1097
        %v1207 = vunpack.c.l.b16 %v1101
        %v1208 = vunpack.c.l.b16 %v1104
        %v1209 = vunpack.c.l.b16 %v1108
        %v1210 = vunpack.c.l.b16 %v1111
        %v1211 = vunpack.c.l.b16 %v1115
        %v1212 = vunpack.c.l.b16 %v1118
        %v1213 = vunpack.c.l.b16 %v1122
        %v1214 = vunpack.c.l.b16 %v1125
        %v1215 = vunpack.c.l.b16 %v1129
        %v1216 = vunpack.c.l.b16 %v1132
        %v1217 = vunpack.c.l.b16 %v1136
        %v1218 = vunpack.c.l.b16 %v1139
        %v1219 = vunpack.c.l.b16 %v1143
        %v1220 = vunpack.c.l.b16 %v1146
        %v1221 = vunpack.c.l.b16 %v1150
        %v1222 = vunpack.c.l.b16 %v1153
        %v1223 = vunpack.c.l.b16 %v1157
        %v1224 = vunpack.c.l.b16 %v1160
        %v1225 = vunpack.c.l.b16 %v1164
        %v1226 = vunpack.c.l.b16 %v1167
        %v1227 = vunpack.c.l.b16 %v1171
        %v1228 = vunpack.c.l.b16 %v1174
        %v1229 = vunpack.c.l.b16 %v1178
        %v1230 = vunpack.c.l.b16 %v1181
        %v1231 = vunpack.c.l.b16 %v1185
        %v1232 = vunpack.c.l.b16 %v1188
        %v1233 = vunpack.c.l.b16 %v1192
        %v1234 = vunpack.c.l.b16 %v1195
        %v1235 = vunpack.c.l.b16 %v1199
        %v1236 = vunpack.c.l.b16 %v1202
        %v1237 = vpack.c.b16 %v1206, %v1205
        %v1238 = vpack.c.b16 %v1208, %v1207
        %v1239 = vpack.c.b16 %v1210, %v1209
        %v1240 = vpack.c.b16 %v1212, %v1211
        %v1241 = vpack.c.b16 %v1214, %v1213
        %v1242 = vpack.c.b16 %v1216, %v1215
        %v1243 = vpack.c.b16 %v1218, %v1217
        %v1244 = vpack.c.b16 %v1220, %v1219
        %v1245 = vpack.c.b16 %v1222, %v1221
        %v1246 = vpack.c.b16 %v1224, %v1223
        %v1247 = vpack.c.b16 %v1226, %v1225
        %v1248 = vpack.c.b16 %v1228, %v1227
        %v1249 = vpack.c.b16 %v1230, %v1229
        %v1250 = vpack.c.b16 %v1232, %v1231
        %v1251 = vpack.c.b16 %v1234, %v1233
        %v1252 = vpack.c.b16 %v1236, %v1235
        %v1254 = vsel %vm678, %v1237, 0
        %v1257 = vsel %vm678, %v1238, 0
        %v1260 = vsel %vm678, %v1239, 0
        %v1263 = vsel %vm678, %v1240, 0
        %v1266 = vsel %vm678, %v1241, 0
        %v1269 = vsel %vm678, %v1242, 0
        %v1272 = vsel %vm678, %v1243, 0
        %v1275 = vsel %vm678, %v1244, 0
        %v1278 = vsel %vm678, %v1245, 0
        %v1281 = vsel %vm678, %v1246, 0
        %v1284 = vsel %vm678, %v1247, 0
        %v1287 = vsel %vm678, %v1248, 0
        %v1290 = vsel %vm678, %v1249, 0
        %v1293 = vsel %vm678, %v1250, 0
        %v1296 = vsel %vm678, %v1251, 0
        %v1299 = vsel %vm678, %v1252, 0
        %v1302 = vsel %vm727, %v1204, 0
        %1304 = vmatpush.bf16.msra.mxu0 0
        %1305 = vmatpush.bf16.msra.mxu0 0
        %1306 = vmatpush.bf16.msra.mxu0 0
        %1307 = vmatpush.bf16.msra.mxu0 0
        %1308 = vmatpush.bf16.msra.mxu0 0
        %1309 = vmatpush.bf16.msra.mxu0 0
        %1310 = vmatpush.bf16.msra.mxu0 0
        %1311 = vmatpush.bf16.msra.mxu0 %v1302
        %1312 = vmatmul.bf16.gmra.mxu0 %v1254
        %v1313 = vpop.f32.mrf.mxu0
        %v1314 = vadd.f32 0.0, %v1313
        %v1315 = vpop.f32.mrf.mxu0
        %v1316 = vadd.f32 0.0, %v1315
        %1317 = vmatmul.bf16.gmra.mxu0 %v1257
        %v1318 = vpop.f32.mrf.mxu0
        %v1319 = vadd.f32 0.0, %v1318
        %v1320 = vpop.f32.mrf.mxu0
        %v1321 = vadd.f32 0.0, %v1320
        %1322 = vmatmul.bf16.gmra.mxu0 %v1260
        %v1323 = vpop.f32.mrf.mxu0
        %v1324 = vadd.f32 0.0, %v1323
        %v1325 = vpop.f32.mrf.mxu0
        %v1326 = vadd.f32 0.0, %v1325
        %1327 = vmatmul.bf16.gmra.mxu0 %v1263
        %v1328 = vpop.f32.mrf.mxu0
        %v1329 = vadd.f32 0.0, %v1328
        %v1330 = vpop.f32.mrf.mxu0
        %v1331 = vadd.f32 0.0, %v1330
        %1332 = vmatmul.bf16.gmra.mxu0 %v1266
        %v1333 = vpop.f32.mrf.mxu0
        %v1334 = vadd.f32 0.0, %v1333
        %v1335 = vpop.f32.mrf.mxu0
        %v1336 = vadd.f32 0.0, %v1335
        %1337 = vmatmul.bf16.gmra.mxu0 %v1269
        %v1338 = vpop.f32.mrf.mxu0
        %v1339 = vadd.f32 0.0, %v1338
        %v1340 = vpop.f32.mrf.mxu0
        %v1341 = vadd.f32 0.0, %v1340
        %1342 = vmatmul.bf16.gmra.mxu0 %v1272
        %v1343 = vpop.f32.mrf.mxu0
        %v1344 = vadd.f32 0.0, %v1343
        %v1345 = vpop.f32.mrf.mxu0
        %v1346 = vadd.f32 0.0, %v1345
        %1347 = vmatmul.bf16.gmra.mxu0 %v1275
        %v1348 = vpop.f32.mrf.mxu0
        %v1349 = vadd.f32 0.0, %v1348
        %v1350 = vpop.f32.mrf.mxu0
        %v1351 = vadd.f32 0.0, %v1350
        %1352 = vmatmul.bf16.gmra.mxu0 %v1278
        %v1353 = vpop.f32.mrf.mxu0
        %v1354 = vadd.f32 0.0, %v1353
        %v1355 = vpop.f32.mrf.mxu0
        %v1356 = vadd.f32 0.0, %v1355
        %1357 = vmatmul.bf16.gmra.mxu0 %v1281
        %v1358 = vpop.f32.mrf.mxu0
        %v1359 = vadd.f32 0.0, %v1358
        %v1360 = vpop.f32.mrf.mxu0
        %v1361 = vadd.f32 0.0, %v1360
        %1362 = vmatmul.bf16.gmra.mxu0 %v1284
        %v1363 = vpop.f32.mrf.mxu0
        %v1364 = vadd.f32 0.0, %v1363
        %v1365 = vpop.f32.mrf.mxu0
        %v1366 = vadd.f32 0.0, %v1365
        %1367 = vmatmul.bf16.gmra.mxu0 %v1287
        %v1368 = vpop.f32.mrf.mxu0
        %v1369 = vadd.f32 0.0, %v1368
        %v1370 = vpop.f32.mrf.mxu0
        %v1371 = vadd.f32 0.0, %v1370
        %1372 = vmatmul.bf16.gmra.mxu0 %v1290
        %v1373 = vpop.f32.mrf.mxu0
        %v1374 = vadd.f32 0.0, %v1373
        %v1375 = vpop.f32.mrf.mxu0
        %v1376 = vadd.f32 0.0, %v1375
        %1377 = vmatmul.bf16.gmra.mxu0 %v1293
        %v1378 = vpop.f32.mrf.mxu0
        %v1379 = vadd.f32 0.0, %v1378
        %v1380 = vpop.f32.mrf.mxu0
        %v1381 = vadd.f32 0.0, %v1380
        %1382 = vmatmul.bf16.gmra.mxu0 %v1296
        %v1383 = vpop.f32.mrf.mxu0
        %v1384 = vadd.f32 0.0, %v1383
        %v1385 = vpop.f32.mrf.mxu0
        %v1386 = vadd.f32 0.0, %v1385
        %1387 = vmatmul.bf16.gmra.mxu0 %v1299
        %v1388 = vpop.f32.mrf.mxu0
        %v1389 = vadd.f32 0.0, %v1388
        %v1390 = vpop.f32.mrf.mxu0
        %v1391 = vadd.f32 0.0, %v1390
        %1392 = vdwg.mxu0
        %v1393 = vadd.f32 %v961, %v1314
        %v1394 = vadd.f32 %v963, %v1316
        %v1395 = vadd.f32 %v966, %v1319
        %v1396 = vadd.f32 %v968, %v1321
        %v1397 = vadd.f32 %v971, %v1324
        %v1398 = vadd.f32 %v973, %v1326
        %v1399 = vadd.f32 %v976, %v1329
        %v1400 = vadd.f32 %v978, %v1331
        %v1401 = vadd.f32 %v981, %v1334
        %v1402 = vadd.f32 %v983, %v1336
        %v1403 = vadd.f32 %v986, %v1339
        %v1404 = vadd.f32 %v988, %v1341
        %v1405 = vadd.f32 %v991, %v1344
        %v1406 = vadd.f32 %v993, %v1346
        %v1407 = vadd.f32 %v996, %v1349
        %v1408 = vadd.f32 %v998, %v1351
        %v1409 = vadd.f32 %v1001, %v1354
        %v1410 = vadd.f32 %v1003, %v1356
        %v1411 = vadd.f32 %v1006, %v1359
        %v1412 = vadd.f32 %v1008, %v1361
        %v1413 = vadd.f32 %v1011, %v1364
        %v1414 = vadd.f32 %v1013, %v1366
        %v1415 = vadd.f32 %v1016, %v1369
        %v1416 = vadd.f32 %v1018, %v1371
        %v1417 = vadd.f32 %v1021, %v1374
        %v1418 = vadd.f32 %v1023, %v1376
        %v1419 = vadd.f32 %v1026, %v1379
        %v1420 = vadd.f32 %v1028, %v1381
        %v1421 = vadd.f32 %v1031, %v1384
        %v1422 = vadd.f32 %v1033, %v1386
        %v1423 = vadd.f32 %v1036, %v1389
        %v1424 = vadd.f32 %v1038, %v1391
        %s1425 = scalar_lea.vmem %s188, 12
        %v1426 = vld [vmem:[%s1425] sm:$0xf]
        %v1427 = vld [vmem:[%s1425 + $0x4] sm:$0xf]
        %v1428 = vld [vmem:[%s1425 + $0xc] sm:$0xf]
        %v1429 = vld [vmem:[%s1425 + $0x10] sm:$0xf]
        %v1430 = vld [vmem:[%s1425 + $0x18] sm:$0xf]
        %v1431 = vld [vmem:[%s1425 + $0x1c] sm:$0xf]
        %v1432 = vld [vmem:[%s1425 + $0x24] sm:$0xf]
        %v1433 = vld [vmem:[%s1425 + $0x28] sm:$0xf]
        %v1434 = vld [vmem:[%s1425 + $0x30] sm:$0xf]
        %v1435 = vld [vmem:[%s1425 + $0x34] sm:$0xf]
        %v1436 = vld [vmem:[%s1425 + $0x3c] sm:$0xf]
        %v1437 = vld [vmem:[%s1425 + $0x40] sm:$0xf]
        %v1438 = vld [vmem:[%s1425 + $0x48] sm:$0xf]
        %v1439 = vld [vmem:[%s1425 + $0x4c] sm:$0xf]
        %v1440 = vld [vmem:[%s1425 + $0x54] sm:$0xf]
        %v1441 = vld [vmem:[%s1425 + $0x58] sm:$0xf]
        %v1442 = vld [vmem:[%s1425 + $0x60] sm:$0xf]
        %v1443 = vld [vmem:[%s1425 + $0x64] sm:$0xf]
        %v1444 = vld [vmem:[%s1425 + $0x6c] sm:$0xf]
        %v1445 = vld [vmem:[%s1425 + $0x70] sm:$0xf]
        %v1446 = vld [vmem:[%s1425 + $0x78] sm:$0xf]
        %v1447 = vld [vmem:[%s1425 + $0x7c] sm:$0xf]
        %v1448 = vld [vmem:[%s1425 + $0x84] sm:$0xf]
        %v1449 = vld [vmem:[%s1425 + $0x88] sm:$0xf]
        %v1450 = vld [vmem:[%s1425 + $0x90] sm:$0xf]
        %v1451 = vld [vmem:[%s1425 + $0x94] sm:$0xf]
        %v1452 = vld [vmem:[%s1425 + $0x9c] sm:$0xf]
        %v1453 = vld [vmem:[%s1425 + $0xa0] sm:$0xf]
        %v1454 = vld [vmem:[%s1425 + $0xa8] sm:$0xf]
        %v1455 = vld [vmem:[%s1425 + $0xac] sm:$0xf]
        %v1456 = vld [vmem:[%s1425 + $0xb4] sm:$0xf]
        %v1457 = vld [vmem:[%s1425 + $0xb8] sm:$0xf]
        %s1458 = scalar_lea.vmem %s1, 12
        %v1459 = vld [vmem:[%s1458] sm:$0xf]
        %v1492 = vunpack.c.l.b16 %v1426
        %v1493 = vunpack.c.l.b16 %v1427
        %v1494 = vunpack.c.l.b16 %v1428
        %v1495 = vunpack.c.l.b16 %v1429
        %v1496 = vunpack.c.l.b16 %v1430
        %v1497 = vunpack.c.l.b16 %v1431
        %v1498 = vunpack.c.l.b16 %v1432
        %v1499 = vunpack.c.l.b16 %v1433
        %v1500 = vunpack.c.l.b16 %v1434
        %v1501 = vunpack.c.l.b16 %v1435
        %v1502 = vunpack.c.l.b16 %v1436
        %v1503 = vunpack.c.l.b16 %v1437
        %v1504 = vunpack.c.l.b16 %v1438
        %v1505 = vunpack.c.l.b16 %v1439
        %v1506 = vunpack.c.l.b16 %v1440
        %v1507 = vunpack.c.l.b16 %v1441
        %v1508 = vunpack.c.l.b16 %v1442
        %v1509 = vunpack.c.l.b16 %v1443
        %v1510 = vunpack.c.l.b16 %v1444
        %v1511 = vunpack.c.l.b16 %v1445
        %v1512 = vunpack.c.l.b16 %v1446
        %v1513 = vunpack.c.l.b16 %v1447
        %v1514 = vunpack.c.l.b16 %v1448
        %v1515 = vunpack.c.l.b16 %v1449
        %v1516 = vunpack.c.l.b16 %v1450
        %v1517 = vunpack.c.l.b16 %v1451
        %v1518 = vunpack.c.l.b16 %v1452
        %v1519 = vunpack.c.l.b16 %v1453
        %v1520 = vunpack.c.l.b16 %v1454
        %v1521 = vunpack.c.l.b16 %v1455
        %v1522 = vunpack.c.l.b16 %v1456
        %v1523 = vunpack.c.l.b16 %v1457
        %v1524 = vpack.c.b16 %v1493, %v1492
        %v1525 = vpack.c.b16 %v1495, %v1494
        %v1526 = vpack.c.b16 %v1497, %v1496
        %v1527 = vpack.c.b16 %v1499, %v1498
        %v1528 = vpack.c.b16 %v1501, %v1500
        %v1529 = vpack.c.b16 %v1503, %v1502
        %v1530 = vpack.c.b16 %v1505, %v1504
        %v1531 = vpack.c.b16 %v1507, %v1506
        %v1532 = vpack.c.b16 %v1509, %v1508
        %v1533 = vpack.c.b16 %v1511, %v1510
        %v1534 = vpack.c.b16 %v1513, %v1512
        %v1535 = vpack.c.b16 %v1515, %v1514
        %v1536 = vpack.c.b16 %v1517, %v1516
        %v1537 = vpack.c.b16 %v1519, %v1518
        %v1538 = vpack.c.b16 %v1521, %v1520
        %v1539 = vpack.c.b16 %v1523, %v1522
        %v1541 = vsel %vm678, %v1524, 0
        %v1544 = vsel %vm678, %v1525, 0
        %v1547 = vsel %vm678, %v1526, 0
        %v1550 = vsel %vm678, %v1527, 0
        %v1553 = vsel %vm678, %v1528, 0
        %v1556 = vsel %vm678, %v1529, 0
        %v1559 = vsel %vm678, %v1530, 0
        %v1562 = vsel %vm678, %v1531, 0
        %v1565 = vsel %vm678, %v1532, 0
        %v1568 = vsel %vm678, %v1533, 0
        %v1571 = vsel %vm678, %v1534, 0
        %v1574 = vsel %vm678, %v1535, 0
        %v1577 = vsel %vm678, %v1536, 0
        %v1580 = vsel %vm678, %v1537, 0
        %v1583 = vsel %vm678, %v1538, 0
        %v1586 = vsel %vm678, %v1539, 0
        %v1589 = vsel %vm727, %v1459, 0
        %1591 = vmatpush.bf16.msra.mxu0 0
        %1592 = vmatpush.bf16.msra.mxu0 0
        %1593 = vmatpush.bf16.msra.mxu0 0
        %1594 = vmatpush.bf16.msra.mxu0 0
        %1595 = vmatpush.bf16.msra.mxu0 0
        %1596 = vmatpush.bf16.msra.mxu0 0
        %1597 = vmatpush.bf16.msra.mxu0 0
        %1598 = vmatpush.bf16.msra.mxu0 %v1589
        %1599 = vmatmul.bf16.gmra.mxu0 %v1541
        %v1600 = vpop.f32.mrf.mxu0
        %v1601 = vadd.f32 0.0, %v1600
        %v1602 = vpop.f32.mrf.mxu0
        %v1603 = vadd.f32 0.0, %v1602
        %1604 = vmatmul.bf16.gmra.mxu0 %v1544
        %v1605 = vpop.f32.mrf.mxu0
        %v1606 = vadd.f32 0.0, %v1605
        %v1607 = vpop.f32.mrf.mxu0
        %v1608 = vadd.f32 0.0, %v1607
        %1609 = vmatmul.bf16.gmra.mxu0 %v1547
        %v1610 = vpop.f32.mrf.mxu0
        %v1611 = vadd.f32 0.0, %v1610
        %v1612 = vpop.f32.mrf.mxu0
        %v1613 = vadd.f32 0.0, %v1612
        %1614 = vmatmul.bf16.gmra.mxu0 %v1550
        %v1615 = vpop.f32.mrf.mxu0
        %v1616 = vadd.f32 0.0, %v1615
        %v1617 = vpop.f32.mrf.mxu0
        %v1618 = vadd.f32 0.0, %v1617
        %1619 = vmatmul.bf16.gmra.mxu0 %v1553
        %v1620 = vpop.f32.mrf.mxu0
        %v1621 = vadd.f32 0.0, %v1620
        %v1622 = vpop.f32.mrf.mxu0
        %v1623 = vadd.f32 0.0, %v1622
        %1624 = vmatmul.bf16.gmra.mxu0 %v1556
        %v1625 = vpop.f32.mrf.mxu0
        %v1626 = vadd.f32 0.0, %v1625
        %v1627 = vpop.f32.mrf.mxu0
        %v1628 = vadd.f32 0.0, %v1627
        %1629 = vmatmul.bf16.gmra.mxu0 %v1559
        %v1630 = vpop.f32.mrf.mxu0
        %v1631 = vadd.f32 0.0, %v1630
        %v1632 = vpop.f32.mrf.mxu0
        %v1633 = vadd.f32 0.0, %v1632
        %1634 = vmatmul.bf16.gmra.mxu0 %v1562
        %v1635 = vpop.f32.mrf.mxu0
        %v1636 = vadd.f32 0.0, %v1635
        %v1637 = vpop.f32.mrf.mxu0
        %v1638 = vadd.f32 0.0, %v1637
        %1639 = vmatmul.bf16.gmra.mxu0 %v1565
        %v1640 = vpop.f32.mrf.mxu0
        %v1641 = vadd.f32 0.0, %v1640
        %v1642 = vpop.f32.mrf.mxu0
        %v1643 = vadd.f32 0.0, %v1642
        %1644 = vmatmul.bf16.gmra.mxu0 %v1568
        %v1645 = vpop.f32.mrf.mxu0
        %v1646 = vadd.f32 0.0, %v1645
        %v1647 = vpop.f32.mrf.mxu0
        %v1648 = vadd.f32 0.0, %v1647
        %1649 = vmatmul.bf16.gmra.mxu0 %v1571
        %v1650 = vpop.f32.mrf.mxu0
        %v1651 = vadd.f32 0.0, %v1650
        %v1652 = vpop.f32.mrf.mxu0
        %v1653 = vadd.f32 0.0, %v1652
        %1654 = vmatmul.bf16.gmra.mxu0 %v1574
        %v1655 = vpop.f32.mrf.mxu0
        %v1656 = vadd.f32 0.0, %v1655
        %v1657 = vpop.f32.mrf.mxu0
        %v1658 = vadd.f32 0.0, %v1657
        %1659 = vmatmul.bf16.gmra.mxu0 %v1577
        %v1660 = vpop.f32.mrf.mxu0
        %v1661 = vadd.f32 0.0, %v1660
        %v1662 = vpop.f32.mrf.mxu0
        %v1663 = vadd.f32 0.0, %v1662
        %1664 = vmatmul.bf16.gmra.mxu0 %v1580
        %v1665 = vpop.f32.mrf.mxu0
        %v1666 = vadd.f32 0.0, %v1665
        %v1667 = vpop.f32.mrf.mxu0
        %v1668 = vadd.f32 0.0, %v1667
        %1669 = vmatmul.bf16.gmra.mxu0 %v1583
        %v1670 = vpop.f32.mrf.mxu0
        %v1671 = vadd.f32 0.0, %v1670
        %v1672 = vpop.f32.mrf.mxu0
        %v1673 = vadd.f32 0.0, %v1672
        %1674 = vmatmul.bf16.gmra.mxu0 %v1586
        %v1675 = vpop.f32.mrf.mxu0
        %v1676 = vadd.f32 0.0, %v1675
        %v1677 = vpop.f32.mrf.mxu0
        %v1678 = vadd.f32 0.0, %v1677
        %1679 = vdwg.mxu0
        %v1680 = vadd.f32 %v1393, %v1601
        %v1681 = vadd.f32 %v1394, %v1603
        %v1682 = vadd.f32 %v1395, %v1606
        %v1683 = vadd.f32 %v1396, %v1608
        %v1684 = vadd.f32 %v1397, %v1611
        %v1685 = vadd.f32 %v1398, %v1613
        %v1686 = vadd.f32 %v1399, %v1616
        %v1687 = vadd.f32 %v1400, %v1618
        %v1688 = vadd.f32 %v1401, %v1621
        %v1689 = vadd.f32 %v1402, %v1623
        %v1690 = vadd.f32 %v1403, %v1626
        %v1691 = vadd.f32 %v1404, %v1628
        %v1692 = vadd.f32 %v1405, %v1631
        %v1693 = vadd.f32 %v1406, %v1633
        %v1694 = vadd.f32 %v1407, %v1636
        %v1695 = vadd.f32 %v1408, %v1638
        %v1696 = vadd.f32 %v1409, %v1641
        %v1697 = vadd.f32 %v1410, %v1643
        %v1698 = vadd.f32 %v1411, %v1646
        %v1699 = vadd.f32 %v1412, %v1648
        %v1700 = vadd.f32 %v1413, %v1651
        %v1701 = vadd.f32 %v1414, %v1653
        %v1702 = vadd.f32 %v1415, %v1656
        %v1703 = vadd.f32 %v1416, %v1658
        %v1704 = vadd.f32 %v1417, %v1661
        %v1705 = vadd.f32 %v1418, %v1663
        %v1706 = vadd.f32 %v1419, %v1666
        %v1707 = vadd.f32 %v1420, %v1668
        %v1708 = vadd.f32 %v1421, %v1671
        %v1709 = vadd.f32 %v1422, %v1673
        %v1710 = vadd.f32 %v1423, %v1676
        %v1711 = vadd.f32 %v1424, %v1678
        %v1712 = vld [vmem:[%s1425] sm:$0xf]
        %v1713 = vld [vmem:[%s1425 + $0x4] sm:$0xf]
        %v1714 = vld [vmem:[%s1425 + $0x8] sm:$0x1]
        %v1715 = vld [vmem:[%s1425 + $0xc] sm:$0xf]
        %v1716 = vld [vmem:[%s1425 + $0x10] sm:$0xf]
        %v1717 = vld [vmem:[%s1425 + $0x14] sm:$0x1]
        %v1718 = vld [vmem:[%s1425 + $0x18] sm:$0xf]
        %v1719 = vld [vmem:[%s1425 + $0x1c] sm:$0xf]
        %v1720 = vld [vmem:[%s1425 + $0x20] sm:$0x1]
        %v1721 = vld [vmem:[%s1425 + $0x24] sm:$0xf]
        %v1722 = vld [vmem:[%s1425 + $0x28] sm:$0xf]
        %v1723 = vld [vmem:[%s1425 + $0x2c] sm:$0x1]
        %v1724 = vld [vmem:[%s1425 + $0x30] sm:$0xf]
        %v1725 = vld [vmem:[%s1425 + $0x34] sm:$0xf]
        %v1726 = vld [vmem:[%s1425 + $0x38] sm:$0x1]
        %v1727 = vld [vmem:[%s1425 + $0x3c] sm:$0xf]
        %v1728 = vld [vmem:[%s1425 + $0x40] sm:$0xf]
        %v1729 = vld [vmem:[%s1425 + $0x44] sm:$0x1]
        %v1730 = vld [vmem:[%s1425 + $0x48] sm:$0xf]
        %v1731 = vld [vmem:[%s1425 + $0x4c] sm:$0xf]
        %v1732 = vld [vmem:[%s1425 + $0x50] sm:$0x1]
        %v1733 = vld [vmem:[%s1425 + $0x54] sm:$0xf]
        %v1734 = vld [vmem:[%s1425 + $0x58] sm:$0xf]
        %v1735 = vld [vmem:[%s1425 + $0x5c] sm:$0x1]
        %v1736 = vld [vmem:[%s1425 + $0x60] sm:$0xf]
        %v1737 = vld [vmem:[%s1425 + $0x64] sm:$0xf]
        %v1738 = vld [vmem:[%s1425 + $0x68] sm:$0x1]
        %v1739 = vld [vmem:[%s1425 + $0x6c] sm:$0xf]
        %v1740 = vld [vmem:[%s1425 + $0x70] sm:$0xf]
        %v1741 = vld [vmem:[%s1425 + $0x74] sm:$0x1]
        %v1742 = vld [vmem:[%s1425 + $0x78] sm:$0xf]
        %v1743 = vld [vmem:[%s1425 + $0x7c] sm:$0xf]
        %v1744 = vld [vmem:[%s1425 + $0x80] sm:$0x1]
        %v1745 = vld [vmem:[%s1425 + $0x84] sm:$0xf]
        %v1746 = vld [vmem:[%s1425 + $0x88] sm:$0xf]
        %v1747 = vld [vmem:[%s1425 + $0x8c] sm:$0x1]
        %v1748 = vld [vmem:[%s1425 + $0x90] sm:$0xf]
        %v1749 = vld [vmem:[%s1425 + $0x94] sm:$0xf]
        %v1750 = vld [vmem:[%s1425 + $0x98] sm:$0x1]
        %v1751 = vld [vmem:[%s1425 + $0x9c] sm:$0xf]
        %v1752 = vld [vmem:[%s1425 + $0xa0] sm:$0xf]
        %v1753 = vld [vmem:[%s1425 + $0xa4] sm:$0x1]
        %v1754 = vld [vmem:[%s1425 + $0xa8] sm:$0xf]
        %v1755 = vld [vmem:[%s1425 + $0xac] sm:$0xf]
        %v1756 = vld [vmem:[%s1425 + $0xb0] sm:$0x1]
        %v1757 = vld [vmem:[%s1425 + $0xb4] sm:$0xf]
        %v1758 = vld [vmem:[%s1425 + $0xb8] sm:$0xf]
        %v1759 = vld [vmem:[%s1425 + $0xbc] sm:$0x1]
        %v1761 = vshrl.u32 %v1712, 16
        %v1763 = vrot.slane %v1761, 4
        %v1764 = vshll.u32 %v1712, 16
        %v1766 = vrot.slane %v1764, 5
        %v1767 = vor.u32 %v1763, %v1766
        %v1768 = vrot.slane %v1767, 4
        %v1770 = vshll.u32 %v1713, 16
        %v1772 = vrot.slane %v1770, 5
        %v1773 = vsel %vm243, %v1768, %v1772
        %v1774 = vshrl.u32 %v1713, 16
        %v1776 = vrot.slane %v1774, 4
        %v1777 = vor.u32 %v1776, %v1772
        %v1778 = vrot.slane %v1777, 4
        %v1780 = vshll.u32 %v1714, 16
        %v1782 = vrot.slane %v1780, 5
        %v1783 = vsel %vm243, %v1778, %v1782
        %v1785 = vshrl.u32 %v1715, 16
        %v1787 = vrot.slane %v1785, 4
        %v1788 = vshll.u32 %v1715, 16
        %v1790 = vrot.slane %v1788, 5
        %v1791 = vor.u32 %v1787, %v1790
        %v1792 = vrot.slane %v1791, 4
        %v1794 = vshll.u32 %v1716, 16
        %v1796 = vrot.slane %v1794, 5
        %v1797 = vsel %vm243, %v1792, %v1796
        %v1798 = vshrl.u32 %v1716, 16
        %v1800 = vrot.slane %v1798, 4
        %v1801 = vor.u32 %v1800, %v1796
        %v1802 = vrot.slane %v1801, 4
        %v1804 = vshll.u32 %v1717, 16
        %v1806 = vrot.slane %v1804, 5
        %v1807 = vsel %vm243, %v1802, %v1806
        %v1809 = vshrl.u32 %v1718, 16
        %v1811 = vrot.slane %v1809, 4
        %v1812 = vshll.u32 %v1718, 16
        %v1814 = vrot.slane %v1812, 5
        %v1815 = vor.u32 %v1811, %v1814
        %v1816 = vrot.slane %v1815, 4
        %v1818 = vshll.u32 %v1719, 16
        %v1820 = vrot.slane %v1818, 5
        %v1821 = vsel %vm243, %v1816, %v1820
        %v1822 = vshrl.u32 %v1719, 16
        %v1824 = vrot.slane %v1822, 4
        %v1825 = vor.u32 %v1824, %v1820
        %v1826 = vrot.slane %v1825, 4
        %v1828 = vshll.u32 %v1720, 16
        %v1830 = vrot.slane %v1828, 5
        %v1831 = vsel %vm243, %v1826, %v1830
        %v1833 = vshrl.u32 %v1721, 16
        %v1835 = vrot.slane %v1833, 4
        %v1836 = vshll.u32 %v1721, 16
        %v1838 = vrot.slane %v1836, 5
        %v1839 = vor.u32 %v1835, %v1838
        %v1840 = vrot.slane %v1839, 4
        %v1842 = vshll.u32 %v1722, 16
        %v1844 = vrot.slane %v1842, 5
        %v1845 = vsel %vm243, %v1840, %v1844
        %v1846 = vshrl.u32 %v1722, 16
        %v1848 = vrot.slane %v1846, 4
        %v1849 = vor.u32 %v1848, %v1844
        %v1850 = vrot.slane %v1849, 4
        %v1852 = vshll.u32 %v1723, 16
        %v1854 = vrot.slane %v1852, 5
        %v1855 = vsel %vm243, %v1850, %v1854
        %v1857 = vshrl.u32 %v1724, 16
        %v1859 = vrot.slane %v1857, 4
        %v1860 = vshll.u32 %v1724, 16
        %v1862 = vrot.slane %v1860, 5
        %v1863 = vor.u32 %v1859, %v1862
        %v1864 = vrot.slane %v1863, 4
        %v1866 = vshll.u32 %v1725, 16
        %v1868 = vrot.slane %v1866, 5
        %v1869 = vsel %vm243, %v1864, %v1868
        %v1870 = vshrl.u32 %v1725, 16
        %v1872 = vrot.slane %v1870, 4
        %v1873 = vor.u32 %v1872, %v1868
        %v1874 = vrot.slane %v1873, 4
        %v1876 = vshll.u32 %v1726, 16
        %v1878 = vrot.slane %v1876, 5
        %v1879 = vsel %vm243, %v1874, %v1878
        %v1881 = vshrl.u32 %v1727, 16
        %v1883 = vrot.slane %v1881, 4
        %v1884 = vshll.u32 %v1727, 16
        %v1886 = vrot.slane %v1884, 5
        %v1887 = vor.u32 %v1883, %v1886
        %v1888 = vrot.slane %v1887, 4
        %v1890 = vshll.u32 %v1728, 16
        %v1892 = vrot.slane %v1890, 5
        %v1893 = vsel %vm243, %v1888, %v1892
        %v1894 = vshrl.u32 %v1728, 16
        %v1896 = vrot.slane %v1894, 4
        %v1897 = vor.u32 %v1896, %v1892
        %v1898 = vrot.slane %v1897, 4
        %v1900 = vshll.u32 %v1729, 16
        %v1902 = vrot.slane %v1900, 5
        %v1903 = vsel %vm243, %v1898, %v1902
        %v1905 = vshrl.u32 %v1730, 16
        %v1907 = vrot.slane %v1905, 4
        %v1908 = vshll.u32 %v1730, 16
        %v1910 = vrot.slane %v1908, 5
        %v1911 = vor.u32 %v1907, %v1910
        %v1912 = vrot.slane %v1911, 4
        %v1914 = vshll.u32 %v1731, 16
        %v1916 = vrot.slane %v1914, 5
        %v1917 = vsel %vm243, %v1912, %v1916
        %v1918 = vshrl.u32 %v1731, 16
        %v1920 = vrot.slane %v1918, 4
        %v1921 = vor.u32 %v1920, %v1916
        %v1922 = vrot.slane %v1921, 4
        %v1924 = vshll.u32 %v1732, 16
        %v1926 = vrot.slane %v1924, 5
        %v1927 = vsel %vm243, %v1922, %v1926
        %v1929 = vshrl.u32 %v1733, 16
        %v1931 = vrot.slane %v1929, 4
        %v1932 = vshll.u32 %v1733, 16
        %v1934 = vrot.slane %v1932, 5
        %v1935 = vor.u32 %v1931, %v1934
        %v1936 = vrot.slane %v1935, 4
        %v1938 = vshll.u32 %v1734, 16
        %v1940 = vrot.slane %v1938, 5
        %v1941 = vsel %vm243, %v1936, %v1940
        %v1942 = vshrl.u32 %v1734, 16
        %v1944 = vrot.slane %v1942, 4
        %v1945 = vor.u32 %v1944, %v1940
        %v1946 = vrot.slane %v1945, 4
        %v1948 = vshll.u32 %v1735, 16
        %v1950 = vrot.slane %v1948, 5
        %v1951 = vsel %vm243, %v1946, %v1950
        %v1953 = vshrl.u32 %v1736, 16
        %v1955 = vrot.slane %v1953, 4
        %v1956 = vshll.u32 %v1736, 16
        %v1958 = vrot.slane %v1956, 5
        %v1959 = vor.u32 %v1955, %v1958
        %v1960 = vrot.slane %v1959, 4
        %v1962 = vshll.u32 %v1737, 16
        %v1964 = vrot.slane %v1962, 5
        %v1965 = vsel %vm243, %v1960, %v1964
        %v1966 = vshrl.u32 %v1737, 16
        %v1968 = vrot.slane %v1966, 4
        %v1969 = vor.u32 %v1968, %v1964
        %v1970 = vrot.slane %v1969, 4
        %v1972 = vshll.u32 %v1738, 16
        %v1974 = vrot.slane %v1972, 5
        %v1975 = vsel %vm243, %v1970, %v1974
        %v1977 = vshrl.u32 %v1739, 16
        %v1979 = vrot.slane %v1977, 4
        %v1980 = vshll.u32 %v1739, 16
        %v1982 = vrot.slane %v1980, 5
        %v1983 = vor.u32 %v1979, %v1982
        %v1984 = vrot.slane %v1983, 4
        %v1986 = vshll.u32 %v1740, 16
        %v1988 = vrot.slane %v1986, 5
        %v1989 = vsel %vm243, %v1984, %v1988
        %v1990 = vshrl.u32 %v1740, 16
        %v1992 = vrot.slane %v1990, 4
        %v1993 = vor.u32 %v1992, %v1988
        %v1994 = vrot.slane %v1993, 4
        %v1996 = vshll.u32 %v1741, 16
        %v1998 = vrot.slane %v1996, 5
        %v1999 = vsel %vm243, %v1994, %v1998
        %v2001 = vshrl.u32 %v1742, 16
        %v2003 = vrot.slane %v2001, 4
        %v2004 = vshll.u32 %v1742, 16
        %v2006 = vrot.slane %v2004, 5
        %v2007 = vor.u32 %v2003, %v2006
        %v2008 = vrot.slane %v2007, 4
        %v2010 = vshll.u32 %v1743, 16
        %v2012 = vrot.slane %v2010, 5
        %v2013 = vsel %vm243, %v2008, %v2012
        %v2014 = vshrl.u32 %v1743, 16
        %v2016 = vrot.slane %v2014, 4
        %v2017 = vor.u32 %v2016, %v2012
        %v2018 = vrot.slane %v2017, 4
        %v2020 = vshll.u32 %v1744, 16
        %v2022 = vrot.slane %v2020, 5
        %v2023 = vsel %vm243, %v2018, %v2022
        %v2025 = vshrl.u32 %v1745, 16
        %v2027 = vrot.slane %v2025, 4
        %v2028 = vshll.u32 %v1745, 16
        %v2030 = vrot.slane %v2028, 5
        %v2031 = vor.u32 %v2027, %v2030
        %v2032 = vrot.slane %v2031, 4
        %v2034 = vshll.u32 %v1746, 16
        %v2036 = vrot.slane %v2034, 5
        %v2037 = vsel %vm243, %v2032, %v2036
        %v2038 = vshrl.u32 %v1746, 16
        %v2040 = vrot.slane %v2038, 4
        %v2041 = vor.u32 %v2040, %v2036
        %v2042 = vrot.slane %v2041, 4
        %v2044 = vshll.u32 %v1747, 16
        %v2046 = vrot.slane %v2044, 5
        %v2047 = vsel %vm243, %v2042, %v2046
        %v2049 = vshrl.u32 %v1748, 16
        %v2051 = vrot.slane %v2049, 4
        %v2052 = vshll.u32 %v1748, 16
        %v2054 = vrot.slane %v2052, 5
        %v2055 = vor.u32 %v2051, %v2054
        %v2056 = vrot.slane %v2055, 4
        %v2058 = vshll.u32 %v1749, 16
        %v2060 = vrot.slane %v2058, 5
        %v2061 = vsel %vm243, %v2056, %v2060
        %v2062 = vshrl.u32 %v1749, 16
        %v2064 = vrot.slane %v2062, 4
        %v2065 = vor.u32 %v2064, %v2060
        %v2066 = vrot.slane %v2065, 4
        %v2068 = vshll.u32 %v1750, 16
        %v2070 = vrot.slane %v2068, 5
        %v2071 = vsel %vm243, %v2066, %v2070
        %v2073 = vshrl.u32 %v1751, 16
        %v2075 = vrot.slane %v2073, 4
        %v2076 = vshll.u32 %v1751, 16
        %v2078 = vrot.slane %v2076, 5
        %v2079 = vor.u32 %v2075, %v2078
        %v2080 = vrot.slane %v2079, 4
        %v2082 = vshll.u32 %v1752, 16
        %v2084 = vrot.slane %v2082, 5
        %v2085 = vsel %vm243, %v2080, %v2084
        %v2086 = vshrl.u32 %v1752, 16
        %v2088 = vrot.slane %v2086, 4
        %v2089 = vor.u32 %v2088, %v2084
        %v2090 = vrot.slane %v2089, 4
        %v2092 = vshll.u32 %v1753, 16
        %v2094 = vrot.slane %v2092, 5
        %v2095 = vsel %vm243, %v2090, %v2094
        %v2097 = vshrl.u32 %v1754, 16
        %v2099 = vrot.slane %v2097, 4
        %v2100 = vshll.u32 %v1754, 16
        %v2102 = vrot.slane %v2100, 5
        %v2103 = vor.u32 %v2099, %v2102
        %v2104 = vrot.slane %v2103, 4
        %v2106 = vshll.u32 %v1755, 16
        %v2108 = vrot.slane %v2106, 5
        %v2109 = vsel %vm243, %v2104, %v2108
        %v2110 = vshrl.u32 %v1755, 16
        %v2112 = vrot.slane %v2110, 4
        %v2113 = vor.u32 %v2112, %v2108
        %v2114 = vrot.slane %v2113, 4
        %v2116 = vshll.u32 %v1756, 16
        %v2118 = vrot.slane %v2116, 5
        %v2119 = vsel %vm243, %v2114, %v2118
        %v2121 = vshrl.u32 %v1757, 16
        %v2123 = vrot.slane %v2121, 4
        %v2124 = vshll.u32 %v1757, 16
        %v2126 = vrot.slane %v2124, 5
        %v2127 = vor.u32 %v2123, %v2126
        %v2128 = vrot.slane %v2127, 4
        %v2130 = vshll.u32 %v1758, 16
        %v2132 = vrot.slane %v2130, 5
        %v2133 = vsel %vm243, %v2128, %v2132
        %v2134 = vshrl.u32 %v1758, 16
        %v2136 = vrot.slane %v2134, 4
        %v2137 = vor.u32 %v2136, %v2132
        %v2138 = vrot.slane %v2137, 4
        %v2140 = vshll.u32 %v1759, 16
        %v2142 = vrot.slane %v2140, 5
        %v2143 = vsel %vm243, %v2138, %v2142
        %s2144 = scalar_lea.vmem %s1, 16
        %v2145 = vld [vmem:[%s2144] sm:$0xf]
        %v2146 = vunpack.c.l.b16 %v1773
        %v2147 = vunpack.c.l.b16 %v1783
        %v2148 = vunpack.c.l.b16 %v1797
        %v2149 = vunpack.c.l.b16 %v1807
        %v2150 = vunpack.c.l.b16 %v1821
        %v2151 = vunpack.c.l.b16 %v1831
        %v2152 = vunpack.c.l.b16 %v1845
        %v2153 = vunpack.c.l.b16 %v1855
        %v2154 = vunpack.c.l.b16 %v1869
        %v2155 = vunpack.c.l.b16 %v1879
        %v2156 = vunpack.c.l.b16 %v1893
        %v2157 = vunpack.c.l.b16 %v1903
        %v2158 = vunpack.c.l.b16 %v1917
        %v2159 = vunpack.c.l.b16 %v1927
        %v2160 = vunpack.c.l.b16 %v1941
        %v2161 = vunpack.c.l.b16 %v1951
        %v2162 = vunpack.c.l.b16 %v1965
        %v2163 = vunpack.c.l.b16 %v1975
        %v2164 = vunpack.c.l.b16 %v1989
        %v2165 = vunpack.c.l.b16 %v1999
        %v2166 = vunpack.c.l.b16 %v2013
        %v2167 = vunpack.c.l.b16 %v2023
        %v2168 = vunpack.c.l.b16 %v2037
        %v2169 = vunpack.c.l.b16 %v2047
        %v2170 = vunpack.c.l.b16 %v2061
        %v2171 = vunpack.c.l.b16 %v2071
        %v2172 = vunpack.c.l.b16 %v2085
        %v2173 = vunpack.c.l.b16 %v2095
        %v2174 = vunpack.c.l.b16 %v2109
        %v2175 = vunpack.c.l.b16 %v2119
        %v2176 = vunpack.c.l.b16 %v2133
        %v2177 = vunpack.c.l.b16 %v2143
        %v2178 = vpack.c.b16 %v2147, %v2146
        %v2179 = vpack.c.b16 %v2149, %v2148
        %v2180 = vpack.c.b16 %v2151, %v2150
        %v2181 = vpack.c.b16 %v2153, %v2152
        %v2182 = vpack.c.b16 %v2155, %v2154
        %v2183 = vpack.c.b16 %v2157, %v2156
        %v2184 = vpack.c.b16 %v2159, %v2158
        %v2185 = vpack.c.b16 %v2161, %v2160
        %v2186 = vpack.c.b16 %v2163, %v2162
        %v2187 = vpack.c.b16 %v2165, %v2164
        %v2188 = vpack.c.b16 %v2167, %v2166
        %v2189 = vpack.c.b16 %v2169, %v2168
        %v2190 = vpack.c.b16 %v2171, %v2170
        %v2191 = vpack.c.b16 %v2173, %v2172
        %v2192 = vpack.c.b16 %v2175, %v2174
        %v2193 = vpack.c.b16 %v2177, %v2176
        %v2195 = vsel %vm678, %v2178, 0
        %v2198 = vsel %vm678, %v2179, 0
        %v2201 = vsel %vm678, %v2180, 0
        %v2204 = vsel %vm678, %v2181, 0
        %v2207 = vsel %vm678, %v2182, 0
        %v2210 = vsel %vm678, %v2183, 0
        %v2213 = vsel %vm678, %v2184, 0
        %v2216 = vsel %vm678, %v2185, 0
        %v2219 = vsel %vm678, %v2186, 0
        %v2222 = vsel %vm678, %v2187, 0
        %v2225 = vsel %vm678, %v2188, 0
        %v2228 = vsel %vm678, %v2189, 0
        %v2231 = vsel %vm678, %v2190, 0
        %v2234 = vsel %vm678, %v2191, 0
        %v2237 = vsel %vm678, %v2192, 0
        %v2240 = vsel %vm678, %v2193, 0
        %v2243 = vsel %vm727, %v2145, 0
        %2245 = vmatpush.bf16.msra.mxu0 0
        %2246 = vmatpush.bf16.msra.mxu0 0
        %2247 = vmatpush.bf16.msra.mxu0 0
        %2248 = vmatpush.bf16.msra.mxu0 0
        %2249 = vmatpush.bf16.msra.mxu0 0
        %2250 = vmatpush.bf16.msra.mxu0 0
        %2251 = vmatpush.bf16.msra.mxu0 0
        %2252 = vmatpush.bf16.msra.mxu0 %v2243
        %2253 = vmatmul.bf16.gmra.mxu0 %v2195
        %v2254 = vpop.f32.mrf.mxu0
        %v2255 = vadd.f32 0.0, %v2254
        %v2256 = vpop.f32.mrf.mxu0
        %v2257 = vadd.f32 0.0, %v2256
        %2258 = vmatmul.bf16.gmra.mxu0 %v2198
        %v2259 = vpop.f32.mrf.mxu0
        %v2260 = vadd.f32 0.0, %v2259
        %v2261 = vpop.f32.mrf.mxu0
        %v2262 = vadd.f32 0.0, %v2261
        %2263 = vmatmul.bf16.gmra.mxu0 %v2201
        %v2264 = vpop.f32.mrf.mxu0
        %v2265 = vadd.f32 0.0, %v2264
        %v2266 = vpop.f32.mrf.mxu0
        %v2267 = vadd.f32 0.0, %v2266
        %2268 = vmatmul.bf16.gmra.mxu0 %v2204
        %v2269 = vpop.f32.mrf.mxu0
        %v2270 = vadd.f32 0.0, %v2269
        %v2271 = vpop.f32.mrf.mxu0
        %v2272 = vadd.f32 0.0, %v2271
        %2273 = vmatmul.bf16.gmra.mxu0 %v2207
        %v2274 = vpop.f32.mrf.mxu0
        %v2275 = vadd.f32 0.0, %v2274
        %v2276 = vpop.f32.mrf.mxu0
        %v2277 = vadd.f32 0.0, %v2276
        %2278 = vmatmul.bf16.gmra.mxu0 %v2210
        %v2279 = vpop.f32.mrf.mxu0
        %v2280 = vadd.f32 0.0, %v2279
        %v2281 = vpop.f32.mrf.mxu0
        %v2282 = vadd.f32 0.0, %v2281
        %2283 = vmatmul.bf16.gmra.mxu0 %v2213
        %v2284 = vpop.f32.mrf.mxu0
        %v2285 = vadd.f32 0.0, %v2284
        %v2286 = vpop.f32.mrf.mxu0
        %v2287 = vadd.f32 0.0, %v2286
        %2288 = vmatmul.bf16.gmra.mxu0 %v2216
        %v2289 = vpop.f32.mrf.mxu0
        %v2290 = vadd.f32 0.0, %v2289
        %v2291 = vpop.f32.mrf.mxu0
        %v2292 = vadd.f32 0.0, %v2291
        %2293 = vmatmul.bf16.gmra.mxu0 %v2219
        %v2294 = vpop.f32.mrf.mxu0
        %v2295 = vadd.f32 0.0, %v2294
        %v2296 = vpop.f32.mrf.mxu0
        %v2297 = vadd.f32 0.0, %v2296
        %2298 = vmatmul.bf16.gmra.mxu0 %v2222
        %v2299 = vpop.f32.mrf.mxu0
        %v2300 = vadd.f32 0.0, %v2299
        %v2301 = vpop.f32.mrf.mxu0
        %v2302 = vadd.f32 0.0, %v2301
        %2303 = vmatmul.bf16.gmra.mxu0 %v2225
        %v2304 = vpop.f32.mrf.mxu0
        %v2305 = vadd.f32 0.0, %v2304
        %v2306 = vpop.f32.mrf.mxu0
        %v2307 = vadd.f32 0.0, %v2306
        %2308 = vmatmul.bf16.gmra.mxu0 %v2228
        %v2309 = vpop.f32.mrf.mxu0
        %v2310 = vadd.f32 0.0, %v2309
        %v2311 = vpop.f32.mrf.mxu0
        %v2312 = vadd.f32 0.0, %v2311
        %2313 = vmatmul.bf16.gmra.mxu0 %v2231
        %v2314 = vpop.f32.mrf.mxu0
        %v2315 = vadd.f32 0.0, %v2314
        %v2316 = vpop.f32.mrf.mxu0
        %v2317 = vadd.f32 0.0, %v2316
        %2318 = vmatmul.bf16.gmra.mxu0 %v2234
        %v2319 = vpop.f32.mrf.mxu0
        %v2320 = vadd.f32 0.0, %v2319
        %v2321 = vpop.f32.mrf.mxu0
        %v2322 = vadd.f32 0.0, %v2321
        %2323 = vmatmul.bf16.gmra.mxu0 %v2237
        %v2324 = vpop.f32.mrf.mxu0
        %v2325 = vadd.f32 0.0, %v2324
        %v2326 = vpop.f32.mrf.mxu0
        %v2327 = vadd.f32 0.0, %v2326
        %2328 = vmatmul.bf16.gmra.mxu0 %v2240
        %v2329 = vpop.f32.mrf.mxu0
        %v2330 = vadd.f32 0.0, %v2329
        %v2331 = vpop.f32.mrf.mxu0
        %v2332 = vadd.f32 0.0, %v2331
        %2333 = vdwg.mxu0
        %v2334 = vadd.f32 %v1680, %v2255
        %v2335 = vadd.f32 %v1681, %v2257
        %v2336 = vadd.f32 %v1682, %v2260
        %v2337 = vadd.f32 %v1683, %v2262
        %v2338 = vadd.f32 %v1684, %v2265
        %v2339 = vadd.f32 %v1685, %v2267
        %v2340 = vadd.f32 %v1686, %v2270
        %v2341 = vadd.f32 %v1687, %v2272
        %v2342 = vadd.f32 %v1688, %v2275
        %v2343 = vadd.f32 %v1689, %v2277
        %v2344 = vadd.f32 %v1690, %v2280
        %v2345 = vadd.f32 %v1691, %v2282
        %v2346 = vadd.f32 %v1692, %v2285
        %v2347 = vadd.f32 %v1693, %v2287
        %v2348 = vadd.f32 %v1694, %v2290
        %v2349 = vadd.f32 %v1695, %v2292
        %v2350 = vadd.f32 %v1696, %v2295
        %v2351 = vadd.f32 %v1697, %v2297
        %v2352 = vadd.f32 %v1698, %v2300
        %v2353 = vadd.f32 %v1699, %v2302
        %v2354 = vadd.f32 %v1700, %v2305
        %v2355 = vadd.f32 %v1701, %v2307
        %v2356 = vadd.f32 %v1702, %v2310
        %v2357 = vadd.f32 %v1703, %v2312
        %v2358 = vadd.f32 %v1704, %v2315
        %v2359 = vadd.f32 %v1705, %v2317
        %v2360 = vadd.f32 %v1706, %v2320
        %v2361 = vadd.f32 %v1707, %v2322
        %v2362 = vadd.f32 %v1708, %v2325
        %v2363 = vadd.f32 %v1709, %v2327
        %v2364 = vadd.f32 %v1710, %v2330
        %v2365 = vadd.f32 %v1711, %v2332
        %v2366 = vld [vmem:[%s1425] sm:$0xe]
        %v2367 = vld [vmem:[%s1425 + $0xc] sm:$0xe]
        %v2368 = vld [vmem:[%s1425 + $0x18] sm:$0xe]
        %v2369 = vld [vmem:[%s1425 + $0x24] sm:$0xe]
        %v2370 = vld [vmem:[%s1425 + $0x30] sm:$0xe]
        %v2371 = vld [vmem:[%s1425 + $0x3c] sm:$0xe]
        %v2372 = vld [vmem:[%s1425 + $0x48] sm:$0xe]
        %v2373 = vld [vmem:[%s1425 + $0x54] sm:$0xe]
        %v2374 = vld [vmem:[%s1425 + $0x60] sm:$0xe]
        %v2375 = vld [vmem:[%s1425 + $0x6c] sm:$0xe]
        %v2376 = vld [vmem:[%s1425 + $0x78] sm:$0xe]
        %v2377 = vld [vmem:[%s1425 + $0x84] sm:$0xe]
        %v2378 = vld [vmem:[%s1425 + $0x90] sm:$0xe]
        %v2379 = vld [vmem:[%s1425 + $0x9c] sm:$0xe]
        %v2380 = vld [vmem:[%s1425 + $0xa8] sm:$0xe]
        %v2381 = vld [vmem:[%s1425 + $0xb4] sm:$0xe]
        %v2430 = vrot.slane %v2366, 5
        %v2431 = vrot.slane %v2430, 4
        %v2432 = vrot.slane %v1713, 5
        %v2433 = vsel %vm1090, %v2431, %v2432
        %v2434 = vrot.slane %v2432, 4
        %v2435 = vrot.slane %v1714, 5
        %v2436 = vsel %vm1090, %v2434, %v2435
        %v2437 = vrot.slane %v2367, 5
        %v2438 = vrot.slane %v2437, 4
        %v2439 = vrot.slane %v1716, 5
        %v2440 = vsel %vm1090, %v2438, %v2439
        %v2441 = vrot.slane %v2439, 4
        %v2442 = vrot.slane %v1717, 5
        %v2443 = vsel %vm1090, %v2441, %v2442
        %v2444 = vrot.slane %v2368, 5
        %v2445 = vrot.slane %v2444, 4
        %v2446 = vrot.slane %v1719, 5
        %v2447 = vsel %vm1090, %v2445, %v2446
        %v2448 = vrot.slane %v2446, 4
        %v2449 = vrot.slane %v1720, 5
        %v2450 = vsel %vm1090, %v2448, %v2449
        %v2451 = vrot.slane %v2369, 5
        %v2452 = vrot.slane %v2451, 4
        %v2453 = vrot.slane %v1722, 5
        %v2454 = vsel %vm1090, %v2452, %v2453
        %v2455 = vrot.slane %v2453, 4
        %v2456 = vrot.slane %v1723, 5
        %v2457 = vsel %vm1090, %v2455, %v2456
        %v2458 = vrot.slane %v2370, 5
        %v2459 = vrot.slane %v2458, 4
        %v2460 = vrot.slane %v1725, 5
        %v2461 = vsel %vm1090, %v2459, %v2460
        %v2462 = vrot.slane %v2460, 4
        %v2463 = vrot.slane %v1726, 5
        %v2464 = vsel %vm1090, %v2462, %v2463
        %v2465 = vrot.slane %v2371, 5
        %v2466 = vrot.slane %v2465, 4
        %v2467 = vrot.slane %v1728, 5
        %v2468 = vsel %vm1090, %v2466, %v2467
        %v2469 = vrot.slane %v2467, 4
        %v2470 = vrot.slane %v1729, 5
        %v2471 = vsel %vm1090, %v2469, %v2470
        %v2472 = vrot.slane %v2372, 5
        %v2473 = vrot.slane %v2472, 4
        %v2474 = vrot.slane %v1731, 5
        %v2475 = vsel %vm1090, %v2473, %v2474
        %v2476 = vrot.slane %v2474, 4
        %v2477 = vrot.slane %v1732, 5
        %v2478 = vsel %vm1090, %v2476, %v2477
        %v2479 = vrot.slane %v2373, 5
        %v2480 = vrot.slane %v2479, 4
        %v2481 = vrot.slane %v1734, 5
        %v2482 = vsel %vm1090, %v2480, %v2481
        %v2483 = vrot.slane %v2481, 4
        %v2484 = vrot.slane %v1735, 5
        %v2485 = vsel %vm1090, %v2483, %v2484
        %v2486 = vrot.slane %v2374, 5
        %v2487 = vrot.slane %v2486, 4
        %v2488 = vrot.slane %v1737, 5
        %v2489 = vsel %vm1090, %v2487, %v2488
        %v2490 = vrot.slane %v2488, 4
        %v2491 = vrot.slane %v1738, 5
        %v2492 = vsel %vm1090, %v2490, %v2491
        %v2493 = vrot.slane %v2375, 5
        %v2494 = vrot.slane %v2493, 4
        %v2495 = vrot.slane %v1740, 5
        %v2496 = vsel %vm1090, %v2494, %v2495
        %v2497 = vrot.slane %v2495, 4
        %v2498 = vrot.slane %v1741, 5
        %v2499 = vsel %vm1090, %v2497, %v2498
        %v2500 = vrot.slane %v2376, 5
        %v2501 = vrot.slane %v2500, 4
        %v2502 = vrot.slane %v1743, 5
        %v2503 = vsel %vm1090, %v2501, %v2502
        %v2504 = vrot.slane %v2502, 4
        %v2505 = vrot.slane %v1744, 5
        %v2506 = vsel %vm1090, %v2504, %v2505
        %v2507 = vrot.slane %v2377, 5
        %v2508 = vrot.slane %v2507, 4
        %v2509 = vrot.slane %v1746, 5
        %v2510 = vsel %vm1090, %v2508, %v2509
        %v2511 = vrot.slane %v2509, 4
        %v2512 = vrot.slane %v1747, 5
        %v2513 = vsel %vm1090, %v2511, %v2512
        %v2514 = vrot.slane %v2378, 5
        %v2515 = vrot.slane %v2514, 4
        %v2516 = vrot.slane %v1749, 5
        %v2517 = vsel %vm1090, %v2515, %v2516
        %v2518 = vrot.slane %v2516, 4
        %v2519 = vrot.slane %v1750, 5
        %v2520 = vsel %vm1090, %v2518, %v2519
        %v2521 = vrot.slane %v2379, 5
        %v2522 = vrot.slane %v2521, 4
        %v2523 = vrot.slane %v1752, 5
        %v2524 = vsel %vm1090, %v2522, %v2523
        %v2525 = vrot.slane %v2523, 4
        %v2526 = vrot.slane %v1753, 5
        %v2527 = vsel %vm1090, %v2525, %v2526
        %v2528 = vrot.slane %v2380, 5
        %v2529 = vrot.slane %v2528, 4
        %v2530 = vrot.slane %v1755, 5
        %v2531 = vsel %vm1090, %v2529, %v2530
        %v2532 = vrot.slane %v2530, 4
        %v2533 = vrot.slane %v1756, 5
        %v2534 = vsel %vm1090, %v2532, %v2533
        %v2535 = vrot.slane %v2381, 5
        %v2536 = vrot.slane %v2535, 4
        %v2537 = vrot.slane %v1758, 5
        %v2538 = vsel %vm1090, %v2536, %v2537
        %v2539 = vrot.slane %v2537, 4
        %v2540 = vrot.slane %v1759, 5
        %v2541 = vsel %vm1090, %v2539, %v2540
        %s2542 = scalar_lea.vmem %s1, 20
        %v2543 = vld [vmem:[%s2542] sm:$0xf]
        %v2544 = vunpack.c.l.b16 %v2433
        %v2545 = vunpack.c.l.b16 %v2436
        %v2546 = vunpack.c.l.b16 %v2440
        %v2547 = vunpack.c.l.b16 %v2443
        %v2548 = vunpack.c.l.b16 %v2447
        %v2549 = vunpack.c.l.b16 %v2450
        %v2550 = vunpack.c.l.b16 %v2454
        %v2551 = vunpack.c.l.b16 %v2457
        %v2552 = vunpack.c.l.b16 %v2461
        %v2553 = vunpack.c.l.b16 %v2464
        %v2554 = vunpack.c.l.b16 %v2468
        %v2555 = vunpack.c.l.b16 %v2471
        %v2556 = vunpack.c.l.b16 %v2475
        %v2557 = vunpack.c.l.b16 %v2478
        %v2558 = vunpack.c.l.b16 %v2482
        %v2559 = vunpack.c.l.b16 %v2485
        %v2560 = vunpack.c.l.b16 %v2489
        %v2561 = vunpack.c.l.b16 %v2492
        %v2562 = vunpack.c.l.b16 %v2496
        %v2563 = vunpack.c.l.b16 %v2499
        %v2564 = vunpack.c.l.b16 %v2503
        %v2565 = vunpack.c.l.b16 %v2506
        %v2566 = vunpack.c.l.b16 %v2510
        %v2567 = vunpack.c.l.b16 %v2513
        %v2568 = vunpack.c.l.b16 %v2517
        %v2569 = vunpack.c.l.b16 %v2520
        %v2570 = vunpack.c.l.b16 %v2524
        %v2571 = vunpack.c.l.b16 %v2527
        %v2572 = vunpack.c.l.b16 %v2531
        %v2573 = vunpack.c.l.b16 %v2534
        %v2574 = vunpack.c.l.b16 %v2538
        %v2575 = vunpack.c.l.b16 %v2541
        %v2576 = vpack.c.b16 %v2545, %v2544
        %v2577 = vpack.c.b16 %v2547, %v2546
        %v2578 = vpack.c.b16 %v2549, %v2548
        %v2579 = vpack.c.b16 %v2551, %v2550
        %v2580 = vpack.c.b16 %v2553, %v2552
        %v2581 = vpack.c.b16 %v2555, %v2554
        %v2582 = vpack.c.b16 %v2557, %v2556
        %v2583 = vpack.c.b16 %v2559, %v2558
        %v2584 = vpack.c.b16 %v2561, %v2560
        %v2585 = vpack.c.b16 %v2563, %v2562
        %v2586 = vpack.c.b16 %v2565, %v2564
        %v2587 = vpack.c.b16 %v2567, %v2566
        %v2588 = vpack.c.b16 %v2569, %v2568
        %v2589 = vpack.c.b16 %v2571, %v2570
        %v2590 = vpack.c.b16 %v2573, %v2572
        %v2591 = vpack.c.b16 %v2575, %v2574
        %v2593 = vsel %vm678, %v2576, 0
        %v2596 = vsel %vm678, %v2577, 0
        %v2599 = vsel %vm678, %v2578, 0
        %v2602 = vsel %vm678, %v2579, 0
        %v2605 = vsel %vm678, %v2580, 0
        %v2608 = vsel %vm678, %v2581, 0
        %v2611 = vsel %vm678, %v2582, 0
        %v2614 = vsel %vm678, %v2583, 0
        %v2617 = vsel %vm678, %v2584, 0
        %v2620 = vsel %vm678, %v2585, 0
        %v2623 = vsel %vm678, %v2586, 0
        %v2626 = vsel %vm678, %v2587, 0
        %v2629 = vsel %vm678, %v2588, 0
        %v2632 = vsel %vm678, %v2589, 0
        %v2635 = vsel %vm678, %v2590, 0
        %v2638 = vsel %vm678, %v2591, 0
        %v2641 = vsel %vm727, %v2543, 0
        %2643 = vmatpush.bf16.msra.mxu0 0
        %2644 = vmatpush.bf16.msra.mxu0 0
        %2645 = vmatpush.bf16.msra.mxu0 0
        %2646 = vmatpush.bf16.msra.mxu0 0
        %2647 = vmatpush.bf16.msra.mxu0 0
        %2648 = vmatpush.bf16.msra.mxu0 0
        %2649 = vmatpush.bf16.msra.mxu0 0
        %2650 = vmatpush.bf16.msra.mxu0 %v2641
        %2651 = vmatmul.bf16.gmra.mxu0 %v2593
        %v2652 = vpop.f32.mrf.mxu0
        %v2653 = vadd.f32 0.0, %v2652
        %v2654 = vpop.f32.mrf.mxu0
        %v2655 = vadd.f32 0.0, %v2654
        %2656 = vmatmul.bf16.gmra.mxu0 %v2596
        %v2657 = vpop.f32.mrf.mxu0
        %v2658 = vadd.f32 0.0, %v2657
        %v2659 = vpop.f32.mrf.mxu0
        %v2660 = vadd.f32 0.0, %v2659
        %2661 = vmatmul.bf16.gmra.mxu0 %v2599
        %v2662 = vpop.f32.mrf.mxu0
        %v2663 = vadd.f32 0.0, %v2662
        %v2664 = vpop.f32.mrf.mxu0
        %v2665 = vadd.f32 0.0, %v2664
        %2666 = vmatmul.bf16.gmra.mxu0 %v2602
        %v2667 = vpop.f32.mrf.mxu0
        %v2668 = vadd.f32 0.0, %v2667
        %v2669 = vpop.f32.mrf.mxu0
        %v2670 = vadd.f32 0.0, %v2669
        %2671 = vmatmul.bf16.gmra.mxu0 %v2605
        %v2672 = vpop.f32.mrf.mxu0
        %v2673 = vadd.f32 0.0, %v2672
        %v2674 = vpop.f32.mrf.mxu0
        %v2675 = vadd.f32 0.0, %v2674
        %2676 = vmatmul.bf16.gmra.mxu0 %v2608
        %v2677 = vpop.f32.mrf.mxu0
        %v2678 = vadd.f32 0.0, %v2677
        %v2679 = vpop.f32.mrf.mxu0
        %v2680 = vadd.f32 0.0, %v2679
        %2681 = vmatmul.bf16.gmra.mxu0 %v2611
        %v2682 = vpop.f32.mrf.mxu0
        %v2683 = vadd.f32 0.0, %v2682
        %v2684 = vpop.f32.mrf.mxu0
        %v2685 = vadd.f32 0.0, %v2684
        %2686 = vmatmul.bf16.gmra.mxu0 %v2614
        %v2687 = vpop.f32.mrf.mxu0
        %v2688 = vadd.f32 0.0, %v2687
        %v2689 = vpop.f32.mrf.mxu0
        %v2690 = vadd.f32 0.0, %v2689
        %2691 = vmatmul.bf16.gmra.mxu0 %v2617
        %v2692 = vpop.f32.mrf.mxu0
        %v2693 = vadd.f32 0.0, %v2692
        %v2694 = vpop.f32.mrf.mxu0
        %v2695 = vadd.f32 0.0, %v2694
        %2696 = vmatmul.bf16.gmra.mxu0 %v2620
        %v2697 = vpop.f32.mrf.mxu0
        %v2698 = vadd.f32 0.0, %v2697
        %v2699 = vpop.f32.mrf.mxu0
        %v2700 = vadd.f32 0.0, %v2699
        %2701 = vmatmul.bf16.gmra.mxu0 %v2623
        %v2702 = vpop.f32.mrf.mxu0
        %v2703 = vadd.f32 0.0, %v2702
        %v2704 = vpop.f32.mrf.mxu0
        %v2705 = vadd.f32 0.0, %v2704
        %2706 = vmatmul.bf16.gmra.mxu0 %v2626
        %v2707 = vpop.f32.mrf.mxu0
        %v2708 = vadd.f32 0.0, %v2707
        %v2709 = vpop.f32.mrf.mxu0
        %v2710 = vadd.f32 0.0, %v2709
        %2711 = vmatmul.bf16.gmra.mxu0 %v2629
        %v2712 = vpop.f32.mrf.mxu0
        %v2713 = vadd.f32 0.0, %v2712
        %v2714 = vpop.f32.mrf.mxu0
        %v2715 = vadd.f32 0.0, %v2714
        %2716 = vmatmul.bf16.gmra.mxu0 %v2632
        %v2717 = vpop.f32.mrf.mxu0
        %v2718 = vadd.f32 0.0, %v2717
        %v2719 = vpop.f32.mrf.mxu0
        %v2720 = vadd.f32 0.0, %v2719
        %2721 = vmatmul.bf16.gmra.mxu0 %v2635
        %v2722 = vpop.f32.mrf.mxu0
        %v2723 = vadd.f32 0.0, %v2722
        %v2724 = vpop.f32.mrf.mxu0
        %v2725 = vadd.f32 0.0, %v2724
        %2726 = vmatmul.bf16.gmra.mxu0 %v2638
        %v2727 = vpop.f32.mrf.mxu0
        %v2728 = vadd.f32 0.0, %v2727
        %v2729 = vpop.f32.mrf.mxu0
        %v2730 = vadd.f32 0.0, %v2729
        %2731 = vdwg.mxu0
        %v2732 = vadd.f32 %v2334, %v2653
        %v2733 = vadd.f32 %v2335, %v2655
        %v2734 = vadd.f32 %v2336, %v2658
        %v2735 = vadd.f32 %v2337, %v2660
        %v2736 = vadd.f32 %v2338, %v2663
        %v2737 = vadd.f32 %v2339, %v2665
        %v2738 = vadd.f32 %v2340, %v2668
        %v2739 = vadd.f32 %v2341, %v2670
        %v2740 = vadd.f32 %v2342, %v2673
        %v2741 = vadd.f32 %v2343, %v2675
        %v2742 = vadd.f32 %v2344, %v2678
        %v2743 = vadd.f32 %v2345, %v2680
        %v2744 = vadd.f32 %v2346, %v2683
        %v2745 = vadd.f32 %v2347, %v2685
        %v2746 = vadd.f32 %v2348, %v2688
        %v2747 = vadd.f32 %v2349, %v2690
        %v2748 = vadd.f32 %v2350, %v2693
        %v2749 = vadd.f32 %v2351, %v2695
        %v2750 = vadd.f32 %v2352, %v2698
        %v2751 = vadd.f32 %v2353, %v2700
        %v2752 = vadd.f32 %v2354, %v2703
        %v2753 = vadd.f32 %v2355, %v2705
        %v2754 = vadd.f32 %v2356, %v2708
        %v2755 = vadd.f32 %v2357, %v2710
        %v2756 = vadd.f32 %v2358, %v2713
        %v2757 = vadd.f32 %v2359, %v2715
        %v2758 = vadd.f32 %v2360, %v2718
        %v2759 = vadd.f32 %v2361, %v2720
        %v2760 = vadd.f32 %v2362, %v2723
        %v2761 = vadd.f32 %v2363, %v2725
        %v2762 = vadd.f32 %v2364, %v2728
        %v2763 = vadd.f32 %v2365, %v2730
        %s2764 = scalar_lea.vmem %s188, 24
        %v2765 = vld [vmem:[%s2764] sm:$0xf]
        %v2766 = vld [vmem:[%s2764 + $0x4] sm:$0xf]
        %v2767 = vld [vmem:[%s2764 + $0xc] sm:$0xf]
        %v2768 = vld [vmem:[%s2764 + $0x10] sm:$0xf]
        %v2769 = vld [vmem:[%s2764 + $0x18] sm:$0xf]
        %v2770 = vld [vmem:[%s2764 + $0x1c] sm:$0xf]
        %v2771 = vld [vmem:[%s2764 + $0x24] sm:$0xf]
        %v2772 = vld [vmem:[%s2764 + $0x28] sm:$0xf]
        %v2773 = vld [vmem:[%s2764 + $0x30] sm:$0xf]
        %v2774 = vld [vmem:[%s2764 + $0x34] sm:$0xf]
        %v2775 = vld [vmem:[%s2764 + $0x3c] sm:$0xf]
        %v2776 = vld [vmem:[%s2764 + $0x40] sm:$0xf]
        %v2777 = vld [vmem:[%s2764 + $0x48] sm:$0xf]
        %v2778 = vld [vmem:[%s2764 + $0x4c] sm:$0xf]
        %v2779 = vld [vmem:[%s2764 + $0x54] sm:$0xf]
        %v2780 = vld [vmem:[%s2764 + $0x58] sm:$0xf]
        %v2781 = vld [vmem:[%s2764 + $0x60] sm:$0xf]
        %v2782 = vld [vmem:[%s2764 + $0x64] sm:$0xf]
        %v2783 = vld [vmem:[%s2764 + $0x6c] sm:$0xf]
        %v2784 = vld [vmem:[%s2764 + $0x70] sm:$0xf]
        %v2785 = vld [vmem:[%s2764 + $0x78] sm:$0xf]
        %v2786 = vld [vmem:[%s2764 + $0x7c] sm:$0xf]
        %v2787 = vld [vmem:[%s2764 + $0x84] sm:$0xf]
        %v2788 = vld [vmem:[%s2764 + $0x88] sm:$0xf]
        %v2789 = vld [vmem:[%s2764 + $0x90] sm:$0xf]
        %v2790 = vld [vmem:[%s2764 + $0x94] sm:$0xf]
        %v2791 = vld [vmem:[%s2764 + $0x9c] sm:$0xf]
        %v2792 = vld [vmem:[%s2764 + $0xa0] sm:$0xf]
        %v2793 = vld [vmem:[%s2764 + $0xa8] sm:$0xf]
        %v2794 = vld [vmem:[%s2764 + $0xac] sm:$0xf]
        %v2795 = vld [vmem:[%s2764 + $0xb4] sm:$0xf]
        %v2796 = vld [vmem:[%s2764 + $0xb8] sm:$0xf]
        %s2797 = scalar_lea.vmem %s1, 24
        %v2798 = vld [vmem:[%s2797] sm:$0xf]
        %v2831 = vunpack.c.l.b16 %v2765
        %v2832 = vunpack.c.l.b16 %v2766
        %v2833 = vunpack.c.l.b16 %v2767
        %v2834 = vunpack.c.l.b16 %v2768
        %v2835 = vunpack.c.l.b16 %v2769
        %v2836 = vunpack.c.l.b16 %v2770
        %v2837 = vunpack.c.l.b16 %v2771
        %v2838 = vunpack.c.l.b16 %v2772
        %v2839 = vunpack.c.l.b16 %v2773
        %v2840 = vunpack.c.l.b16 %v2774
        %v2841 = vunpack.c.l.b16 %v2775
        %v2842 = vunpack.c.l.b16 %v2776
        %v2843 = vunpack.c.l.b16 %v2777
        %v2844 = vunpack.c.l.b16 %v2778
        %v2845 = vunpack.c.l.b16 %v2779
        %v2846 = vunpack.c.l.b16 %v2780
        %v2847 = vunpack.c.l.b16 %v2781
        %v2848 = vunpack.c.l.b16 %v2782
        %v2849 = vunpack.c.l.b16 %v2783
        %v2850 = vunpack.c.l.b16 %v2784
        %v2851 = vunpack.c.l.b16 %v2785
        %v2852 = vunpack.c.l.b16 %v2786
        %v2853 = vunpack.c.l.b16 %v2787
        %v2854 = vunpack.c.l.b16 %v2788
        %v2855 = vunpack.c.l.b16 %v2789
        %v2856 = vunpack.c.l.b16 %v2790
        %v2857 = vunpack.c.l.b16 %v2791
        %v2858 = vunpack.c.l.b16 %v2792
        %v2859 = vunpack.c.l.b16 %v2793
        %v2860 = vunpack.c.l.b16 %v2794
        %v2861 = vunpack.c.l.b16 %v2795
        %v2862 = vunpack.c.l.b16 %v2796
        %v2863 = vpack.c.b16 %v2832, %v2831
        %v2864 = vpack.c.b16 %v2834, %v2833
        %v2865 = vpack.c.b16 %v2836, %v2835
        %v2866 = vpack.c.b16 %v2838, %v2837
        %v2867 = vpack.c.b16 %v2840, %v2839
        %v2868 = vpack.c.b16 %v2842, %v2841
        %v2869 = vpack.c.b16 %v2844, %v2843
        %v2870 = vpack.c.b16 %v2846, %v2845
        %v2871 = vpack.c.b16 %v2848, %v2847
        %v2872 = vpack.c.b16 %v2850, %v2849
        %v2873 = vpack.c.b16 %v2852, %v2851
        %v2874 = vpack.c.b16 %v2854, %v2853
        %v2875 = vpack.c.b16 %v2856, %v2855
        %v2876 = vpack.c.b16 %v2858, %v2857
        %v2877 = vpack.c.b16 %v2860, %v2859
        %v2878 = vpack.c.b16 %v2862, %v2861
        %v2880 = vsel %vm678, %v2863, 0
        %v2883 = vsel %vm678, %v2864, 0
        %v2886 = vsel %vm678, %v2865, 0
        %v2889 = vsel %vm678, %v2866, 0
        %v2892 = vsel %vm678, %v2867, 0
        %v2895 = vsel %vm678, %v2868, 0
        %v2898 = vsel %vm678, %v2869, 0
        %v2901 = vsel %vm678, %v2870, 0
        %v2904 = vsel %vm678, %v2871, 0
        %v2907 = vsel %vm678, %v2872, 0
        %v2910 = vsel %vm678, %v2873, 0
        %v2913 = vsel %vm678, %v2874, 0
        %v2916 = vsel %vm678, %v2875, 0
        %v2919 = vsel %vm678, %v2876, 0
        %v2922 = vsel %vm678, %v2877, 0
        %v2925 = vsel %vm678, %v2878, 0
        %v2928 = vsel %vm727, %v2798, 0
        %2930 = vmatpush.bf16.msra.mxu0 0
        %2931 = vmatpush.bf16.msra.mxu0 0
        %2932 = vmatpush.bf16.msra.mxu0 0
        %2933 = vmatpush.bf16.msra.mxu0 0
        %2934 = vmatpush.bf16.msra.mxu0 0
        %2935 = vmatpush.bf16.msra.mxu0 0
        %2936 = vmatpush.bf16.msra.mxu0 0
        %2937 = vmatpush.bf16.msra.mxu0 %v2928
        %2938 = vmatmul.bf16.gmra.mxu0 %v2880
        %v2939 = vpop.f32.mrf.mxu0
        %v2940 = vadd.f32 0.0, %v2939
        %v2941 = vpop.f32.mrf.mxu0
        %v2942 = vadd.f32 0.0, %v2941
        %2943 = vmatmul.bf16.gmra.mxu0 %v2883
        %v2944 = vpop.f32.mrf.mxu0
        %v2945 = vadd.f32 0.0, %v2944
        %v2946 = vpop.f32.mrf.mxu0
        %v2947 = vadd.f32 0.0, %v2946
        %2948 = vmatmul.bf16.gmra.mxu0 %v2886
        %v2949 = vpop.f32.mrf.mxu0
        %v2950 = vadd.f32 0.0, %v2949
        %v2951 = vpop.f32.mrf.mxu0
        %v2952 = vadd.f32 0.0, %v2951
        %2953 = vmatmul.bf16.gmra.mxu0 %v2889
        %v2954 = vpop.f32.mrf.mxu0
        %v2955 = vadd.f32 0.0, %v2954
        %v2956 = vpop.f32.mrf.mxu0
        %v2957 = vadd.f32 0.0, %v2956
        %2958 = vmatmul.bf16.gmra.mxu0 %v2892
        %v2959 = vpop.f32.mrf.mxu0
        %v2960 = vadd.f32 0.0, %v2959
        %v2961 = vpop.f32.mrf.mxu0
        %v2962 = vadd.f32 0.0, %v2961
        %2963 = vmatmul.bf16.gmra.mxu0 %v2895
        %v2964 = vpop.f32.mrf.mxu0
        %v2965 = vadd.f32 0.0, %v2964
        %v2966 = vpop.f32.mrf.mxu0
        %v2967 = vadd.f32 0.0, %v2966
        %2968 = vmatmul.bf16.gmra.mxu0 %v2898
        %v2969 = vpop.f32.mrf.mxu0
        %v2970 = vadd.f32 0.0, %v2969
        %v2971 = vpop.f32.mrf.mxu0
        %v2972 = vadd.f32 0.0, %v2971
        %2973 = vmatmul.bf16.gmra.mxu0 %v2901
        %v2974 = vpop.f32.mrf.mxu0
        %v2975 = vadd.f32 0.0, %v2974
        %v2976 = vpop.f32.mrf.mxu0
        %v2977 = vadd.f32 0.0, %v2976
        %2978 = vmatmul.bf16.gmra.mxu0 %v2904
        %v2979 = vpop.f32.mrf.mxu0
        %v2980 = vadd.f32 0.0, %v2979
        %v2981 = vpop.f32.mrf.mxu0
        %v2982 = vadd.f32 0.0, %v2981
        %2983 = vmatmul.bf16.gmra.mxu0 %v2907
        %v2984 = vpop.f32.mrf.mxu0
        %v2985 = vadd.f32 0.0, %v2984
        %v2986 = vpop.f32.mrf.mxu0
        %v2987 = vadd.f32 0.0, %v2986
        %2988 = vmatmul.bf16.gmra.mxu0 %v2910
        %v2989 = vpop.f32.mrf.mxu0
        %v2990 = vadd.f32 0.0, %v2989
        %v2991 = vpop.f32.mrf.mxu0
        %v2992 = vadd.f32 0.0, %v2991
        %2993 = vmatmul.bf16.gmra.mxu0 %v2913
        %v2994 = vpop.f32.mrf.mxu0
        %v2995 = vadd.f32 0.0, %v2994
        %v2996 = vpop.f32.mrf.mxu0
        %v2997 = vadd.f32 0.0, %v2996
        %2998 = vmatmul.bf16.gmra.mxu0 %v2916
        %v2999 = vpop.f32.mrf.mxu0
        %v3000 = vadd.f32 0.0, %v2999
        %v3001 = vpop.f32.mrf.mxu0
        %v3002 = vadd.f32 0.0, %v3001
        %3003 = vmatmul.bf16.gmra.mxu0 %v2919
        %v3004 = vpop.f32.mrf.mxu0
        %v3005 = vadd.f32 0.0, %v3004
        %v3006 = vpop.f32.mrf.mxu0
        %v3007 = vadd.f32 0.0, %v3006
        %3008 = vmatmul.bf16.gmra.mxu0 %v2922
        %v3009 = vpop.f32.mrf.mxu0
        %v3010 = vadd.f32 0.0, %v3009
        %v3011 = vpop.f32.mrf.mxu0
        %v3012 = vadd.f32 0.0, %v3011
        %3013 = vmatmul.bf16.gmra.mxu0 %v2925
        %v3014 = vpop.f32.mrf.mxu0
        %v3015 = vadd.f32 0.0, %v3014
        %v3016 = vpop.f32.mrf.mxu0
        %v3017 = vadd.f32 0.0, %v3016
        %3018 = vdwg.mxu0
        %v3019 = vadd.f32 %v2732, %v2940
        %v3020 = vadd.f32 %v2733, %v2942
        %v3021 = vadd.f32 %v2734, %v2945
        %v3022 = vadd.f32 %v2735, %v2947
        %v3023 = vadd.f32 %v2736, %v2950
        %v3024 = vadd.f32 %v2737, %v2952
        %v3025 = vadd.f32 %v2738, %v2955
        %v3026 = vadd.f32 %v2739, %v2957
        %v3027 = vadd.f32 %v2740, %v2960
        %v3028 = vadd.f32 %v2741, %v2962
        %v3029 = vadd.f32 %v2742, %v2965
        %v3030 = vadd.f32 %v2743, %v2967
        %v3031 = vadd.f32 %v2744, %v2970
        %v3032 = vadd.f32 %v2745, %v2972
        %v3033 = vadd.f32 %v2746, %v2975
        %v3034 = vadd.f32 %v2747, %v2977
        %v3035 = vadd.f32 %v2748, %v2980
        %v3036 = vadd.f32 %v2749, %v2982
        %v3037 = vadd.f32 %v2750, %v2985
        %v3038 = vadd.f32 %v2751, %v2987
        %v3039 = vadd.f32 %v2752, %v2990
        %v3040 = vadd.f32 %v2753, %v2992
        %v3041 = vadd.f32 %v2754, %v2995
        %v3042 = vadd.f32 %v2755, %v2997
        %v3043 = vadd.f32 %v2756, %v3000
        %v3044 = vadd.f32 %v2757, %v3002
        %v3045 = vadd.f32 %v2758, %v3005
        %v3046 = vadd.f32 %v2759, %v3007
        %v3047 = vadd.f32 %v2760, %v3010
        %v3048 = vadd.f32 %v2761, %v3012
        %v3049 = vadd.f32 %v2762, %v3015
        %v3050 = vadd.f32 %v2763, %v3017
        %v3051 = vld [vmem:[%s2764] sm:$0xf]
        %v3052 = vld [vmem:[%s2764 + $0x4] sm:$0xf]
        %v3053 = vld [vmem:[%s2764 + $0x8] sm:$0x1]
        %v3054 = vld [vmem:[%s2764 + $0xc] sm:$0xf]
        %v3055 = vld [vmem:[%s2764 + $0x10] sm:$0xf]
        %v3056 = vld [vmem:[%s2764 + $0x14] sm:$0x1]
        %v3057 = vld [vmem:[%s2764 + $0x18] sm:$0xf]
        %v3058 = vld [vmem:[%s2764 + $0x1c] sm:$0xf]
        %v3059 = vld [vmem:[%s2764 + $0x20] sm:$0x1]
        %v3060 = vld [vmem:[%s2764 + $0x24] sm:$0xf]
        %v3061 = vld [vmem:[%s2764 + $0x28] sm:$0xf]
        %v3062 = vld [vmem:[%s2764 + $0x2c] sm:$0x1]
        %v3063 = vld [vmem:[%s2764 + $0x30] sm:$0xf]
        %v3064 = vld [vmem:[%s2764 + $0x34] sm:$0xf]
        %v3065 = vld [vmem:[%s2764 + $0x38] sm:$0x1]
        %v3066 = vld [vmem:[%s2764 + $0x3c] sm:$0xf]
        %v3067 = vld [vmem:[%s2764 + $0x40] sm:$0xf]
        %v3068 = vld [vmem:[%s2764 + $0x44] sm:$0x1]
        %v3069 = vld [vmem:[%s2764 + $0x48] sm:$0xf]
        %v3070 = vld [vmem:[%s2764 + $0x4c] sm:$0xf]
        %v3071 = vld [vmem:[%s2764 + $0x50] sm:$0x1]
        %v3072 = vld [vmem:[%s2764 + $0x54] sm:$0xf]
        %v3073 = vld [vmem:[%s2764 + $0x58] sm:$0xf]
        %v3074 = vld [vmem:[%s2764 + $0x5c] sm:$0x1]
        %v3075 = vld [vmem:[%s2764 + $0x60] sm:$0xf]
        %v3076 = vld [vmem:[%s2764 + $0x64] sm:$0xf]
        %v3077 = vld [vmem:[%s2764 + $0x68] sm:$0x1]
        %v3078 = vld [vmem:[%s2764 + $0x6c] sm:$0xf]
        %v3079 = vld [vmem:[%s2764 + $0x70] sm:$0xf]
        %v3080 = vld [vmem:[%s2764 + $0x74] sm:$0x1]
        %v3081 = vld [vmem:[%s2764 + $0x78] sm:$0xf]
        %v3082 = vld [vmem:[%s2764 + $0x7c] sm:$0xf]
        %v3083 = vld [vmem:[%s2764 + $0x80] sm:$0x1]
        %v3084 = vld [vmem:[%s2764 + $0x84] sm:$0xf]
        %v3085 = vld [vmem:[%s2764 + $0x88] sm:$0xf]
        %v3086 = vld [vmem:[%s2764 + $0x8c] sm:$0x1]
        %v3087 = vld [vmem:[%s2764 + $0x90] sm:$0xf]
        %v3088 = vld [vmem:[%s2764 + $0x94] sm:$0xf]
        %v3089 = vld [vmem:[%s2764 + $0x98] sm:$0x1]
        %v3090 = vld [vmem:[%s2764 + $0x9c] sm:$0xf]
        %v3091 = vld [vmem:[%s2764 + $0xa0] sm:$0xf]
        %v3092 = vld [vmem:[%s2764 + $0xa4] sm:$0x1]
        %v3093 = vld [vmem:[%s2764 + $0xa8] sm:$0xf]
        %v3094 = vld [vmem:[%s2764 + $0xac] sm:$0xf]
        %v3095 = vld [vmem:[%s2764 + $0xb0] sm:$0x1]
        %v3096 = vld [vmem:[%s2764 + $0xb4] sm:$0xf]
        %v3097 = vld [vmem:[%s2764 + $0xb8] sm:$0xf]
        %v3098 = vld [vmem:[%s2764 + $0xbc] sm:$0x1]
        %v3100 = vshrl.u32 %v3051, 16
        %v3102 = vrot.slane %v3100, 4
        %v3103 = vshll.u32 %v3051, 16
        %v3105 = vrot.slane %v3103, 5
        %v3106 = vor.u32 %v3102, %v3105
        %v3107 = vrot.slane %v3106, 4
        %v3109 = vshll.u32 %v3052, 16
        %v3111 = vrot.slane %v3109, 5
        %v3112 = vsel %vm243, %v3107, %v3111
        %v3113 = vshrl.u32 %v3052, 16
        %v3115 = vrot.slane %v3113, 4
        %v3116 = vor.u32 %v3115, %v3111
        %v3117 = vrot.slane %v3116, 4
        %v3119 = vshll.u32 %v3053, 16
        %v3121 = vrot.slane %v3119, 5
        %v3122 = vsel %vm243, %v3117, %v3121
        %v3124 = vshrl.u32 %v3054, 16
        %v3126 = vrot.slane %v3124, 4
        %v3127 = vshll.u32 %v3054, 16
        %v3129 = vrot.slane %v3127, 5
        %v3130 = vor.u32 %v3126, %v3129
        %v3131 = vrot.slane %v3130, 4
        %v3133 = vshll.u32 %v3055, 16
        %v3135 = vrot.slane %v3133, 5
        %v3136 = vsel %vm243, %v3131, %v3135
        %v3137 = vshrl.u32 %v3055, 16
        %v3139 = vrot.slane %v3137, 4
        %v3140 = vor.u32 %v3139, %v3135
        %v3141 = vrot.slane %v3140, 4
        %v3143 = vshll.u32 %v3056, 16
        %v3145 = vrot.slane %v3143, 5
        %v3146 = vsel %vm243, %v3141, %v3145
        %v3148 = vshrl.u32 %v3057, 16
        %v3150 = vrot.slane %v3148, 4
        %v3151 = vshll.u32 %v3057, 16
        %v3153 = vrot.slane %v3151, 5
        %v3154 = vor.u32 %v3150, %v3153
        %v3155 = vrot.slane %v3154, 4
        %v3157 = vshll.u32 %v3058, 16
        %v3159 = vrot.slane %v3157, 5
        %v3160 = vsel %vm243, %v3155, %v3159
        %v3161 = vshrl.u32 %v3058, 16
        %v3163 = vrot.slane %v3161, 4
        %v3164 = vor.u32 %v3163, %v3159
        %v3165 = vrot.slane %v3164, 4
        %v3167 = vshll.u32 %v3059, 16
        %v3169 = vrot.slane %v3167, 5
        %v3170 = vsel %vm243, %v3165, %v3169
        %v3172 = vshrl.u32 %v3060, 16
        %v3174 = vrot.slane %v3172, 4
        %v3175 = vshll.u32 %v3060, 16
        %v3177 = vrot.slane %v3175, 5
        %v3178 = vor.u32 %v3174, %v3177
        %v3179 = vrot.slane %v3178, 4
        %v3181 = vshll.u32 %v3061, 16
        %v3183 = vrot.slane %v3181, 5
        %v3184 = vsel %vm243, %v3179, %v3183
        %v3185 = vshrl.u32 %v3061, 16
        %v3187 = vrot.slane %v3185, 4
        %v3188 = vor.u32 %v3187, %v3183
        %v3189 = vrot.slane %v3188, 4
        %v3191 = vshll.u32 %v3062, 16
        %v3193 = vrot.slane %v3191, 5
        %v3194 = vsel %vm243, %v3189, %v3193
        %v3196 = vshrl.u32 %v3063, 16
        %v3198 = vrot.slane %v3196, 4
        %v3199 = vshll.u32 %v3063, 16
        %v3201 = vrot.slane %v3199, 5
        %v3202 = vor.u32 %v3198, %v3201
        %v3203 = vrot.slane %v3202, 4
        %v3205 = vshll.u32 %v3064, 16
        %v3207 = vrot.slane %v3205, 5
        %v3208 = vsel %vm243, %v3203, %v3207
        %v3209 = vshrl.u32 %v3064, 16
        %v3211 = vrot.slane %v3209, 4
        %v3212 = vor.u32 %v3211, %v3207
        %v3213 = vrot.slane %v3212, 4
        %v3215 = vshll.u32 %v3065, 16
        %v3217 = vrot.slane %v3215, 5
        %v3218 = vsel %vm243, %v3213, %v3217
        %v3220 = vshrl.u32 %v3066, 16
        %v3222 = vrot.slane %v3220, 4
        %v3223 = vshll.u32 %v3066, 16
        %v3225 = vrot.slane %v3223, 5
        %v3226 = vor.u32 %v3222, %v3225
        %v3227 = vrot.slane %v3226, 4
        %v3229 = vshll.u32 %v3067, 16
        %v3231 = vrot.slane %v3229, 5
        %v3232 = vsel %vm243, %v3227, %v3231
        %v3233 = vshrl.u32 %v3067, 16
        %v3235 = vrot.slane %v3233, 4
        %v3236 = vor.u32 %v3235, %v3231
        %v3237 = vrot.slane %v3236, 4
        %v3239 = vshll.u32 %v3068, 16
        %v3241 = vrot.slane %v3239, 5
        %v3242 = vsel %vm243, %v3237, %v3241
        %v3244 = vshrl.u32 %v3069, 16
        %v3246 = vrot.slane %v3244, 4
        %v3247 = vshll.u32 %v3069, 16
        %v3249 = vrot.slane %v3247, 5
        %v3250 = vor.u32 %v3246, %v3249
        %v3251 = vrot.slane %v3250, 4
        %v3253 = vshll.u32 %v3070, 16
        %v3255 = vrot.slane %v3253, 5
        %v3256 = vsel %vm243, %v3251, %v3255
        %v3257 = vshrl.u32 %v3070, 16
        %v3259 = vrot.slane %v3257, 4
        %v3260 = vor.u32 %v3259, %v3255
        %v3261 = vrot.slane %v3260, 4
        %v3263 = vshll.u32 %v3071, 16
        %v3265 = vrot.slane %v3263, 5
        %v3266 = vsel %vm243, %v3261, %v3265
        %v3268 = vshrl.u32 %v3072, 16
        %v3270 = vrot.slane %v3268, 4
        %v3271 = vshll.u32 %v3072, 16
        %v3273 = vrot.slane %v3271, 5
        %v3274 = vor.u32 %v3270, %v3273
        %v3275 = vrot.slane %v3274, 4
        %v3277 = vshll.u32 %v3073, 16
        %v3279 = vrot.slane %v3277, 5
        %v3280 = vsel %vm243, %v3275, %v3279
        %v3281 = vshrl.u32 %v3073, 16
        %v3283 = vrot.slane %v3281, 4
        %v3284 = vor.u32 %v3283, %v3279
        %v3285 = vrot.slane %v3284, 4
        %v3287 = vshll.u32 %v3074, 16
        %v3289 = vrot.slane %v3287, 5
        %v3290 = vsel %vm243, %v3285, %v3289
        %v3292 = vshrl.u32 %v3075, 16
        %v3294 = vrot.slane %v3292, 4
        %v3295 = vshll.u32 %v3075, 16
        %v3297 = vrot.slane %v3295, 5
        %v3298 = vor.u32 %v3294, %v3297
        %v3299 = vrot.slane %v3298, 4
        %v3301 = vshll.u32 %v3076, 16
        %v3303 = vrot.slane %v3301, 5
        %v3304 = vsel %vm243, %v3299, %v3303
        %v3305 = vshrl.u32 %v3076, 16
        %v3307 = vrot.slane %v3305, 4
        %v3308 = vor.u32 %v3307, %v3303
        %v3309 = vrot.slane %v3308, 4
        %v3311 = vshll.u32 %v3077, 16
        %v3313 = vrot.slane %v3311, 5
        %v3314 = vsel %vm243, %v3309, %v3313
        %v3316 = vshrl.u32 %v3078, 16
        %v3318 = vrot.slane %v3316, 4
        %v3319 = vshll.u32 %v3078, 16
        %v3321 = vrot.slane %v3319, 5
        %v3322 = vor.u32 %v3318, %v3321
        %v3323 = vrot.slane %v3322, 4
        %v3325 = vshll.u32 %v3079, 16
        %v3327 = vrot.slane %v3325, 5
        %v3328 = vsel %vm243, %v3323, %v3327
        %v3329 = vshrl.u32 %v3079, 16
        %v3331 = vrot.slane %v3329, 4
        %v3332 = vor.u32 %v3331, %v3327
        %v3333 = vrot.slane %v3332, 4
        %v3335 = vshll.u32 %v3080, 16
        %v3337 = vrot.slane %v3335, 5
        %v3338 = vsel %vm243, %v3333, %v3337
        %v3340 = vshrl.u32 %v3081, 16
        %v3342 = vrot.slane %v3340, 4
        %v3343 = vshll.u32 %v3081, 16
        %v3345 = vrot.slane %v3343, 5
        %v3346 = vor.u32 %v3342, %v3345
        %v3347 = vrot.slane %v3346, 4
        %v3349 = vshll.u32 %v3082, 16
        %v3351 = vrot.slane %v3349, 5
        %v3352 = vsel %vm243, %v3347, %v3351
        %v3353 = vshrl.u32 %v3082, 16
        %v3355 = vrot.slane %v3353, 4
        %v3356 = vor.u32 %v3355, %v3351
        %v3357 = vrot.slane %v3356, 4
        %v3359 = vshll.u32 %v3083, 16
        %v3361 = vrot.slane %v3359, 5
        %v3362 = vsel %vm243, %v3357, %v3361
        %v3364 = vshrl.u32 %v3084, 16
        %v3366 = vrot.slane %v3364, 4
        %v3367 = vshll.u32 %v3084, 16
        %v3369 = vrot.slane %v3367, 5
        %v3370 = vor.u32 %v3366, %v3369
        %v3371 = vrot.slane %v3370, 4
        %v3373 = vshll.u32 %v3085, 16
        %v3375 = vrot.slane %v3373, 5
        %v3376 = vsel %vm243, %v3371, %v3375
        %v3377 = vshrl.u32 %v3085, 16
        %v3379 = vrot.slane %v3377, 4
        %v3380 = vor.u32 %v3379, %v3375
        %v3381 = vrot.slane %v3380, 4
        %v3383 = vshll.u32 %v3086, 16
        %v3385 = vrot.slane %v3383, 5
        %v3386 = vsel %vm243, %v3381, %v3385
        %v3388 = vshrl.u32 %v3087, 16
        %v3390 = vrot.slane %v3388, 4
        %v3391 = vshll.u32 %v3087, 16
        %v3393 = vrot.slane %v3391, 5
        %v3394 = vor.u32 %v3390, %v3393
        %v3395 = vrot.slane %v3394, 4
        %v3397 = vshll.u32 %v3088, 16
        %v3399 = vrot.slane %v3397, 5
        %v3400 = vsel %vm243, %v3395, %v3399
        %v3401 = vshrl.u32 %v3088, 16
        %v3403 = vrot.slane %v3401, 4
        %v3404 = vor.u32 %v3403, %v3399
        %v3405 = vrot.slane %v3404, 4
        %v3407 = vshll.u32 %v3089, 16
        %v3409 = vrot.slane %v3407, 5
        %v3410 = vsel %vm243, %v3405, %v3409
        %v3412 = vshrl.u32 %v3090, 16
        %v3414 = vrot.slane %v3412, 4
        %v3415 = vshll.u32 %v3090, 16
        %v3417 = vrot.slane %v3415, 5
        %v3418 = vor.u32 %v3414, %v3417
        %v3419 = vrot.slane %v3418, 4
        %v3421 = vshll.u32 %v3091, 16
        %v3423 = vrot.slane %v3421, 5
        %v3424 = vsel %vm243, %v3419, %v3423
        %v3425 = vshrl.u32 %v3091, 16
        %v3427 = vrot.slane %v3425, 4
        %v3428 = vor.u32 %v3427, %v3423
        %v3429 = vrot.slane %v3428, 4
        %v3431 = vshll.u32 %v3092, 16
        %v3433 = vrot.slane %v3431, 5
        %v3434 = vsel %vm243, %v3429, %v3433
        %v3436 = vshrl.u32 %v3093, 16
        %v3438 = vrot.slane %v3436, 4
        %v3439 = vshll.u32 %v3093, 16
        %v3441 = vrot.slane %v3439, 5
        %v3442 = vor.u32 %v3438, %v3441
        %v3443 = vrot.slane %v3442, 4
        %v3445 = vshll.u32 %v3094, 16
        %v3447 = vrot.slane %v3445, 5
        %v3448 = vsel %vm243, %v3443, %v3447
        %v3449 = vshrl.u32 %v3094, 16
        %v3451 = vrot.slane %v3449, 4
        %v3452 = vor.u32 %v3451, %v3447
        %v3453 = vrot.slane %v3452, 4
        %v3455 = vshll.u32 %v3095, 16
        %v3457 = vrot.slane %v3455, 5
        %v3458 = vsel %vm243, %v3453, %v3457
        %v3460 = vshrl.u32 %v3096, 16
        %v3462 = vrot.slane %v3460, 4
        %v3463 = vshll.u32 %v3096, 16
        %v3465 = vrot.slane %v3463, 5
        %v3466 = vor.u32 %v3462, %v3465
        %v3467 = vrot.slane %v3466, 4
        %v3469 = vshll.u32 %v3097, 16
        %v3471 = vrot.slane %v3469, 5
        %v3472 = vsel %vm243, %v3467, %v3471
        %v3473 = vshrl.u32 %v3097, 16
        %v3475 = vrot.slane %v3473, 4
        %v3476 = vor.u32 %v3475, %v3471
        %v3477 = vrot.slane %v3476, 4
        %v3479 = vshll.u32 %v3098, 16
        %v3481 = vrot.slane %v3479, 5
        %v3482 = vsel %vm243, %v3477, %v3481
        %s3483 = scalar_lea.vmem %s1, 28
        %v3484 = vld [vmem:[%s3483] sm:$0xf]
        %v3485 = vunpack.c.l.b16 %v3112
        %v3486 = vunpack.c.l.b16 %v3122
        %v3487 = vunpack.c.l.b16 %v3136
        %v3488 = vunpack.c.l.b16 %v3146
        %v3489 = vunpack.c.l.b16 %v3160
        %v3490 = vunpack.c.l.b16 %v3170
        %v3491 = vunpack.c.l.b16 %v3184
        %v3492 = vunpack.c.l.b16 %v3194
        %v3493 = vunpack.c.l.b16 %v3208
        %v3494 = vunpack.c.l.b16 %v3218
        %v3495 = vunpack.c.l.b16 %v3232
        %v3496 = vunpack.c.l.b16 %v3242
        %v3497 = vunpack.c.l.b16 %v3256
        %v3498 = vunpack.c.l.b16 %v3266
        %v3499 = vunpack.c.l.b16 %v3280
        %v3500 = vunpack.c.l.b16 %v3290
        %v3501 = vunpack.c.l.b16 %v3304
        %v3502 = vunpack.c.l.b16 %v3314
        %v3503 = vunpack.c.l.b16 %v3328
        %v3504 = vunpack.c.l.b16 %v3338
        %v3505 = vunpack.c.l.b16 %v3352
        %v3506 = vunpack.c.l.b16 %v3362
        %v3507 = vunpack.c.l.b16 %v3376
        %v3508 = vunpack.c.l.b16 %v3386
        %v3509 = vunpack.c.l.b16 %v3400
        %v3510 = vunpack.c.l.b16 %v3410
        %v3511 = vunpack.c.l.b16 %v3424
        %v3512 = vunpack.c.l.b16 %v3434
        %v3513 = vunpack.c.l.b16 %v3448
        %v3514 = vunpack.c.l.b16 %v3458
        %v3515 = vunpack.c.l.b16 %v3472
        %v3516 = vunpack.c.l.b16 %v3482
        %v3517 = vpack.c.b16 %v3486, %v3485
        %v3518 = vpack.c.b16 %v3488, %v3487
        %v3519 = vpack.c.b16 %v3490, %v3489
        %v3520 = vpack.c.b16 %v3492, %v3491
        %v3521 = vpack.c.b16 %v3494, %v3493
        %v3522 = vpack.c.b16 %v3496, %v3495
        %v3523 = vpack.c.b16 %v3498, %v3497
        %v3524 = vpack.c.b16 %v3500, %v3499
        %v3525 = vpack.c.b16 %v3502, %v3501
        %v3526 = vpack.c.b16 %v3504, %v3503
        %v3527 = vpack.c.b16 %v3506, %v3505
        %v3528 = vpack.c.b16 %v3508, %v3507
        %v3529 = vpack.c.b16 %v3510, %v3509
        %v3530 = vpack.c.b16 %v3512, %v3511
        %v3531 = vpack.c.b16 %v3514, %v3513
        %v3532 = vpack.c.b16 %v3516, %v3515
        %v3534 = vsel %vm678, %v3517, 0
        %v3537 = vsel %vm678, %v3518, 0
        %v3540 = vsel %vm678, %v3519, 0
        %v3543 = vsel %vm678, %v3520, 0
        %v3546 = vsel %vm678, %v3521, 0
        %v3549 = vsel %vm678, %v3522, 0
        %v3552 = vsel %vm678, %v3523, 0
        %v3555 = vsel %vm678, %v3524, 0
        %v3558 = vsel %vm678, %v3525, 0
        %v3561 = vsel %vm678, %v3526, 0
        %v3564 = vsel %vm678, %v3527, 0
        %v3567 = vsel %vm678, %v3528, 0
        %v3570 = vsel %vm678, %v3529, 0
        %v3573 = vsel %vm678, %v3530, 0
        %v3576 = vsel %vm678, %v3531, 0
        %v3579 = vsel %vm678, %v3532, 0
        %v3582 = vsel %vm727, %v3484, 0
        %3584 = vmatpush.bf16.msra.mxu0 0
        %3585 = vmatpush.bf16.msra.mxu0 0
        %3586 = vmatpush.bf16.msra.mxu0 0
        %3587 = vmatpush.bf16.msra.mxu0 0
        %3588 = vmatpush.bf16.msra.mxu0 0
        %3589 = vmatpush.bf16.msra.mxu0 0
        %3590 = vmatpush.bf16.msra.mxu0 0
        %3591 = vmatpush.bf16.msra.mxu0 %v3582
        %3592 = vmatmul.bf16.gmra.mxu0 %v3534
        %v3593 = vpop.f32.mrf.mxu0
        %v3594 = vadd.f32 0.0, %v3593
        %v3595 = vpop.f32.mrf.mxu0
        %v3596 = vadd.f32 0.0, %v3595
        %3597 = vmatmul.bf16.gmra.mxu0 %v3537
        %v3598 = vpop.f32.mrf.mxu0
        %v3599 = vadd.f32 0.0, %v3598
        %v3600 = vpop.f32.mrf.mxu0
        %v3601 = vadd.f32 0.0, %v3600
        %3602 = vmatmul.bf16.gmra.mxu0 %v3540
        %v3603 = vpop.f32.mrf.mxu0
        %v3604 = vadd.f32 0.0, %v3603
        %v3605 = vpop.f32.mrf.mxu0
        %v3606 = vadd.f32 0.0, %v3605
        %3607 = vmatmul.bf16.gmra.mxu0 %v3543
        %v3608 = vpop.f32.mrf.mxu0
        %v3609 = vadd.f32 0.0, %v3608
        %v3610 = vpop.f32.mrf.mxu0
        %v3611 = vadd.f32 0.0, %v3610
        %3612 = vmatmul.bf16.gmra.mxu0 %v3546
        %v3613 = vpop.f32.mrf.mxu0
        %v3614 = vadd.f32 0.0, %v3613
        %v3615 = vpop.f32.mrf.mxu0
        %v3616 = vadd.f32 0.0, %v3615
        %3617 = vmatmul.bf16.gmra.mxu0 %v3549
        %v3618 = vpop.f32.mrf.mxu0
        %v3619 = vadd.f32 0.0, %v3618
        %v3620 = vpop.f32.mrf.mxu0
        %v3621 = vadd.f32 0.0, %v3620
        %3622 = vmatmul.bf16.gmra.mxu0 %v3552
        %v3623 = vpop.f32.mrf.mxu0
        %v3624 = vadd.f32 0.0, %v3623
        %v3625 = vpop.f32.mrf.mxu0
        %v3626 = vadd.f32 0.0, %v3625
        %3627 = vmatmul.bf16.gmra.mxu0 %v3555
        %v3628 = vpop.f32.mrf.mxu0
        %v3629 = vadd.f32 0.0, %v3628
        %v3630 = vpop.f32.mrf.mxu0
        %v3631 = vadd.f32 0.0, %v3630
        %3632 = vmatmul.bf16.gmra.mxu0 %v3558
        %v3633 = vpop.f32.mrf.mxu0
        %v3634 = vadd.f32 0.0, %v3633
        %v3635 = vpop.f32.mrf.mxu0
        %v3636 = vadd.f32 0.0, %v3635
        %3637 = vmatmul.bf16.gmra.mxu0 %v3561
        %v3638 = vpop.f32.mrf.mxu0
        %v3639 = vadd.f32 0.0, %v3638
        %v3640 = vpop.f32.mrf.mxu0
        %v3641 = vadd.f32 0.0, %v3640
        %3642 = vmatmul.bf16.gmra.mxu0 %v3564
        %v3643 = vpop.f32.mrf.mxu0
        %v3644 = vadd.f32 0.0, %v3643
        %v3645 = vpop.f32.mrf.mxu0
        %v3646 = vadd.f32 0.0, %v3645
        %3647 = vmatmul.bf16.gmra.mxu0 %v3567
        %v3648 = vpop.f32.mrf.mxu0
        %v3649 = vadd.f32 0.0, %v3648
        %v3650 = vpop.f32.mrf.mxu0
        %v3651 = vadd.f32 0.0, %v3650
        %3652 = vmatmul.bf16.gmra.mxu0 %v3570
        %v3653 = vpop.f32.mrf.mxu0
        %v3654 = vadd.f32 0.0, %v3653
        %v3655 = vpop.f32.mrf.mxu0
        %v3656 = vadd.f32 0.0, %v3655
        %3657 = vmatmul.bf16.gmra.mxu0 %v3573
        %v3658 = vpop.f32.mrf.mxu0
        %v3659 = vadd.f32 0.0, %v3658
        %v3660 = vpop.f32.mrf.mxu0
        %v3661 = vadd.f32 0.0, %v3660
        %3662 = vmatmul.bf16.gmra.mxu0 %v3576
        %v3663 = vpop.f32.mrf.mxu0
        %v3664 = vadd.f32 0.0, %v3663
        %v3665 = vpop.f32.mrf.mxu0
        %v3666 = vadd.f32 0.0, %v3665
        %3667 = vmatmul.bf16.gmra.mxu0 %v3579
        %v3668 = vpop.f32.mrf.mxu0
        %v3669 = vadd.f32 0.0, %v3668
        %v3670 = vpop.f32.mrf.mxu0
        %v3671 = vadd.f32 0.0, %v3670
        %3672 = vdwg.mxu0
        %v3673 = vadd.f32 %v3019, %v3594
        %v3674 = vadd.f32 %v3020, %v3596
        %v3675 = vadd.f32 %v3021, %v3599
        %v3676 = vadd.f32 %v3022, %v3601
        %v3677 = vadd.f32 %v3023, %v3604
        %v3678 = vadd.f32 %v3024, %v3606
        %v3679 = vadd.f32 %v3025, %v3609
        %v3680 = vadd.f32 %v3026, %v3611
        %v3681 = vadd.f32 %v3027, %v3614
        %v3682 = vadd.f32 %v3028, %v3616
        %v3683 = vadd.f32 %v3029, %v3619
        %v3684 = vadd.f32 %v3030, %v3621
        %v3685 = vadd.f32 %v3031, %v3624
        %v3686 = vadd.f32 %v3032, %v3626
        %v3687 = vadd.f32 %v3033, %v3629
        %v3688 = vadd.f32 %v3034, %v3631
        %v3689 = vadd.f32 %v3035, %v3634
        %v3690 = vadd.f32 %v3036, %v3636
        %v3691 = vadd.f32 %v3037, %v3639
        %v3692 = vadd.f32 %v3038, %v3641
        %v3693 = vadd.f32 %v3039, %v3644
        %v3694 = vadd.f32 %v3040, %v3646
        %v3695 = vadd.f32 %v3041, %v3649
        %v3696 = vadd.f32 %v3042, %v3651
        %v3697 = vadd.f32 %v3043, %v3654
        %v3698 = vadd.f32 %v3044, %v3656
        %v3699 = vadd.f32 %v3045, %v3659
        %v3700 = vadd.f32 %v3046, %v3661
        %v3701 = vadd.f32 %v3047, %v3664
        %v3702 = vadd.f32 %v3048, %v3666
        %v3703 = vadd.f32 %v3049, %v3669
        %v3704 = vadd.f32 %v3050, %v3671
        %v3705 = vld [vmem:[%s2764] sm:$0xe]
        %v3706 = vld [vmem:[%s2764 + $0xc] sm:$0xe]
        %v3707 = vld [vmem:[%s2764 + $0x18] sm:$0xe]
        %v3708 = vld [vmem:[%s2764 + $0x24] sm:$0xe]
        %v3709 = vld [vmem:[%s2764 + $0x30] sm:$0xe]
        %v3710 = vld [vmem:[%s2764 + $0x3c] sm:$0xe]
        %v3711 = vld [vmem:[%s2764 + $0x48] sm:$0xe]
        %v3712 = vld [vmem:[%s2764 + $0x54] sm:$0xe]
        %v3713 = vld [vmem:[%s2764 + $0x60] sm:$0xe]
        %v3714 = vld [vmem:[%s2764 + $0x6c] sm:$0xe]
        %v3715 = vld [vmem:[%s2764 + $0x78] sm:$0xe]
        %v3716 = vld [vmem:[%s2764 + $0x84] sm:$0xe]
        %v3717 = vld [vmem:[%s2764 + $0x90] sm:$0xe]
        %v3718 = vld [vmem:[%s2764 + $0x9c] sm:$0xe]
        %v3719 = vld [vmem:[%s2764 + $0xa8] sm:$0xe]
        %v3720 = vld [vmem:[%s2764 + $0xb4] sm:$0xe]
        %v3769 = vrot.slane %v3705, 5
        %v3770 = vrot.slane %v3769, 4
        %v3771 = vrot.slane %v3052, 5
        %v3772 = vsel %vm1090, %v3770, %v3771
        %v3773 = vrot.slane %v3771, 4
        %v3774 = vrot.slane %v3053, 5
        %v3775 = vsel %vm1090, %v3773, %v3774
        %v3776 = vrot.slane %v3706, 5
        %v3777 = vrot.slane %v3776, 4
        %v3778 = vrot.slane %v3055, 5
        %v3779 = vsel %vm1090, %v3777, %v3778
        %v3780 = vrot.slane %v3778, 4
        %v3781 = vrot.slane %v3056, 5
        %v3782 = vsel %vm1090, %v3780, %v3781
        %v3783 = vrot.slane %v3707, 5
        %v3784 = vrot.slane %v3783, 4
        %v3785 = vrot.slane %v3058, 5
        %v3786 = vsel %vm1090, %v3784, %v3785
        %v3787 = vrot.slane %v3785, 4
        %v3788 = vrot.slane %v3059, 5
        %v3789 = vsel %vm1090, %v3787, %v3788
        %v3790 = vrot.slane %v3708, 5
        %v3791 = vrot.slane %v3790, 4
        %v3792 = vrot.slane %v3061, 5
        %v3793 = vsel %vm1090, %v3791, %v3792
        %v3794 = vrot.slane %v3792, 4
        %v3795 = vrot.slane %v3062, 5
        %v3796 = vsel %vm1090, %v3794, %v3795
        %v3797 = vrot.slane %v3709, 5
        %v3798 = vrot.slane %v3797, 4
        %v3799 = vrot.slane %v3064, 5
        %v3800 = vsel %vm1090, %v3798, %v3799
        %v3801 = vrot.slane %v3799, 4
        %v3802 = vrot.slane %v3065, 5
        %v3803 = vsel %vm1090, %v3801, %v3802
        %v3804 = vrot.slane %v3710, 5
        %v3805 = vrot.slane %v3804, 4
        %v3806 = vrot.slane %v3067, 5
        %v3807 = vsel %vm1090, %v3805, %v3806
        %v3808 = vrot.slane %v3806, 4
        %v3809 = vrot.slane %v3068, 5
        %v3810 = vsel %vm1090, %v3808, %v3809
        %v3811 = vrot.slane %v3711, 5
        %v3812 = vrot.slane %v3811, 4
        %v3813 = vrot.slane %v3070, 5
        %v3814 = vsel %vm1090, %v3812, %v3813
        %v3815 = vrot.slane %v3813, 4
        %v3816 = vrot.slane %v3071, 5
        %v3817 = vsel %vm1090, %v3815, %v3816
        %v3818 = vrot.slane %v3712, 5
        %v3819 = vrot.slane %v3818, 4
        %v3820 = vrot.slane %v3073, 5
        %v3821 = vsel %vm1090, %v3819, %v3820
        %v3822 = vrot.slane %v3820, 4
        %v3823 = vrot.slane %v3074, 5
        %v3824 = vsel %vm1090, %v3822, %v3823
        %v3825 = vrot.slane %v3713, 5
        %v3826 = vrot.slane %v3825, 4
        %v3827 = vrot.slane %v3076, 5
        %v3828 = vsel %vm1090, %v3826, %v3827
        %v3829 = vrot.slane %v3827, 4
        %v3830 = vrot.slane %v3077, 5
        %v3831 = vsel %vm1090, %v3829, %v3830
        %v3832 = vrot.slane %v3714, 5
        %v3833 = vrot.slane %v3832, 4
        %v3834 = vrot.slane %v3079, 5
        %v3835 = vsel %vm1090, %v3833, %v3834
        %v3836 = vrot.slane %v3834, 4
        %v3837 = vrot.slane %v3080, 5
        %v3838 = vsel %vm1090, %v3836, %v3837
        %v3839 = vrot.slane %v3715, 5
        %v3840 = vrot.slane %v3839, 4
        %v3841 = vrot.slane %v3082, 5
        %v3842 = vsel %vm1090, %v3840, %v3841
        %v3843 = vrot.slane %v3841, 4
        %v3844 = vrot.slane %v3083, 5
        %v3845 = vsel %vm1090, %v3843, %v3844
        %v3846 = vrot.slane %v3716, 5
        %v3847 = vrot.slane %v3846, 4
        %v3848 = vrot.slane %v3085, 5
        %v3849 = vsel %vm1090, %v3847, %v3848
        %v3850 = vrot.slane %v3848, 4
        %v3851 = vrot.slane %v3086, 5
        %v3852 = vsel %vm1090, %v3850, %v3851
        %v3853 = vrot.slane %v3717, 5
        %v3854 = vrot.slane %v3853, 4
        %v3855 = vrot.slane %v3088, 5
        %v3856 = vsel %vm1090, %v3854, %v3855
        %v3857 = vrot.slane %v3855, 4
        %v3858 = vrot.slane %v3089, 5
        %v3859 = vsel %vm1090, %v3857, %v3858
        %v3860 = vrot.slane %v3718, 5
        %v3861 = vrot.slane %v3860, 4
        %v3862 = vrot.slane %v3091, 5
        %v3863 = vsel %vm1090, %v3861, %v3862
        %v3864 = vrot.slane %v3862, 4
        %v3865 = vrot.slane %v3092, 5
        %v3866 = vsel %vm1090, %v3864, %v3865
        %v3867 = vrot.slane %v3719, 5
        %v3868 = vrot.slane %v3867, 4
        %v3869 = vrot.slane %v3094, 5
        %v3870 = vsel %vm1090, %v3868, %v3869
        %v3871 = vrot.slane %v3869, 4
        %v3872 = vrot.slane %v3095, 5
        %v3873 = vsel %vm1090, %v3871, %v3872
        %v3874 = vrot.slane %v3720, 5
        %v3875 = vrot.slane %v3874, 4
        %v3876 = vrot.slane %v3097, 5
        %v3877 = vsel %vm1090, %v3875, %v3876
        %v3878 = vrot.slane %v3876, 4
        %v3879 = vrot.slane %v3098, 5
        %v3880 = vsel %vm1090, %v3878, %v3879
        %s3881 = scalar_lea.vmem %s1, 32
        %v3882 = vld [vmem:[%s3881] sm:$0xf]
        %v3883 = vunpack.c.l.b16 %v3772
        %v3884 = vunpack.c.l.b16 %v3775
        %v3885 = vunpack.c.l.b16 %v3779
        %v3886 = vunpack.c.l.b16 %v3782
        %v3887 = vunpack.c.l.b16 %v3786
        %v3888 = vunpack.c.l.b16 %v3789
        %v3889 = vunpack.c.l.b16 %v3793
        %v3890 = vunpack.c.l.b16 %v3796
        %v3891 = vunpack.c.l.b16 %v3800
        %v3892 = vunpack.c.l.b16 %v3803
        %v3893 = vunpack.c.l.b16 %v3807
        %v3894 = vunpack.c.l.b16 %v3810
        %v3895 = vunpack.c.l.b16 %v3814
        %v3896 = vunpack.c.l.b16 %v3817
        %v3897 = vunpack.c.l.b16 %v3821
        %v3898 = vunpack.c.l.b16 %v3824
        %v3899 = vunpack.c.l.b16 %v3828
        %v3900 = vunpack.c.l.b16 %v3831
        %v3901 = vunpack.c.l.b16 %v3835
        %v3902 = vunpack.c.l.b16 %v3838
        %v3903 = vunpack.c.l.b16 %v3842
        %v3904 = vunpack.c.l.b16 %v3845
        %v3905 = vunpack.c.l.b16 %v3849
        %v3906 = vunpack.c.l.b16 %v3852
        %v3907 = vunpack.c.l.b16 %v3856
        %v3908 = vunpack.c.l.b16 %v3859
        %v3909 = vunpack.c.l.b16 %v3863
        %v3910 = vunpack.c.l.b16 %v3866
        %v3911 = vunpack.c.l.b16 %v3870
        %v3912 = vunpack.c.l.b16 %v3873
        %v3913 = vunpack.c.l.b16 %v3877
        %v3914 = vunpack.c.l.b16 %v3880
        %v3915 = vpack.c.b16 %v3884, %v3883
        %v3916 = vpack.c.b16 %v3886, %v3885
        %v3917 = vpack.c.b16 %v3888, %v3887
        %v3918 = vpack.c.b16 %v3890, %v3889
        %v3919 = vpack.c.b16 %v3892, %v3891
        %v3920 = vpack.c.b16 %v3894, %v3893
        %v3921 = vpack.c.b16 %v3896, %v3895
        %v3922 = vpack.c.b16 %v3898, %v3897
        %v3923 = vpack.c.b16 %v3900, %v3899
        %v3924 = vpack.c.b16 %v3902, %v3901
        %v3925 = vpack.c.b16 %v3904, %v3903
        %v3926 = vpack.c.b16 %v3906, %v3905
        %v3927 = vpack.c.b16 %v3908, %v3907
        %v3928 = vpack.c.b16 %v3910, %v3909
        %v3929 = vpack.c.b16 %v3912, %v3911
        %v3930 = vpack.c.b16 %v3914, %v3913
        %v3932 = vsel %vm678, %v3915, 0
        %v3935 = vsel %vm678, %v3916, 0
        %v3938 = vsel %vm678, %v3917, 0
        %v3941 = vsel %vm678, %v3918, 0
        %v3944 = vsel %vm678, %v3919, 0
        %v3947 = vsel %vm678, %v3920, 0
        %v3950 = vsel %vm678, %v3921, 0
        %v3953 = vsel %vm678, %v3922, 0
        %v3956 = vsel %vm678, %v3923, 0
        %v3959 = vsel %vm678, %v3924, 0
        %v3962 = vsel %vm678, %v3925, 0
        %v3965 = vsel %vm678, %v3926, 0
        %v3968 = vsel %vm678, %v3927, 0
        %v3971 = vsel %vm678, %v3928, 0
        %v3974 = vsel %vm678, %v3929, 0
        %v3977 = vsel %vm678, %v3930, 0
        %v3980 = vsel %vm727, %v3882, 0
        %3982 = vmatpush.bf16.msra.mxu0 0
        %3983 = vmatpush.bf16.msra.mxu0 0
        %3984 = vmatpush.bf16.msra.mxu0 0
        %3985 = vmatpush.bf16.msra.mxu0 0
        %3986 = vmatpush.bf16.msra.mxu0 0
        %3987 = vmatpush.bf16.msra.mxu0 0
        %3988 = vmatpush.bf16.msra.mxu0 0
        %3989 = vmatpush.bf16.msra.mxu0 %v3980
        %3990 = vmatmul.bf16.gmra.mxu0 %v3932
        %v3991 = vpop.f32.mrf.mxu0
        %v3992 = vadd.f32 0.0, %v3991
        %v3993 = vpop.f32.mrf.mxu0
        %v3994 = vadd.f32 0.0, %v3993
        %3995 = vmatmul.bf16.gmra.mxu0 %v3935
        %v3996 = vpop.f32.mrf.mxu0
        %v3997 = vadd.f32 0.0, %v3996
        %v3998 = vpop.f32.mrf.mxu0
        %v3999 = vadd.f32 0.0, %v3998
        %4000 = vmatmul.bf16.gmra.mxu0 %v3938
        %v4001 = vpop.f32.mrf.mxu0
        %v4002 = vadd.f32 0.0, %v4001
        %v4003 = vpop.f32.mrf.mxu0
        %v4004 = vadd.f32 0.0, %v4003
        %4005 = vmatmul.bf16.gmra.mxu0 %v3941
        %v4006 = vpop.f32.mrf.mxu0
        %v4007 = vadd.f32 0.0, %v4006
        %v4008 = vpop.f32.mrf.mxu0
        %v4009 = vadd.f32 0.0, %v4008
        %4010 = vmatmul.bf16.gmra.mxu0 %v3944
        %v4011 = vpop.f32.mrf.mxu0
        %v4012 = vadd.f32 0.0, %v4011
        %v4013 = vpop.f32.mrf.mxu0
        %v4014 = vadd.f32 0.0, %v4013
        %4015 = vmatmul.bf16.gmra.mxu0 %v3947
        %v4016 = vpop.f32.mrf.mxu0
        %v4017 = vadd.f32 0.0, %v4016
        %v4018 = vpop.f32.mrf.mxu0
        %v4019 = vadd.f32 0.0, %v4018
        %4020 = vmatmul.bf16.gmra.mxu0 %v3950
        %v4021 = vpop.f32.mrf.mxu0
        %v4022 = vadd.f32 0.0, %v4021
        %v4023 = vpop.f32.mrf.mxu0
        %v4024 = vadd.f32 0.0, %v4023
        %4025 = vmatmul.bf16.gmra.mxu0 %v3953
        %v4026 = vpop.f32.mrf.mxu0
        %v4027 = vadd.f32 0.0, %v4026
        %v4028 = vpop.f32.mrf.mxu0
        %v4029 = vadd.f32 0.0, %v4028
        %4030 = vmatmul.bf16.gmra.mxu0 %v3956
        %v4031 = vpop.f32.mrf.mxu0
        %v4032 = vadd.f32 0.0, %v4031
        %v4033 = vpop.f32.mrf.mxu0
        %v4034 = vadd.f32 0.0, %v4033
        %4035 = vmatmul.bf16.gmra.mxu0 %v3959
        %v4036 = vpop.f32.mrf.mxu0
        %v4037 = vadd.f32 0.0, %v4036
        %v4038 = vpop.f32.mrf.mxu0
        %v4039 = vadd.f32 0.0, %v4038
        %4040 = vmatmul.bf16.gmra.mxu0 %v3962
        %v4041 = vpop.f32.mrf.mxu0
        %v4042 = vadd.f32 0.0, %v4041
        %v4043 = vpop.f32.mrf.mxu0
        %v4044 = vadd.f32 0.0, %v4043
        %4045 = vmatmul.bf16.gmra.mxu0 %v3965
        %v4046 = vpop.f32.mrf.mxu0
        %v4047 = vadd.f32 0.0, %v4046
        %v4048 = vpop.f32.mrf.mxu0
        %v4049 = vadd.f32 0.0, %v4048
        %4050 = vmatmul.bf16.gmra.mxu0 %v3968
        %v4051 = vpop.f32.mrf.mxu0
        %v4052 = vadd.f32 0.0, %v4051
        %v4053 = vpop.f32.mrf.mxu0
        %v4054 = vadd.f32 0.0, %v4053
        %4055 = vmatmul.bf16.gmra.mxu0 %v3971
        %v4056 = vpop.f32.mrf.mxu0
        %v4057 = vadd.f32 0.0, %v4056
        %v4058 = vpop.f32.mrf.mxu0
        %v4059 = vadd.f32 0.0, %v4058
        %4060 = vmatmul.bf16.gmra.mxu0 %v3974
        %v4061 = vpop.f32.mrf.mxu0
        %v4062 = vadd.f32 0.0, %v4061
        %v4063 = vpop.f32.mrf.mxu0
        %v4064 = vadd.f32 0.0, %v4063
        %4065 = vmatmul.bf16.gmra.mxu0 %v3977
        %v4066 = vpop.f32.mrf.mxu0
        %v4067 = vadd.f32 0.0, %v4066
        %v4068 = vpop.f32.mrf.mxu0
        %v4069 = vadd.f32 0.0, %v4068
        %4070 = vdwg.mxu0
        %v4071 = vadd.f32 %v3673, %v3992
        %v4072 = vadd.f32 %v3674, %v3994
        %v4073 = vadd.f32 %v3675, %v3997
        %v4074 = vadd.f32 %v3676, %v3999
        %v4075 = vadd.f32 %v3677, %v4002
        %v4076 = vadd.f32 %v3678, %v4004
        %v4077 = vadd.f32 %v3679, %v4007
        %v4078 = vadd.f32 %v3680, %v4009
        %v4079 = vadd.f32 %v3681, %v4012
        %v4080 = vadd.f32 %v3682, %v4014
        %v4081 = vadd.f32 %v3683, %v4017
        %v4082 = vadd.f32 %v3684, %v4019
        %v4083 = vadd.f32 %v3685, %v4022
        %v4084 = vadd.f32 %v3686, %v4024
        %v4085 = vadd.f32 %v3687, %v4027
        %v4086 = vadd.f32 %v3688, %v4029
        %v4087 = vadd.f32 %v3689, %v4032
        %v4088 = vadd.f32 %v3690, %v4034
        %v4089 = vadd.f32 %v3691, %v4037
        %v4090 = vadd.f32 %v3692, %v4039
        %v4091 = vadd.f32 %v3693, %v4042
        %v4092 = vadd.f32 %v3694, %v4044
        %v4093 = vadd.f32 %v3695, %v4047
        %v4094 = vadd.f32 %v3696, %v4049
        %v4095 = vadd.f32 %v3697, %v4052
        %v4096 = vadd.f32 %v3698, %v4054
        %v4097 = vadd.f32 %v3699, %v4057
        %v4098 = vadd.f32 %v3700, %v4059
        %v4099 = vadd.f32 %v3701, %v4062
        %v4100 = vadd.f32 %v3702, %v4064
        %v4101 = vadd.f32 %v3703, %v4067
        %v4102 = vadd.f32 %v3704, %v4069
        %v4103 = vld [vmem:[%s2] sm:$0x1]
        %v4105 = vperm.slane %v4103, 0
        %v4107 = vadd.f32 %v4071, %v4105
        %v4108 = vadd.f32 %v4072, %v4105
        %v4109 = vadd.f32 %v4073, %v4105
        %v4110 = vadd.f32 %v4074, %v4105
        %v4111 = vadd.f32 %v4075, %v4105
        %v4112 = vadd.f32 %v4076, %v4105
        %v4113 = vadd.f32 %v4077, %v4105
        %v4114 = vadd.f32 %v4078, %v4105
        %v4115 = vadd.f32 %v4079, %v4105
        %v4116 = vadd.f32 %v4080, %v4105
        %v4117 = vadd.f32 %v4081, %v4105
        %v4118 = vadd.f32 %v4082, %v4105
        %v4119 = vadd.f32 %v4083, %v4105
        %v4120 = vadd.f32 %v4084, %v4105
        %v4121 = vadd.f32 %v4085, %v4105
        %v4122 = vadd.f32 %v4086, %v4105
        %v4123 = vadd.f32 %v4087, %v4105
        %v4124 = vadd.f32 %v4088, %v4105
        %v4125 = vadd.f32 %v4089, %v4105
        %v4126 = vadd.f32 %v4090, %v4105
        %v4127 = vadd.f32 %v4091, %v4105
        %v4128 = vadd.f32 %v4092, %v4105
        %v4129 = vadd.f32 %v4093, %v4105
        %v4130 = vadd.f32 %v4094, %v4105
        %v4131 = vadd.f32 %v4095, %v4105
        %v4132 = vadd.f32 %v4096, %v4105
        %v4133 = vadd.f32 %v4097, %v4105
        %v4134 = vadd.f32 %v4098, %v4105
        %v4135 = vadd.f32 %v4099, %v4105
        %v4136 = vadd.f32 %v4100, %v4105
        %v4137 = vadd.f32 %v4101, %v4105
        %v4138 = vadd.f32 %v4102, %v4105
        %v4139 = vmax.f32 %v4107, 0.0
        %v4140 = vmax.f32 %v4108, 0.0
        %v4141 = vmax.f32 %v4109, 0.0
        %v4142 = vmax.f32 %v4110, 0.0
        %v4143 = vmax.f32 %v4111, 0.0
        %v4144 = vmax.f32 %v4112, 0.0
        %v4145 = vmax.f32 %v4113, 0.0
        %v4146 = vmax.f32 %v4114, 0.0
        %v4147 = vmax.f32 %v4115, 0.0
        %v4148 = vmax.f32 %v4116, 0.0
        %v4149 = vmax.f32 %v4117, 0.0
        %v4150 = vmax.f32 %v4118, 0.0
        %v4151 = vmax.f32 %v4119, 0.0
        %v4152 = vmax.f32 %v4120, 0.0
        %v4153 = vmax.f32 %v4121, 0.0
        %v4154 = vmax.f32 %v4122, 0.0
        %v4155 = vmax.f32 %v4123, 0.0
        %v4156 = vmax.f32 %v4124, 0.0
        %v4157 = vmax.f32 %v4125, 0.0
        %v4158 = vmax.f32 %v4126, 0.0
        %v4159 = vmax.f32 %v4127, 0.0
        %v4160 = vmax.f32 %v4128, 0.0
        %v4161 = vmax.f32 %v4129, 0.0
        %v4162 = vmax.f32 %v4130, 0.0
        %v4163 = vmax.f32 %v4131, 0.0
        %v4164 = vmax.f32 %v4132, 0.0
        %v4165 = vmax.f32 %v4133, 0.0
        %v4166 = vmax.f32 %v4134, 0.0
        %v4167 = vmax.f32 %v4135, 0.0
        %v4168 = vmax.f32 %v4136, 0.0
        %v4169 = vmax.f32 %v4137, 0.0
        %v4170 = vmax.f32 %v4138, 0.0
        %v4171 = vpack.c.bf16 %v4139, %v4139
        %v4172 = vpack.c.bf16 %v4140, %v4140
        %v4173 = vpack.c.bf16 %v4141, %v4141
        %v4174 = vpack.c.bf16 %v4142, %v4142
        %v4175 = vpack.c.bf16 %v4143, %v4143
        %v4176 = vpack.c.bf16 %v4144, %v4144
        %v4177 = vpack.c.bf16 %v4145, %v4145
        %v4178 = vpack.c.bf16 %v4146, %v4146
        %v4179 = vpack.c.bf16 %v4147, %v4147
        %v4180 = vpack.c.bf16 %v4148, %v4148
        %v4181 = vpack.c.bf16 %v4149, %v4149
        %v4182 = vpack.c.bf16 %v4150, %v4150
        %v4183 = vpack.c.bf16 %v4151, %v4151
        %v4184 = vpack.c.bf16 %v4152, %v4152
        %v4185 = vpack.c.bf16 %v4153, %v4153
        %v4186 = vpack.c.bf16 %v4154, %v4154
        %v4187 = vpack.c.bf16 %v4155, %v4155
        %v4188 = vpack.c.bf16 %v4156, %v4156
        %v4189 = vpack.c.bf16 %v4157, %v4157
        %v4190 = vpack.c.bf16 %v4158, %v4158
        %v4191 = vpack.c.bf16 %v4159, %v4159
        %v4192 = vpack.c.bf16 %v4160, %v4160
        %v4193 = vpack.c.bf16 %v4161, %v4161
        %v4194 = vpack.c.bf16 %v4162, %v4162
        %v4195 = vpack.c.bf16 %v4163, %v4163
        %v4196 = vpack.c.bf16 %v4164, %v4164
        %v4197 = vpack.c.bf16 %v4165, %v4165
        %v4198 = vpack.c.bf16 %v4166, %v4166
        %v4199 = vpack.c.bf16 %v4167, %v4167
        %v4200 = vpack.c.bf16 %v4168, %v4168
        %v4201 = vpack.c.bf16 %v4169, %v4169
        %v4202 = vpack.c.bf16 %v4170, %v4170
        %4203 = vst [vmem:[%s182] sm:$0xf] %v4171
        %4204 = vst [vmem:[%s182 + $0x4] sm:$0xf] %v4172
        %4205 = vst [vmem:[%s182 + $0x8] sm:$0xf] %v4173
        %4206 = vst [vmem:[%s182 + $0xc] sm:$0xf] %v4174
        %4207 = vst [vmem:[%s182 + $0x10] sm:$0xf] %v4175
        %4208 = vst [vmem:[%s182 + $0x14] sm:$0xf] %v4176
        %4209 = vst [vmem:[%s182 + $0x18] sm:$0xf] %v4177
        %4210 = vst [vmem:[%s182 + $0x1c] sm:$0xf] %v4178
        %4211 = vst [vmem:[%s182 + $0x20] sm:$0xf] %v4179
        %4212 = vst [vmem:[%s182 + $0x24] sm:$0xf] %v4180
        %4213 = vst [vmem:[%s182 + $0x28] sm:$0xf] %v4181
        %4214 = vst [vmem:[%s182 + $0x2c] sm:$0xf] %v4182
        %4215 = vst [vmem:[%s182 + $0x30] sm:$0xf] %v4183
        %4216 = vst [vmem:[%s182 + $0x34] sm:$0xf] %v4184
        %4217 = vst [vmem:[%s182 + $0x38] sm:$0xf] %v4185
        %4218 = vst [vmem:[%s182 + $0x3c] sm:$0xf] %v4186
        %4219 = vst [vmem:[%s182 + $0x40] sm:$0xf] %v4187
        %4220 = vst [vmem:[%s182 + $0x44] sm:$0xf] %v4188
        %4221 = vst [vmem:[%s182 + $0x48] sm:$0xf] %v4189
        %4222 = vst [vmem:[%s182 + $0x4c] sm:$0xf] %v4190
        %4223 = vst [vmem:[%s182 + $0x50] sm:$0xf] %v4191
        %4224 = vst [vmem:[%s182 + $0x54] sm:$0xf] %v4192
        %4225 = vst [vmem:[%s182 + $0x58] sm:$0xf] %v4193
        %4226 = vst [vmem:[%s182 + $0x5c] sm:$0xf] %v4194
        %4227 = vst [vmem:[%s182 + $0x60] sm:$0xf] %v4195
        %4228 = vst [vmem:[%s182 + $0x64] sm:$0xf] %v4196
        %4229 = vst [vmem:[%s182 + $0x68] sm:$0xf] %v4197
        %4230 = vst [vmem:[%s182 + $0x6c] sm:$0xf] %v4198
        %4231 = vst [vmem:[%s182 + $0x70] sm:$0xf] %v4199
        %4232 = vst [vmem:[%s182 + $0x74] sm:$0xf] %v4200
        %4233 = vst [vmem:[%s182 + $0x78] sm:$0xf] %v4201
        %4234 = vst [vmem:[%s182 + $0x7c] sm:$0xf] %v4202
        %s4235 = sand.u32 %s109, 1
        %s4236 = scalar_lea.sflag [#allocation3], %s4235
        %s4237 = sand.u32 %s109, 1
        %s4238 = smul.addr %s4237, 128
        %s4239 = scalar_lea.vmem [#allocation2], %s4238
        // Predicated region
        $region33: #{tpu_custom_call.1} parent=31 // pred_check
          %p4240 = pneg %p119
        $region34: #{tpu_custom_call.1} parent=31 // pred_check_branch
          %4242 = sbr.rel (%p4240) target = $region36
        $region35: #{tpu_custom_call.1} parent=31 // pred_region
          %s4243 = smul.u32 32, %s22
          %4245 = vsyncadd %s4236, 0
          %s4246 = smul.addr %s21, 32
          %s4247 = sadd.s32 %s4243, %s4246
          %s4248 = smul.addr %s4247, 4
          %s4249 = scalar_lea.hbm %s3, %s4248
          %s4250 = sshll.u32 %s4239, 4
          %s4251 = int_to_ptr.vmem [resolvable:$true] %s4250
          %s4252 = sshll.u32 %s4249, 4
          %s4253 = int_to_ptr.hbm [resolvable:$true] %s4252
          %4258 = dma.vmem_to_hbm [thread:$0]  %s4251, 2048, %s4253, %s4236, 64, 64, 4
        $region36: #{tpu_custom_call.1} parent=31 // pred_fallthru
          _
      $region32: #{tpu_custom_call.1} parent=5 // pred_fallthru
        _
      %p4259 = scmp.le.s32.totalorder 2, %s12
      // Predicated region
      $region37: #{tpu_custom_call.1} parent=5 // pred_check
        %p4260 = pneg %p4259
      $region38: #{tpu_custom_call.1} parent=5 // pred_check_branch
        %4262 = sbr.rel (%p4260) target = $region40
      $region39: #{tpu_custom_call.1} parent=5 // pred_region
        %s4263 = ssub.s32 %s12, 2
        // Predicated region
        $region41: #{tpu_custom_call.1} parent=39 // pred_check
          %p4264 = pneg %p125
        $region42: #{tpu_custom_call.1} parent=39 // pred_check_branch
          %4266 = sbr.rel (%p4264) target = $region44
        $region43: #{tpu_custom_call.1} parent=39 // pred_region
          %s4267 = sand.u32 %s110, 1
          %s4268 = scalar_lea.sflag [#allocation3], %s4267
          %s4269 = sand.u32 %s110, 1
          %s4270 = smul.addr %s4269, 128
          %s4271 = scalar_lea.vmem [#allocation2], %s4270
          %4273 = dma.done %s4268, 2048
        $region44: #{tpu_custom_call.1} parent=39 // pred_fallthru
          _
      $region40: #{tpu_custom_call.1} parent=5 // pred_fallthru
        _
    $region6: #{tpu_custom_call.1} parent=1 // loop_footer
      %s16 = sadd.s32 1, %s12
    $region7: #{tpu_custom_call.1} parent=1 // loop_footer_branch
      %11 = sbr.rel target = $region3
    $region8: #{tpu_custom_call.1} parent=1 // loop_exit
      _
    %4274 = vsyncpa [#allocation3], 1
    %s4275 = scalar_lea.sflag [#allocation3], 1
    %4276 = vsyncpa %s4275, 1

</llo_original>
